<compile_context>
chip_gen: v6e
topology: v6e:2x2x1
jax: 0.10.0
libtpu: 0.0.40
codegen_flags: <defaults>
</compile_context>

<pallas_src>
import functools

import jax
import jax.numpy as jnp
from jax import lax
from jax.experimental import pallas as pl
from jax.experimental.pallas import tpu as pltpu


# ---------------------------------------------------------------------------
# Tiling helpers
# ---------------------------------------------------------------------------
_DEF_VMEM = 32 * 1024 * 1024


def _vmem_limit(block_bytes):
    # Never go below the default scoped limit; stay under v7x's 64 MiB physical.
    return int(min(60 << 20, max(_DEF_VMEM, 2 * block_bytes + (4 << 20))))


def _pick_tm(M, target=512):
    """Largest row tile <= target dividing M, sublane aligned (x8), leaving
    >=2 steps on the parallel M axis (megacore). Falls back to full M."""
    cap = min(target, M // 2)
    for t in range(cap, 7, -1):
        if M % t == 0 and t % 8 == 0:
            return t
    return min(M, target)


def _pick_tk(K, target=512):
    """K reduction tile: keep the whole K resident when the bf16 weight block
    is small; otherwise a lane-aligned (x128) divisor."""
    if K <= 1024:
        return K
    for t in range(target, 127, -128):
        if K % t == 0:
            return t
    return K  # TODO(synk): pad K for shapes without a x128 divisor


# ---------------------------------------------------------------------------
# Pallas kernels
# ---------------------------------------------------------------------------
def _mm_bn_act_kernel(a_ref, w_ref, s_ref, b_ref, o_ref, acc_ref, *, relu):
    # acc += A(bf16) @ W(bf16); BN affine (+ReLU) epilogue on the last K step.
    @pl.when(pl.program_id(1) == 0)
    def _init():
        acc_ref[...] = jnp.zeros_like(acc_ref)

    acc_ref[...] += jnp.dot(a_ref[...], w_ref[...],
                            preferred_element_type=jnp.float32)

    @pl.when(pl.program_id(1) == pl.num_programs(1) - 1)
    def _fin():
        y = acc_ref[...] * s_ref[...] + b_ref[...]
        if relu:
            y = jnp.maximum(y, 0.0)
        o_ref[...] = y.astype(o_ref.dtype)


def _mm2_bn_add_relu_kernel(a1_ref, w1_ref, s1_ref, b1_ref,
                            a2_ref, w2_ref, s2_ref, b2_ref, o_ref):
    # conv3 + projection shortcut, fused:
    # relu( (a1@w1)*s1 + b1 + (a2@w2)*s2 + b2 )
    y = jnp.dot(a1_ref[...], w1_ref[...], preferred_element_type=jnp.float32)
    y = y * s1_ref[...] + b1_ref[...]
    z = jnp.dot(a2_ref[...], w2_ref[...], preferred_element_type=jnp.float32)
    y = y + z * s2_ref[...] + b2_ref[...]
    o_ref[...] = jnp.maximum(y, 0.0).astype(o_ref.dtype)


def _mm_bn_res_relu_kernel(a_ref, w_ref, s_ref, b_ref, r_ref, o_ref):
    # conv3 + identity shortcut: relu( (a@w)*s + b + residual )
    y = jnp.dot(a_ref[...], w_ref[...], preferred_element_type=jnp.float32)
    y = y * s_ref[...] + b_ref[...] + r_ref[...].astype(jnp.float32)
    o_ref[...] = jnp.maximum(y, 0.0).astype(o_ref.dtype)


def _conv3x3_bn_relu_kernel(*refs, stride, Ho, Wo):
    # 3x3/stride/pad=1 conv as 9 accumulated matmuls over VMEM-resident,
    # stride-phase-split padded input images, with fused BN + ReLU.
    nph = stride * stride
    phase_refs, (w_ref, s_ref, b_ref, o_ref) = refs[:nph], refs[nph:]
    C = w_ref.shape[-1]
    imgs = [p[0] for p in phase_refs]  # each (Hp, Wp, C), bf16

    acc = jnp.zeros((Ho * Wo, C), jnp.float32)
    for ky in range(3):
        for kx in range(3):
            img = imgs[(ky % stride) * stride + (kx % stride)]
            oy, ox = ky // stride, kx // stride
            a = img[oy:oy + Ho, ox:ox + Wo, :].reshape(Ho * Wo, C)
            acc = acc + jnp.dot(a, w_ref[ky * 3 + kx],
                                preferred_element_type=jnp.float32)
    y = jnp.maximum(acc * s_ref[...] + b_ref[...], 0.0)
    o_ref[...] = y.reshape(1, Ho, Wo, C).astype(o_ref.dtype)


# ---------------------------------------------------------------------------
# Kernel wrappers
# ---------------------------------------------------------------------------
def matmul_bn_act(a, w, scale, bias, *, relu=True, out_dtype=jnp.bfloat16):
    """out = [relu]((a @ w) * scale + bias); bf16 MXU feeds, K-tiled f32 acc."""
    M, K = a.shape
    N = w.shape[1]
    tm, tk = _pick_tm(M), _pick_tk(K)
    Mp = pl.cdiv(M, tm) * tm
    if Mp != M:  # rare fallback; tile choice above avoids it for common shapes
        a = jnp.pad(a, ((0, Mp - M), (0, 0)))
    a = a.astype(jnp.bfloat16)
    w = w.astype(jnp.bfloat16)
    scale2 = scale.reshape(1, N).astype(jnp.float32)
    bias2 = bias.reshape(1, N).astype(jnp.float32)

    block_bytes = 2 * (tm * tk + tk * N) + 4 * tm * N + 2 * tm * N
    out = pl.pallas_call(
        functools.partial(_mm_bn_act_kernel, relu=relu),
        out_shape=jax.ShapeDtypeStruct((Mp, N), out_dtype),
        grid=(Mp // tm, K // tk),
        in_specs=[
            pl.BlockSpec((tm, tk), lambda i, k: (i, k)),
            pl.BlockSpec((tk, N), lambda i, k: (k, 0)),
            pl.BlockSpec((1, N), lambda i, k: (0, 0)),
            pl.BlockSpec((1, N), lambda i, k: (0, 0)),
        ],
        out_specs=pl.BlockSpec((tm, N), lambda i, k: (i, 0)),
        scratch_shapes=[pltpu.VMEM((tm, N), jnp.float32)],
        compiler_params=pltpu.CompilerParams(
            dimension_semantics=("parallel", "arbitrary"),
            vmem_limit_bytes=_vmem_limit(block_bytes)),
        cost_estimate=pl.CostEstimate(
            flops=2 * Mp * K * N, transcendentals=0,
            bytes_accessed=2 * (Mp * K + K * N + Mp * N)),
    )(a, w, scale2, bias2)
    return out[:M] if Mp != M else out


def conv3x3_bn_relu(y1, w2, s2, b2, stride):
    """3x3 / stride / pad=1 conv + BN + ReLU without materializing im2col."""
    N, H, W, C = y1.shape
    Ho = (H + 2 - 3) // stride + 1
    Wo = (W + 2 - 3) // stride + 1

    # Pad + phase-split by stride at the XLA level (~one extra copy of y1,
    # vs. the 9x im2col); every tap then becomes a static contiguous slice.
    y1p = jnp.pad(y1, ((0, 0), (1, 1), (1, 1), (0, 0)))
    phases = [y1p[:, p::stride, q::stride, :].astype(jnp.bfloat16)
              for p in range(stride) for q in range(stride)]
    for ph in phases:
        assert ph.shape[1] >= Ho + 2 // stride
        assert ph.shape[2] >= Wo + 2 // stride

    w2 = w2.reshape(9, C, C).astype(jnp.bfloat16)  # tap-major: [ky*3+kx]
    s2 = s2.reshape(1, C).astype(jnp.float32)
    b2 = b2.reshape(1, C).astype(jnp.float32)

    in_specs = [pl.BlockSpec((1,) + p.shape[1:], lambda n: (n, 0, 0, 0))
                for p in phases]
    in_specs += [
        pl.BlockSpec((9, C, C), lambda n: (0, 0, 0)),
        pl.BlockSpec((1, C), lambda n: (0, 0)),
        pl.BlockSpec((1, C), lambda n: (0, 0)),
    ]
    phase_elems = sum(p.shape[1] * p.shape[2] * p.shape[3] for p in phases)
    block_bytes = 2 * phase_elems + 2 * 9 * C * C + (4 + 2) * Ho * Wo * C

    out = pl.pallas_call(
        functools.partial(_conv3x3_bn_relu_kernel, stride=stride, Ho=Ho, Wo=Wo),
        out_shape=jax.ShapeDtypeStruct((N, Ho, Wo, C), jnp.bfloat16),
        grid=(N,),
        in_specs=in_specs,
        out_specs=pl.BlockSpec((1, Ho, Wo, C), lambda n: (n, 0, 0, 0)),
        compiler_params=pltpu.CompilerParams(
            dimension_semantics=("parallel",),
            vmem_limit_bytes=_vmem_limit(block_bytes)),
        cost_estimate=pl.CostEstimate(
            flops=2 * N * Ho * Wo * 9 * C * C, transcendentals=0,
            bytes_accessed=2 * N * phase_elems + 2 * 9 * C * C
                           + 2 * N * Ho * Wo * C),
    )(*phases, w2, s2, b2)
    return out


def matmul_bn_add_relu(a1, w1, s1, b1, a2=None, w2=None, s2=None, b2=None,
                       residual=None, out_dtype=jnp.float32):
    """relu((a1@w1)*s1 + b1 + shortcut) where the shortcut is either a fused
    projection matmul (a2@w2)*s2 + b2 or an identity residual."""
    M, K1 = a1.shape
    N = w1.shape[1]
    tm = _pick_tm(M)
    Mp = pl.cdiv(M, tm) * tm

    def pad_rows(x):
        return x if (x is None or Mp == M) else jnp.pad(x, ((0, Mp - M), (0, 0)))

    a1 = pad_rows(a1).astype(jnp.bfloat16)
    w1 = w1.astype(jnp.bfloat16)
    s1 = s1.reshape(1, N).astype(jnp.float32)
    b1 = b1.reshape(1, N).astype(jnp.float32)

    flops = 2 * Mp * K1 * N
    bytes_acc = 2 * (Mp * K1 + K1 * N) + 4 * Mp * N

    if a2 is not None:
        K2 = a2.shape[1]
        a2 = pad_rows(a2).astype(jnp.bfloat16)
        w2 = w2.astype(jnp.bfloat16)
        s2 = s2.reshape(1, N).astype(jnp.float32)
        b2 = b2.reshape(1, N).astype(jnp.float32)
        kernel = _mm2_bn_add_relu_kernel
        args = (a1, w1, s1, b1, a2, w2, s2, b2)
        in_specs = [
            pl.BlockSpec((tm, K1), lambda i: (i, 0)),
            pl.BlockSpec((K1, N), lambda i: (0, 0)),
            pl.BlockSpec((1, N), lambda i: (0, 0)),
            pl.BlockSpec((1, N), lambda i: (0, 0)),
            pl.BlockSpec((tm, K2), lambda i: (i, 0)),
            pl.BlockSpec((K2, N), lambda i: (0, 0)),
            pl.BlockSpec((1, N), lambda i: (0, 0)),
            pl.BlockSpec((1, N), lambda i: (0, 0)),
        ]
        flops += 2 * Mp * K2 * N
        bytes_acc += 2 * (Mp * K2 + K2 * N)
        block_bytes = 2 * (tm * K1 + K1 * N + tm * K2 + K2 * N) + 4 * tm * N
    else:
        r = pad_rows(residual).astype(jnp.bfloat16)
        kernel = _mm_bn_res_relu_kernel
        args = (a1, w1, s1, b1, r)
        in_specs = [
            pl.BlockSpec((tm, K1), lambda i: (i, 0)),
            pl.BlockSpec((K1, N), lambda i: (0, 0)),
            pl.BlockSpec((1, N), lambda i: (0, 0)),
            pl.BlockSpec((1, N), lambda i: (0, 0)),
            pl.BlockSpec((tm, N), lambda i: (i, 0)),
        ]
        bytes_acc += 2 * Mp * N
        block_bytes = 2 * (tm * K1 + K1 * N + tm * N) + 4 * tm * N

    out = pl.pallas_call(
        kernel,
        out_shape=jax.ShapeDtypeStruct((Mp, N), out_dtype),
        grid=(Mp // tm,),
        in_specs=in_specs,
        out_specs=pl.BlockSpec((tm, N), lambda i: (i, 0)),
        compiler_params=pltpu.CompilerParams(
            dimension_semantics=("parallel",),
            vmem_limit_bytes=_vmem_limit(block_bytes)),
        cost_estimate=pl.CostEstimate(flops=flops, transcendentals=0,
                                      bytes_accessed=bytes_acc),
    )(*args)
    return out[:M] if Mp != M else out


# ---------------------------------------------------------------------------
# BottleNeck forward (Pallas)
# ---------------------------------------------------------------------------
def bottleneck_forward(x, params, stride):
    N, H, W, Cin = x.shape
    C = params["w1"].shape[1]
    Cout = params["w3"].shape[1]  # = 4 * C (expansion)

    x_bf16 = x.astype(jnp.bfloat16)

    # conv1 (1x1) + BN1 + ReLU
    y1 = matmul_bn_act(x_bf16.reshape(N * H * W, Cin), params["w1"],
                       params["s1"], params["b1"], relu=True)
    y1 = y1.reshape(N, H, W, C)

    # conv2 (3x3, stride, pad=1) + BN2 + ReLU  (no HBM im2col)
    y2 = conv3x3_bn_relu(y1, params["w2"], params["s2"], params["b2"], stride)
    Ho, Wo = y2.shape[1], y2.shape[2]
    y2 = y2.reshape(N * Ho * Wo, C)

    # conv3 (1x1) + BN3 + shortcut + ReLU (single fused kernel)
    if stride != 1 or Cin != Cout:
        # Spatial subsample of x for the projection shortcut is a small XLA
        # strided slice; both matmuls + BN + add + ReLU run in one kernel.
        xs = x_bf16[:, ::stride, ::stride, :].reshape(N * Ho * Wo, Cin)
        out = matmul_bn_add_relu(y2, params["w3"], params["s3"], params["b3"],
                                 a2=xs, w2=params["ws"], s2=params["ss"],
                                 b2=params["bs"])
    else:
        res = x_bf16.reshape(N * Ho * Wo, Cout)
        out = matmul_bn_add_relu(y2, params["w3"], params["s3"], params["b3"],
                                 residual=res)
    return out.reshape(N, Ho, Wo, Cout)


# ---------------------------------------------------------------------------
# Parameter construction (deterministic, synthetic) + BN folding
# ---------------------------------------------------------------------------
def fold_bn(gamma, beta, mean, var, eps=1e-5):
    scale = gamma / jnp.sqrt(var + eps)
    return scale, beta - mean * scale


def make_params(key, in_channels, out_channels, stride, expansion=4):
    C, Cout = out_channels, out_channels * expansion
    ks = jax.random.split(key, 16)

    def bn_raw(k, n):
        k1, k2, k3, k4 = jax.random.split(k, 4)
        return (jax.random.uniform(k1, (n,), minval=0.5, maxval=1.5),     # gamma
                0.1 * jax.random.normal(k2, (n,)),                        # beta
                0.1 * jax.random.normal(k3, (n,)),                        # running_mean
                jax.random.uniform(k4, (n,), minval=0.5, maxval=1.5))     # running_var

    raw = {
        "w1": 0.1 * jax.random.normal(ks[0], (in_channels, C), jnp.float32),
        "w2": 0.1 * jax.random.normal(ks[1], (9 * C, C), jnp.float32),
        "w3": 0.1 * jax.random.normal(ks[2], (C, Cout), jnp.float32),
        "bn1": bn_raw(ks[3], C),
        "bn2": bn_raw(ks[4], C),
        "bn3": bn_raw(ks[5], Cout),
    }
    if stride != 1 or in_channels != Cout:
        raw["ws"] = 0.1 * jax.random.normal(ks[6], (in_channels, Cout), jnp.float32)
        raw["bns"] = bn_raw(ks[7], Cout)

    p = {"w1": raw["w1"], "w2": raw["w2"], "w3": raw["w3"]}
    p["s1"], p["b1"] = fold_bn(*raw["bn1"])
    p["s2"], p["b2"] = fold_bn(*raw["bn2"])
    p["s3"], p["b3"] = fold_bn(*raw["bn3"])
    if "ws" in raw:
        p["ws"] = raw["ws"]
        p["ss"], p["bs"] = fold_bn(*raw["bns"])
    return p, raw


# ---------------------------------------------------------------------------
# Pure-JAX reference (lax.conv) for validation
# ---------------------------------------------------------------------------
def reference_forward(x, raw, stride, expansion=4):
    Cin = x.shape[-1]
    C = raw["w1"].shape[1]
    Cout = C * expansion
    dn = ("NHWC", "HWIO", "NHWC")

    def bn(y, prm):
        gamma, beta, mean, var = prm
        return (y - mean) / jnp.sqrt(var + 1e-5) * gamma + beta

    w1 = raw["w1"].reshape(1, 1, Cin, C)
    w2 = raw["w2"].reshape(3, 3, C, C)
    w3 = raw["w3"].reshape(1, 1, C, Cout)

    y = lax.conv_general_dilated(x, w1, (1, 1), "VALID", dimension_numbers=dn)
    y = jax.nn.relu(bn(y, raw["bn1"]))
    y = lax.conv_general_dilated(y, w2, (stride, stride), ((1, 1), (1, 1)),
                                 dimension_numbers=dn)
    y = jax.nn.relu(bn(y, raw["bn2"]))
    y = lax.conv_general_dilated(y, w3, (1, 1), "VALID", dimension_numbers=dn)
    y = bn(y, raw["bn3"])

    if stride != 1 or Cin != Cout:
        ws = raw["ws"].reshape(1, 1, Cin, Cout)
        s = lax.conv_general_dilated(x, ws, (stride, stride), "VALID",
                                     dimension_numbers=dn)
        s = bn(s, raw["bns"])
    else:
        s = x
    return jax.nn.relu(y + s)


# ---------------------------------------------------------------------------
if __name__ == "__main__":
    # Small shapes: batch=2, in_channels=16, H=W=16, out_channels=8, stride=2
    # (stride != 1 and in_channels != out_channels*4 -> projection shortcut).
    N, Cin, H, W = 2, 16, 16, 16
    out_channels, stride = 8, 2

    key = jax.random.PRNGKey(0)
    kx_, kp = jax.random.split(key)
    x = jax.random.normal(kx_, (N, H, W, Cin), jnp.float32)  # NHWC

    params, raw = make_params(kp, Cin, out_channels, stride)

    fwd = jax.jit(functools.partial(bottleneck_forward, stride=stride))
    out = jax.block_until_ready(fwd(x, params))

    ref = jax.block_until_ready(reference_forward(x, raw, stride))
    assert out.shape == ref.shape == (N, H // stride, W // stride, out_channels * 4)
    # bf16 MXU feeds -> compare with a bf16-appropriate (relative) tolerance.
    err = float(jnp.max(jnp.abs(out - ref) / (1.0 + jnp.abs(ref))))
    assert err < 3e-2, f"max relative error {err}"

    print("KERNEL_OK")
</pallas_src>

<mosaic_0001>
module attributes {stable_mosaic.version = 11 : i64} {
  func.func @_mm_bn_act_kernel(%arg0: i32, %arg1: i32, %arg2: memref<256x16xbf16, #tpu.memory_space<vmem>>, %arg3: memref<16x8xbf16, #tpu.memory_space<vmem>>, %arg4: memref<1x8xf32, #tpu.memory_space<vmem>>, %arg5: memref<1x8xf32, #tpu.memory_space<vmem>>, %arg6: memref<256x8xbf16, #tpu.memory_space<vmem>>, %arg7: memref<256x8xf32, #tpu.memory_space<vmem>>) attributes {dimension_semantics = [#tpu.dimension_semantics<parallel>, #tpu.dimension_semantics<arbitrary>], iteration_bounds = array<i64: 2, 1>, scalar_prefetch = 0 : i64, scratch_operands = 1 : i64, tpu.core_type = #tpu.core_type<tc>, window_params = [{transform_indices = @transform_0, window_bounds = array<i64: 256, 16>}, {transform_indices = @transform_1, window_bounds = array<i64: 16, 8>}, {pipeline_mode = #tpu.pipeline_mode<synchronous>, transform_indices = @transform_2, window_bounds = array<i64: 1, 8>}, {pipeline_mode = #tpu.pipeline_mode<synchronous>, transform_indices = @transform_3, window_bounds = array<i64: 1, 8>}, {transform_indices = @transform_4, window_bounds = array<i64: 256, 8>}]} {
    %c0_i32 = arith.constant 0 : i32
    %0 = arith.cmpi eq, %arg1, %c0_i32 : i32
    %1 = arith.extui %0 : i1 to i32
    %c0_i32_0 = arith.constant 0 : i32
    %2 = arith.cmpi ne, %1, %c0_i32_0 : i32
    scf.if %2 {
      %cst_10 = arith.constant 0.000000e+00 : f32
      %12 = vector.broadcast %cst_10 : f32 to vector<256x8xf32>
      %c0_11 = arith.constant 0 : index
      %c0_12 = arith.constant 0 : index
      %13 = vector.load %arg7[%c0_11, %c0_12] : memref<256x8xf32, #tpu.memory_space<vmem>>, vector<256x8xf32>
      tpu.vector_store %arg7[%c0_11, %c0_12], %12 {strides = array<i32>} : memref<256x8xf32, #tpu.memory_space<vmem>>, vector<256x8xf32>,
    } else {
    }
    %c0 = arith.constant 0 : index
    %c0_1 = arith.constant 0 : index
    %3 = vector.load %arg7[%c0, %c0_1] : memref<256x8xf32, #tpu.memory_space<vmem>>, vector<256x8xf32>
    %c0_2 = arith.constant 0 : index
    %c0_3 = arith.constant 0 : index
    %4 = vector.load %arg2[%c0_2, %c0_3] : memref<256x16xbf16, #tpu.memory_space<vmem>>, vector<256x16xbf16>
    %c0_4 = arith.constant 0 : index
    %c0_5 = arith.constant 0 : index
    %5 = vector.load %arg3[%c0_4, %c0_5] : memref<16x8xbf16, #tpu.memory_space<vmem>>, vector<16x8xbf16>
    %cst = arith.constant dense<0.000000e+00> : vector<256x8xf32>
    %6 = tpu.matmul %4, %5, %cst {dimension_numbers = #tpu.dot_dimension_numbers<[1], [0], [0], [1], [0, 0, 1, 1], [], []>} : vector<256x16xbf16>, vector<16x8xbf16>, vector<256x8xf32> -> vector<256x8xf32>
    %7 = arith.addf %3, %6 : vector<256x8xf32>
    %c0_6 = arith.constant 0 : index
    %c0_7 = arith.constant 0 : index
    %8 = vector.load %arg7[%c0_6, %c0_7] : memref<256x8xf32, #tpu.memory_space<vmem>>, vector<256x8xf32>
    tpu.vector_store %arg7[%c0_6, %c0_7], %7 {strides = array<i32>} : memref<256x8xf32, #tpu.memory_space<vmem>>, vector<256x8xf32>,
    %c0_i32_8 = arith.constant 0 : i32
    %9 = arith.cmpi eq, %arg1, %c0_i32_8 : i32
    %10 = arith.extui %9 : i1 to i32
    %c0_i32_9 = arith.constant 0 : i32
    %11 = arith.cmpi ne, %10, %c0_i32_9 : i32
    scf.if %11 {
      %c0_10 = arith.constant 0 : index
      %c0_11 = arith.constant 0 : index
      %12 = vector.load %arg7[%c0_10, %c0_11] : memref<256x8xf32, #tpu.memory_space<vmem>>, vector<256x8xf32>
      %c0_12 = arith.constant 0 : index
      %c0_13 = arith.constant 0 : index
      %13 = vector.load %arg4[%c0_12, %c0_13] : memref<1x8xf32, #tpu.memory_space<vmem>>, vector<1x8xf32>
      %14 = vector.broadcast %13 : vector<1x8xf32> to vector<256x8xf32>
      %15 = arith.mulf %12, %14 : vector<256x8xf32>
      %c0_14 = arith.constant 0 : index
      %c0_15 = arith.constant 0 : index
      %16 = vector.load %arg5[%c0_14, %c0_15] : memref<1x8xf32, #tpu.memory_space<vmem>>, vector<1x8xf32>
      %17 = vector.broadcast %16 : vector<1x8xf32> to vector<256x8xf32>
      %18 = arith.addf %15, %17 : vector<256x8xf32>
      %cst_16 = arith.constant 0.000000e+00 : f32
      %19 = vector.broadcast %cst_16 : f32 to vector<256x8xf32>
      %20 = arith.maximumf %18, %19 : vector<256x8xf32>
      %21 = arith.truncf %20 : vector<256x8xf32> to vector<256x8xbf16>
      %c0_17 = arith.constant 0 : index
      %c0_18 = arith.constant 0 : index
      %22 = vector.load %arg6[%c0_17, %c0_18] : memref<256x8xbf16, #tpu.memory_space<vmem>>, vector<256x8xbf16>
      tpu.vector_store %arg6[%c0_17, %c0_18], %21 {strides = array<i32>} : memref<256x8xbf16, #tpu.memory_space<vmem>>, vector<256x8xbf16>,
    } else {
    }
    return
  }
  func.func @transform_0(%arg0: i32, %arg1: i32) -> (i32, i32) {
    %c0_i32 = arith.constant 0 : i32
    return %arg0, %arg1 : i32, i32
  }
  func.func @transform_1(%arg0: i32, %arg1: i32) -> (i32, i32) {
    %c0_i32 = arith.constant 0 : i32
    %c0_i32_0 = arith.constant 0 : i32
    return %arg1, %c0_i32 : i32, i32
  }
  func.func @transform_2(%arg0: i32, %arg1: i32) -> (i32, i32) {
    %c0_i32 = arith.constant 0 : i32
    %c0_i32_0 = arith.constant 0 : i32
    %c0_i32_1 = arith.constant 0 : i32
    return %c0_i32, %c0_i32_0 : i32, i32
  }
  func.func @transform_3(%arg0: i32, %arg1: i32) -> (i32, i32) {
    %c0_i32 = arith.constant 0 : i32
    %c0_i32_0 = arith.constant 0 : i32
    %c0_i32_1 = arith.constant 0 : i32
    return %c0_i32, %c0_i32_0 : i32, i32
  }
  func.func @transform_4(%arg0: i32, %arg1: i32) -> (i32, i32) {
    %c0_i32 = arith.constant 0 : i32
    %c0_i32_0 = arith.constant 0 : i32
    return %arg0, %c0_i32 : i32, i32
  }
}

module attributes {stable_mosaic.version = 11 : i64} {
  func.func @_conv3x3_bn_relu_kernel(%arg0: i32, %arg1: memref<1x9x9x8xbf16, #tpu.memory_space<vmem>>, %arg2: memref<1x9x9x8xbf16, #tpu.memory_space<vmem>>, %arg3: memref<1x9x9x8xbf16, #tpu.memory_space<vmem>>, %arg4: memref<1x9x9x8xbf16, #tpu.memory_space<vmem>>, %arg5: memref<9x8x8xbf16, #tpu.memory_space<vmem>>, %arg6: memref<1x8xf32, #tpu.memory_space<vmem>>, %arg7: memref<1x8xf32, #tpu.memory_space<vmem>>, %arg8: memref<1x8x8x8xbf16, #tpu.memory_space<vmem>>) attributes {dimension_semantics = [#tpu.dimension_semantics<parallel>], iteration_bounds = array<i64: 2>, scalar_prefetch = 0 : i64, scratch_operands = 0 : i64, tpu.core_type = #tpu.core_type<tc>, window_params = [{transform_indices = @transform_0, window_bounds = array<i64: 1, 9, 9, 8>}, {transform_indices = @transform_1, window_bounds = array<i64: 1, 9, 9, 8>}, {transform_indices = @transform_2, window_bounds = array<i64: 1, 9, 9, 8>}, {transform_indices = @transform_3, window_bounds = array<i64: 1, 9, 9, 8>}, {pipeline_mode = #tpu.pipeline_mode<synchronous>, transform_indices = @transform_4, window_bounds = array<i64: 9, 8, 8>}, {pipeline_mode = #tpu.pipeline_mode<synchronous>, transform_indices = @transform_5, window_bounds = array<i64: 1, 8>}, {pipeline_mode = #tpu.pipeline_mode<synchronous>, transform_indices = @transform_6, window_bounds = array<i64: 1, 8>}, {transform_indices = @transform_7, window_bounds = array<i64: 1, 8, 8, 8>}]} {
    %c0 = arith.constant 0 : index
    %c0_0 = arith.constant 0 : index
    %c0_1 = arith.constant 0 : index
    %c0_2 = arith.constant 0 : index
    %0 = vector.load %arg1[%c0, %c0_0, %c0_1, %c0_2] : memref<1x9x9x8xbf16, #tpu.memory_space<vmem>>, vector<1x9x9x8xbf16>
    %1 = vector.shape_cast %0 : vector<1x9x9x8xbf16> to vector<9x9x8xbf16>
    %c0_3 = arith.constant 0 : index
    %c0_4 = arith.constant 0 : index
    %c0_5 = arith.constant 0 : index
    %c0_6 = arith.constant 0 : index
    %2 = vector.load %arg2[%c0_3, %c0_4, %c0_5, %c0_6] : memref<1x9x9x8xbf16, #tpu.memory_space<vmem>>, vector<1x9x9x8xbf16>
    %3 = vector.shape_cast %2 : vector<1x9x9x8xbf16> to vector<9x9x8xbf16>
    %c0_7 = arith.constant 0 : index
    %c0_8 = arith.constant 0 : index
    %c0_9 = arith.constant 0 : index
    %c0_10 = arith.constant 0 : index
    %4 = vector.load %arg3[%c0_7, %c0_8, %c0_9, %c0_10] : memref<1x9x9x8xbf16, #tpu.memory_space<vmem>>, vector<1x9x9x8xbf16>
    %5 = vector.shape_cast %4 : vector<1x9x9x8xbf16> to vector<9x9x8xbf16>
    %c0_11 = arith.constant 0 : index
    %c0_12 = arith.constant 0 : index
    %c0_13 = arith.constant 0 : index
    %c0_14 = arith.constant 0 : index
    %6 = vector.load %arg4[%c0_11, %c0_12, %c0_13, %c0_14] : memref<1x9x9x8xbf16, #tpu.memory_space<vmem>>, vector<1x9x9x8xbf16>
    %7 = vector.shape_cast %6 : vector<1x9x9x8xbf16> to vector<9x9x8xbf16>
    %cst = arith.constant 0.000000e+00 : f32
    %8 = vector.broadcast %cst : f32 to vector<64x8xf32>
    %9 = vector.extract_strided_slice %1 {offsets = [0, 0, 0], sizes = [8, 8, 8], strides = [1, 1, 1]} : vector<9x9x8xbf16> to vector<8x8x8xbf16>
    %10 = vector.shape_cast %9 : vector<8x8x8xbf16> to vector<64x8xbf16>
    %c0_15 = arith.constant 0 : index
    %c0_16 = arith.constant 0 : index
    %c0_17 = arith.constant 0 : index
    %11 = vector.load %arg5[%c0_15, %c0_16, %c0_17] : memref<9x8x8xbf16, #tpu.memory_space<vmem>>, vector<1x8x8xbf16>
    %12 = vector.shape_cast %11 : vector<1x8x8xbf16> to vector<8x8xbf16>
    %cst_18 = arith.constant dense<0.000000e+00> : vector<64x8xf32>
    %13 = tpu.matmul %10, %12, %cst_18 {dimension_numbers = #tpu.dot_dimension_numbers<[1], [0], [0], [1], [0, 0, 1, 1], [], []>} : vector<64x8xbf16>, vector<8x8xbf16>, vector<64x8xf32> -> vector<64x8xf32>
    %14 = arith.addf %8, %13 : vector<64x8xf32>
    %15 = vector.extract_strided_slice %3 {offsets = [0, 0, 0], sizes = [8, 8, 8], strides = [1, 1, 1]} : vector<9x9x8xbf16> to vector<8x8x8xbf16>
    %16 = vector.shape_cast %15 : vector<8x8x8xbf16> to vector<64x8xbf16>
    %c1 = arith.constant 1 : index
    %c0_19 = arith.constant 0 : index
    %c0_20 = arith.constant 0 : index
    %17 = vector.load %arg5[%c1, %c0_19, %c0_20] : memref<9x8x8xbf16, #tpu.memory_space<vmem>>, vector<1x8x8xbf16>
    %18 = vector.shape_cast %17 : vector<1x8x8xbf16> to vector<8x8xbf16>
    %cst_21 = arith.constant dense<0.000000e+00> : vector<64x8xf32>
    %19 = tpu.matmul %16, %18, %cst_21 {dimension_numbers = #tpu.dot_dimension_numbers<[1], [0], [0], [1], [0, 0, 1, 1], [], []>} : vector<64x8xbf16>, vector<8x8xbf16>, vector<64x8xf32> -> vector<64x8xf32>
    %20 = arith.addf %14, %19 : vector<64x8xf32>
    %21 = vector.extract_strided_slice %1 {offsets = [0, 1, 0], sizes = [8, 8, 8], strides = [1, 1, 1]} : vector<9x9x8xbf16> to vector<8x8x8xbf16>
    %22 = vector.shape_cast %21 : vector<8x8x8xbf16> to vector<64x8xbf16>
    %c2 = arith.constant 2 : index
    %c0_22 = arith.constant 0 : index
    %c0_23 = arith.constant 0 : index
    %23 = vector.load %arg5[%c2, %c0_22, %c0_23] : memref<9x8x8xbf16, #tpu.memory_space<vmem>>, vector<1x8x8xbf16>
    %24 = vector.shape_cast %23 : vector<1x8x8xbf16> to vector<8x8xbf16>
    %cst_24 = arith.constant dense<0.000000e+00> : vector<64x8xf32>
    %25 = tpu.matmul %22, %24, %cst_24 {dimension_numbers = #tpu.dot_dimension_numbers<[1], [0], [0], [1], [0, 0, 1, 1], [], []>} : vector<64x8xbf16>, vector<8x8xbf16>, vector<64x8xf32> -> vector<64x8xf32>
    %26 = arith.addf %20, %25 : vector<64x8xf32>
    %27 = vector.extract_strided_slice %5 {offsets = [0, 0, 0], sizes = [8, 8, 8], strides = [1, 1, 1]} : vector<9x9x8xbf16> to vector<8x8x8xbf16>
    %28 = vector.shape_cast %27 : vector<8x8x8xbf16> to vector<64x8xbf16>
    %c3 = arith.constant 3 : index
    %c0_25 = arith.constant 0 : index
    %c0_26 = arith.constant 0 : index
    %29 = vector.load %arg5[%c3, %c0_25, %c0_26] : memref<9x8x8xbf16, #tpu.memory_space<vmem>>, vector<1x8x8xbf16>
    %30 = vector.shape_cast %29 : vector<1x8x8xbf16> to vector<8x8xbf16>
    %cst_27 = arith.constant dense<0.000000e+00> : vector<64x8xf32>
    %31 = tpu.matmul %28, %30, %cst_27 {dimension_numbers = #tpu.dot_dimension_numbers<[1], [0], [0], [1], [0, 0, 1, 1], [], []>} : vector<64x8xbf16>, vector<8x8xbf16>, vector<64x8xf32> -> vector<64x8xf32>
    %32 = arith.addf %26, %31 : vector<64x8xf32>
    %33 = vector.extract_strided_slice %7 {offsets = [0, 0, 0], sizes = [8, 8, 8], strides = [1, 1, 1]} : vector<9x9x8xbf16> to vector<8x8x8xbf16>
    %34 = vector.shape_cast %33 : vector<8x8x8xbf16> to vector<64x8xbf16>
    %c4 = arith.constant 4 : index
    %c0_28 = arith.constant 0 : index
    %c0_29 = arith.constant 0 : index
    %35 = vector.load %arg5[%c4, %c0_28, %c0_29] : memref<9x8x8xbf16, #tpu.memory_space<vmem>>, vector<1x8x8xbf16>
    %36 = vector.shape_cast %35 : vector<1x8x8xbf16> to vector<8x8xbf16>
    %cst_30 = arith.constant dense<0.000000e+00> : vector<64x8xf32>
    %37 = tpu.matmul %34, %36, %cst_30 {dimension_numbers = #tpu.dot_dimension_numbers<[1], [0], [0], [1], [0, 0, 1, 1], [], []>} : vector<64x8xbf16>, vector<8x8xbf16>, vector<64x8xf32> -> vector<64x8xf32>
    %38 = arith.addf %32, %37 : vector<64x8xf32>
    %39 = vector.extract_strided_slice %5 {offsets = [0, 1, 0], sizes = [8, 8, 8], strides = [1, 1, 1]} : vector<9x9x8xbf16> to vector<8x8x8xbf16>
    %40 = vector.shape_cast %39 : vector<8x8x8xbf16> to vector<64x8xbf16>
    %c5 = arith.constant 5 : index
    %c0_31 = arith.constant 0 : index
    %c0_32 = arith.constant 0 : index
    %41 = vector.load %arg5[%c5, %c0_31, %c0_32] : memref<9x8x8xbf16, #tpu.memory_space<vmem>>, vector<1x8x8xbf16>
    %42 = vector.shape_cast %41 : vector<1x8x8xbf16> to vector<8x8xbf16>
    %cst_33 = arith.constant dense<0.000000e+00> : vector<64x8xf32>
    %43 = tpu.matmul %40, %42, %cst_33 {dimension_numbers = #tpu.dot_dimension_numbers<[1], [0], [0], [1], [0, 0, 1, 1], [], []>} : vector<64x8xbf16>, vector<8x8xbf16>, vector<64x8xf32> -> vector<64x8xf32>
    %44 = arith.addf %38, %43 : vector<64x8xf32>
    %45 = vector.extract_strided_slice %1 {offsets = [1, 0, 0], sizes = [8, 8, 8], strides = [1, 1, 1]} : vector<9x9x8xbf16> to vector<8x8x8xbf16>
    %46 = vector.shape_cast %45 : vector<8x8x8xbf16> to vector<64x8xbf16>
    %c6 = arith.constant 6 : index
    %c0_34 = arith.constant 0 : index
    %c0_35 = arith.constant 0 : index
    %47 = vector.load %arg5[%c6, %c0_34, %c0_35] : memref<9x8x8xbf16, #tpu.memory_space<vmem>>, vector<1x8x8xbf16>
    %48 = vector.shape_cast %47 : vector<1x8x8xbf16> to vector<8x8xbf16>
    %cst_36 = arith.constant dense<0.000000e+00> : vector<64x8xf32>
    %49 = tpu.matmul %46, %48, %cst_36 {dimension_numbers = #tpu.dot_dimension_numbers<[1], [0], [0], [1], [0, 0, 1, 1], [], []>} : vector<64x8xbf16>, vector<8x8xbf16>, vector<64x8xf32> -> vector<64x8xf32>
    %50 = arith.addf %44, %49 : vector<64x8xf32>
    %51 = vector.extract_strided_slice %3 {offsets = [1, 0, 0], sizes = [8, 8, 8], strides = [1, 1, 1]} : vector<9x9x8xbf16> to vector<8x8x8xbf16>
    %52 = vector.shape_cast %51 : vector<8x8x8xbf16> to vector<64x8xbf16>
    %c7 = arith.constant 7 : index
    %c0_37 = arith.constant 0 : index
    %c0_38 = arith.constant 0 : index
    %53 = vector.load %arg5[%c7, %c0_37, %c0_38] : memref<9x8x8xbf16, #tpu.memory_space<vmem>>, vector<1x8x8xbf16>
    %54 = vector.shape_cast %53 : vector<1x8x8xbf16> to vector<8x8xbf16>
    %cst_39 = arith.constant dense<0.000000e+00> : vector<64x8xf32>
    %55 = tpu.matmul %52, %54, %cst_39 {dimension_numbers = #tpu.dot_dimension_numbers<[1], [0], [0], [1], [0, 0, 1, 1], [], []>} : vector<64x8xbf16>, vector<8x8xbf16>, vector<64x8xf32> -> vector<64x8xf32>
    %56 = arith.addf %50, %55 : vector<64x8xf32>
    %57 = vector.extract_strided_slice %1 {offsets = [1, 1, 0], sizes = [8, 8, 8], strides = [1, 1, 1]} : vector<9x9x8xbf16> to vector<8x8x8xbf16>
    %58 = vector.shape_cast %57 : vector<8x8x8xbf16> to vector<64x8xbf16>
    %c8 = arith.constant 8 : index
    %c0_40 = arith.constant 0 : index
    %c0_41 = arith.constant 0 : index
    %59 = vector.load %arg5[%c8, %c0_40, %c0_41] : memref<9x8x8xbf16, #tpu.memory_space<vmem>>, vector<1x8x8xbf16>
    %60 = vector.shape_cast %59 : vector<1x8x8xbf16> to vector<8x8xbf16>
    %cst_42 = arith.constant dense<0.000000e+00> : vector<64x8xf32>
    %61 = tpu.matmul %58, %60, %cst_42 {dimension_numbers = #tpu.dot_dimension_numbers<[1], [0], [0], [1], [0, 0, 1, 1], [], []>} : vector<64x8xbf16>, vector<8x8xbf16>, vector<64x8xf32> -> vector<64x8xf32>
    %62 = arith.addf %56, %61 : vector<64x8xf32>
    %c0_43 = arith.constant 0 : index
    %c0_44 = arith.constant 0 : index
    %63 = vector.load %arg6[%c0_43, %c0_44] : memref<1x8xf32, #tpu.memory_space<vmem>>, vector<1x8xf32>
    %64 = vector.broadcast %63 : vector<1x8xf32> to vector<64x8xf32>
    %65 = arith.mulf %62, %64 : vector<64x8xf32>
    %c0_45 = arith.constant 0 : index
    %c0_46 = arith.constant 0 : index
    %66 = vector.load %arg7[%c0_45, %c0_46] : memref<1x8xf32, #tpu.memory_space<vmem>>, vector<1x8xf32>
    %67 = vector.broadcast %66 : vector<1x8xf32> to vector<64x8xf32>
    %68 = arith.addf %65, %67 : vector<64x8xf32>
    %cst_47 = arith.constant 0.000000e+00 : f32
    %69 = vector.broadcast %cst_47 : f32 to vector<64x8xf32>
    %70 = arith.maximumf %68, %69 : vector<64x8xf32>
    %71 = vector.shape_cast %70 : vector<64x8xf32> to vector<1x8x8x8xf32>
    %72 = arith.truncf %71 : vector<1x8x8x8xf32> to vector<1x8x8x8xbf16>
    %c0_48 = arith.constant 0 : index
    %c0_49 = arith.constant 0 : index
    %c0_50 = arith.constant 0 : index
    %c0_51 = arith.constant 0 : index
    %73 = vector.load %arg8[%c0_48, %c0_49, %c0_50, %c0_51] : memref<1x8x8x8xbf16, #tpu.memory_space<vmem>>, vector<1x8x8x8xbf16>
    tpu.vector_store %arg8[%c0_48, %c0_49, %c0_50, %c0_51], %72 {strides = array<i32>} : memref<1x8x8x8xbf16, #tpu.memory_space<vmem>>, vector<1x8x8x8xbf16>,
    return
  }
  func.func @transform_0(%arg0: i32) -> (i32, i32, i32, i32) {
    %c0_i32 = arith.constant 0 : i32
    %c0_i32_0 = arith.constant 0 : i32
    %c0_i32_1 = arith.constant 0 : i32
    %c0_i32_2 = arith.constant 0 : i32
    return %arg0, %c0_i32, %c0_i32_0, %c0_i32_1 : i32, i32, i32, i32
  }
  func.func @transform_1(%arg0: i32) -> (i32, i32, i32, i32) {
    %c0_i32 = arith.constant 0 : i32
    %c0_i32_0 = arith.constant 0 : i32
    %c0_i32_1 = arith.constant 0 : i32
    %c0_i32_2 = arith.constant 0 : i32
    return %arg0, %c0_i32, %c0_i32_0, %c0_i32_1 : i32, i32, i32, i32
  }
  func.func @transform_2(%arg0: i32) -> (i32, i32, i32, i32) {
    %c0_i32 = arith.constant 0 : i32
    %c0_i32_0 = arith.constant 0 : i32
    %c0_i32_1 = arith.constant 0 : i32
    %c0_i32_2 = arith.constant 0 : i32
    return %arg0, %c0_i32, %c0_i32_0, %c0_i32_1 : i32, i32, i32, i32
  }
  func.func @transform_3(%arg0: i32) -> (i32, i32, i32, i32) {
    %c0_i32 = arith.constant 0 : i32
    %c0_i32_0 = arith.constant 0 : i32
    %c0_i32_1 = arith.constant 0 : i32
    %c0_i32_2 = arith.constant 0 : i32
    return %arg0, %c0_i32, %c0_i32_0, %c0_i32_1 : i32, i32, i32, i32
  }
  func.func @transform_4(%arg0: i32) -> (i32, i32, i32) {
    %c0_i32 = arith.constant 0 : i32
    %c0_i32_0 = arith.constant 0 : i32
    %c0_i32_1 = arith.constant 0 : i32
    %c0_i32_2 = arith.constant 0 : i32
    return %c0_i32, %c0_i32_0, %c0_i32_1 : i32, i32, i32
  }
  func.func @transform_5(%arg0: i32) -> (i32, i32) {
    %c0_i32 = arith.constant 0 : i32
    %c0_i32_0 = arith.constant 0 : i32
    %c0_i32_1 = arith.constant 0 : i32
    return %c0_i32, %c0_i32_0 : i32, i32
  }
  func.func @transform_6(%arg0: i32) -> (i32, i32) {
    %c0_i32 = arith.constant 0 : i32
    %c0_i32_0 = arith.constant 0 : i32
    %c0_i32_1 = arith.constant 0 : i32
    return %c0_i32, %c0_i32_0 : i32, i32
  }
  func.func @transform_7(%arg0: i32) -> (i32, i32, i32, i32) {
    %c0_i32 = arith.constant 0 : i32
    %c0_i32_0 = arith.constant 0 : i32
    %c0_i32_1 = arith.constant 0 : i32
    %c0_i32_2 = arith.constant 0 : i32
    return %arg0, %c0_i32, %c0_i32_0, %c0_i32_1 : i32, i32, i32, i32
  }
}

module attributes {stable_mosaic.version = 11 : i64} {
  func.func @_mm2_bn_add_relu_kernel(%arg0: i32, %arg1: memref<64x8xbf16, #tpu.memory_space<vmem>>, %arg2: memref<8x32xbf16, #tpu.memory_space<vmem>>, %arg3: memref<1x32xf32, #tpu.memory_space<vmem>>, %arg4: memref<1x32xf32, #tpu.memory_space<vmem>>, %arg5: memref<64x16xbf16, #tpu.memory_space<vmem>>, %arg6: memref<16x32xbf16, #tpu.memory_space<vmem>>, %arg7: memref<1x32xf32, #tpu.memory_space<vmem>>, %arg8: memref<1x32xf32, #tpu.memory_space<vmem>>, %arg9: memref<64x32xf32, #tpu.memory_space<vmem>>) attributes {dimension_semantics = [#tpu.dimension_semantics<parallel>], iteration_bounds = array<i64: 2>, scalar_prefetch = 0 : i64, scratch_operands = 0 : i64, tpu.core_type = #tpu.core_type<tc>, window_params = [{transform_indices = @transform_0, window_bounds = array<i64: 64, 8>}, {pipeline_mode = #tpu.pipeline_mode<synchronous>, transform_indices = @transform_1, window_bounds = array<i64: 8, 32>}, {pipeline_mode = #tpu.pipeline_mode<synchronous>, transform_indices = @transform_2, window_bounds = array<i64: 1, 32>}, {pipeline_mode = #tpu.pipeline_mode<synchronous>, transform_indices = @transform_3, window_bounds = array<i64: 1, 32>}, {transform_indices = @transform_4, window_bounds = array<i64: 64, 16>}, {pipeline_mode = #tpu.pipeline_mode<synchronous>, transform_indices = @transform_5, window_bounds = array<i64: 16, 32>}, {pipeline_mode = #tpu.pipeline_mode<synchronous>, transform_indices = @transform_6, window_bounds = array<i64: 1, 32>}, {pipeline_mode = #tpu.pipeline_mode<synchronous>, transform_indices = @transform_7, window_bounds = array<i64: 1, 32>}, {transform_indices = @transform_8, window_bounds = array<i64: 64, 32>}]} {
    %c0 = arith.constant 0 : index
    %c0_0 = arith.constant 0 : index
    %0 = vector.load %arg1[%c0, %c0_0] : memref<64x8xbf16, #tpu.memory_space<vmem>>, vector<64x8xbf16>
    %c0_1 = arith.constant 0 : index
    %c0_2 = arith.constant 0 : index
    %1 = vector.load %arg2[%c0_1, %c0_2] : memref<8x32xbf16, #tpu.memory_space<vmem>>, vector<8x32xbf16>
    %cst = arith.constant dense<0.000000e+00> : vector<64x32xf32>
    %2 = tpu.matmul %0, %1, %cst {dimension_numbers = #tpu.dot_dimension_numbers<[1], [0], [0], [1], [0, 0, 1, 1], [], []>} : vector<64x8xbf16>, vector<8x32xbf16>, vector<64x32xf32> -> vector<64x32xf32>
    %c0_3 = arith.constant 0 : index
    %c0_4 = arith.constant 0 : index
    %3 = vector.load %arg3[%c0_3, %c0_4] : memref<1x32xf32, #tpu.memory_space<vmem>>, vector<1x32xf32>
    %4 = vector.broadcast %3 : vector<1x32xf32> to vector<64x32xf32>
    %5 = arith.mulf %2, %4 : vector<64x32xf32>
    %c0_5 = arith.constant 0 : index
    %c0_6 = arith.constant 0 : index
    %6 = vector.load %arg4[%c0_5, %c0_6] : memref<1x32xf32, #tpu.memory_space<vmem>>, vector<1x32xf32>
    %7 = vector.broadcast %6 : vector<1x32xf32> to vector<64x32xf32>
    %8 = arith.addf %5, %7 : vector<64x32xf32>
    %c0_7 = arith.constant 0 : index
    %c0_8 = arith.constant 0 : index
    %9 = vector.load %arg5[%c0_7, %c0_8] : memref<64x16xbf16, #tpu.memory_space<vmem>>, vector<64x16xbf16>
    %c0_9 = arith.constant 0 : index
    %c0_10 = arith.constant 0 : index
    %10 = vector.load %arg6[%c0_9, %c0_10] : memref<16x32xbf16, #tpu.memory_space<vmem>>, vector<16x32xbf16>
    %cst_11 = arith.constant dense<0.000000e+00> : vector<64x32xf32>
    %11 = tpu.matmul %9, %10, %cst_11 {dimension_numbers = #tpu.dot_dimension_numbers<[1], [0], [0], [1], [0, 0, 1, 1], [], []>} : vector<64x16xbf16>, vector<16x32xbf16>, vector<64x32xf32> -> vector<64x32xf32>
    %c0_12 = arith.constant 0 : index
    %c0_13 = arith.constant 0 : index
    %12 = vector.load %arg7[%c0_12, %c0_13] : memref<1x32xf32, #tpu.memory_space<vmem>>, vector<1x32xf32>
    %13 = vector.broadcast %12 : vector<1x32xf32> to vector<64x32xf32>
    %14 = arith.mulf %11, %13 : vector<64x32xf32>
    %15 = arith.addf %8, %14 : vector<64x32xf32>
    %c0_14 = arith.constant 0 : index
    %c0_15 = arith.constant 0 : index
    %16 = vector.load %arg8[%c0_14, %c0_15] : memref<1x32xf32, #tpu.memory_space<vmem>>, vector<1x32xf32>
    %17 = vector.broadcast %16 : vector<1x32xf32> to vector<64x32xf32>
    %18 = arith.addf %15, %17 : vector<64x32xf32>
    %cst_16 = arith.constant 0.000000e+00 : f32
    %19 = vector.broadcast %cst_16 : f32 to vector<64x32xf32>
    %20 = arith.maximumf %18, %19 : vector<64x32xf32>
    %c0_17 = arith.constant 0 : index
    %c0_18 = arith.constant 0 : index
    %21 = vector.load %arg9[%c0_17, %c0_18] : memref<64x32xf32, #tpu.memory_space<vmem>>, vector<64x32xf32>
    tpu.vector_store %arg9[%c0_17, %c0_18], %20 {strides = array<i32>} : memref<64x32xf32, #tpu.memory_space<vmem>>, vector<64x32xf32>,
    return
  }
  func.func @transform_0(%arg0: i32) -> (i32, i32) {
    %c0_i32 = arith.constant 0 : i32
    %c0_i32_0 = arith.constant 0 : i32
    return %arg0, %c0_i32 : i32, i32
  }
  func.func @transform_1(%arg0: i32) -> (i32, i32) {
    %c0_i32 = arith.constant 0 : i32
    %c0_i32_0 = arith.constant 0 : i32
    %c0_i32_1 = arith.constant 0 : i32
    return %c0_i32, %c0_i32_0 : i32, i32
  }
  func.func @transform_2(%arg0: i32) -> (i32, i32) {
    %c0_i32 = arith.constant 0 : i32
    %c0_i32_0 = arith.constant 0 : i32
    %c0_i32_1 = arith.constant 0 : i32
    return %c0_i32, %c0_i32_0 : i32, i32
  }
  func.func @transform_3(%arg0: i32) -> (i32, i32) {
    %c0_i32 = arith.constant 0 : i32
    %c0_i32_0 = arith.constant 0 : i32
    %c0_i32_1 = arith.constant 0 : i32
    return %c0_i32, %c0_i32_0 : i32, i32
  }
  func.func @transform_4(%arg0: i32) -> (i32, i32) {
    %c0_i32 = arith.constant 0 : i32
    %c0_i32_0 = arith.constant 0 : i32
    return %arg0, %c0_i32 : i32, i32
  }
  func.func @transform_5(%arg0: i32) -> (i32, i32) {
    %c0_i32 = arith.constant 0 : i32
    %c0_i32_0 = arith.constant 0 : i32
    %c0_i32_1 = arith.constant 0 : i32
    return %c0_i32, %c0_i32_0 : i32, i32
  }
  func.func @transform_6(%arg0: i32) -> (i32, i32) {
    %c0_i32 = arith.constant 0 : i32
    %c0_i32_0 = arith.constant 0 : i32
    %c0_i32_1 = arith.constant 0 : i32
    return %c0_i32, %c0_i32_0 : i32, i32
  }
  func.func @transform_7(%arg0: i32) -> (i32, i32) {
    %c0_i32 = arith.constant 0 : i32
    %c0_i32_0 = arith.constant 0 : i32
    %c0_i32_1 = arith.constant 0 : i32
    return %c0_i32, %c0_i32_0 : i32, i32
  }
  func.func @transform_8(%arg0: i32) -> (i32, i32) {
    %c0_i32 = arith.constant 0 : i32
    %c0_i32_0 = arith.constant 0 : i32
    return %arg0, %c0_i32 : i32, i32
  }
}

</mosaic_0001>

<llo_original>
// kernel: bottleneck_forward.5
$region0: #{bottleneck_forward.5}
  #allocation0 [shape = 'u32[]', space=smem, size = 0x4, offset = 0x4, fixed_abs, tag = 'smem constant byte address 0x4 - core index']
  #allocation1 [shape = 'u32[144,128]{1,0:T(1,128)}', space=vmem, size = 0x12000, scoped, tag = 'internal scratch']
  %s0 = inlined_call_operand.vmem [shape: bf16[128,8], index: 0, kind: input, shape index: {}]
  %s1 = inlined_call_operand.vmem [shape: bf16[8,32], index: 1, kind: input, shape index: {}]
  %s2 = inlined_call_operand.vmem [shape: f32[1,32], index: 2, kind: input, shape index: {}]
  %s3 = inlined_call_operand.vmem [shape: f32[1,32], index: 3, kind: input, shape index: {}]
  %s4 = inlined_call_operand.vmem [shape: bf16[128,16], index: 4, kind: input, shape index: {}]
  %s5 = inlined_call_operand.vmem [shape: bf16[16,32], index: 5, kind: input, shape index: {}]
  %s6 = inlined_call_operand.vmem [shape: f32[1,32], index: 6, kind: input, shape index: {}]
  %s7 = inlined_call_operand.vmem [shape: f32[1,32], index: 7, kind: input, shape index: {}]
  %s8 = inlined_call_operand.hbm [shape: f32[128,32], index: 8, kind: output, shape index: {}]
  %s9 = sld [smem:[#allocation0]]
  $region65: #{bottleneck_forward.5} parent=0
    _
  %s11 = ssub.s32 1, %s9
  %s12 = scalar_select 0, %s11, %s9
  $region1: #{bottleneck_forward.5} parent=0
    #allocation2 [shape = 'u8[65536]{0}', space=vmem, size = 0x10000, scoped, tag = 'output window, operand 0']
    #allocation3 [shape = 's32[2]{0}', space=sflag, size = 0x8, scoped, tag = 'scoped memory for bottleneck_forward.5']
    %13 = vsyncpa [#allocation3], 0
    %s14 = scalar_lea.sflag [#allocation3], 1
    %15 = vsyncpa %s14, 0
    loop: start=0, step=1, limit=4
    $region2: #{bottleneck_forward.5} parent=1 // loop_pre_header
      _
    $region3: #{bottleneck_forward.5} parent=1 // loop_header
      %s17 = sphi 0, %s21
      %p18 = scmp.ge.s32.totalorder %s17, 4
      %s27 = sphi 0, %s29
      %s30 = sphi 0, %s27
      %s31 = sphi 0, %s30
      %s47 = sphi 0, %s31
      %s51 = sphi 0, %s51
      %s53 = sphi 0, %s51
      %s54 = sphi 0, %s53
      %s68 = sphi 0, %s54
      %s72 = sphi 0, %s72
      %s74 = sphi 0, %s72
      %s75 = sphi 0, %s74
      %s89 = sphi 0, %s75
      %s93 = sphi 0, %s93
      %s95 = sphi 0, %s93
      %s96 = sphi 0, %s95
      %s110 = sphi 0, %s96
      %s116 = sphi 0, %s118
      %s119 = sphi 0, %s116
      %s120 = sphi 0, %s119
      %s136 = sphi 0, %s120
      %s140 = sphi 0, %s140
      %s142 = sphi 0, %s140
      %s143 = sphi 0, %s142
      %s157 = sphi 0, %s143
      %s161 = sphi 0, %s161
      %s163 = sphi 0, %s161
      %s164 = sphi 0, %s163
      %s178 = sphi 0, %s164
      %s182 = sphi 0, %s182
      %s184 = sphi 0, %s182
      %s185 = sphi 0, %s184
      %s199 = sphi 0, %s185
      %s205 = sphi 0, %s207
      %s208 = sphi 0, %s205
      %s209 = sphi 0, %s208
      %s225 = sphi 0, %s209
    $region4: #{bottleneck_forward.5} parent=1 // loop_header_branch
      %20 = sbr.rel (%p18) target = $region8
    $region5: #{bottleneck_forward.5} parent=1 // loop_body
      %s22 = ssub.s32 %s17, 1
      %s23 = ssub.s32 %s17, 2
      %s24 = sadd.s32 %s17, 1
      %s25 = ssub.s32 %s17, %s24
      %p26 = scmp.eq.s32.totalorder %s25, 0
      %s28 = sadd.s32 %s27, 1
      %s29 = scalar_select %p26, %s27, %s28
      %p32 = pneg %p26
      %p33 = scmp.eq.s32.totalorder %s17, 1
      %p34 = por %p32, %p33
      %p35 = scmp.ne.s32.totalorder %s27, %s30
      %p36 = scmp.eq.s32.totalorder %s17, 0
      %p37 = por %p35, %p36
      %p38 = scmp.ne.s32.totalorder %s27, %s30
      %p39 = scmp.eq.s32.totalorder %s22, 1
      %p40 = por %p38, %p39
      %p41 = scmp.ne.s32.totalorder %s30, %s31
      %p42 = scmp.eq.s32.totalorder %s22, 0
      %p43 = por %p41, %p42
      %p44 = scmp.ne.s32.totalorder %s30, %s31
      %p45 = scmp.eq.s32.totalorder %s23, 1
      %p46 = por %p44, %p45
      %p48 = scmp.ne.s32.totalorder %s31, %s47
      %p49 = scmp.eq.s32.totalorder %s23, 0
      %p50 = por %p48, %p49
      %s52 = sadd.s32 %s51, 1
      %p55 = scmp.eq.s32.totalorder %s17, 1
      %p56 = scmp.ne.s32.totalorder %s51, %s53
      %p57 = scmp.eq.s32.totalorder %s17, 0
      %p58 = por %p56, %p57
      %p59 = scmp.ne.s32.totalorder %s51, %s53
      %p60 = scmp.eq.s32.totalorder %s22, 1
      %p61 = por %p59, %p60
      %p62 = scmp.ne.s32.totalorder %s53, %s54
      %p63 = scmp.eq.s32.totalorder %s22, 0
      %p64 = por %p62, %p63
      %p65 = scmp.ne.s32.totalorder %s53, %s54
      %p66 = scmp.eq.s32.totalorder %s23, 1
      %p67 = por %p65, %p66
      %p69 = scmp.ne.s32.totalorder %s54, %s68
      %p70 = scmp.eq.s32.totalorder %s23, 0
      %p71 = por %p69, %p70
      %s73 = sadd.s32 %s72, 1
      %p76 = scmp.eq.s32.totalorder %s17, 1
      %p77 = scmp.ne.s32.totalorder %s72, %s74
      %p78 = scmp.eq.s32.totalorder %s17, 0
      %p79 = por %p77, %p78
      %p80 = scmp.ne.s32.totalorder %s72, %s74
      %p81 = scmp.eq.s32.totalorder %s22, 1
      %p82 = por %p80, %p81
      %p83 = scmp.ne.s32.totalorder %s74, %s75
      %p84 = scmp.eq.s32.totalorder %s22, 0
      %p85 = por %p83, %p84
      %p86 = scmp.ne.s32.totalorder %s74, %s75
      %p87 = scmp.eq.s32.totalorder %s23, 1
      %p88 = por %p86, %p87
      %p90 = scmp.ne.s32.totalorder %s75, %s89
      %p91 = scmp.eq.s32.totalorder %s23, 0
      %p92 = por %p90, %p91
      %s94 = sadd.s32 %s93, 1
      %p97 = scmp.eq.s32.totalorder %s17, 1
      %p98 = scmp.ne.s32.totalorder %s93, %s95
      %p99 = scmp.eq.s32.totalorder %s17, 0
      %p100 = por %p98, %p99
      %p101 = scmp.ne.s32.totalorder %s93, %s95
      %p102 = scmp.eq.s32.totalorder %s22, 1
      %p103 = por %p101, %p102
      %p104 = scmp.ne.s32.totalorder %s95, %s96
      %p105 = scmp.eq.s32.totalorder %s22, 0
      %p106 = por %p104, %p105
      %p107 = scmp.ne.s32.totalorder %s95, %s96
      %p108 = scmp.eq.s32.totalorder %s23, 1
      %p109 = por %p107, %p108
      %p111 = scmp.ne.s32.totalorder %s96, %s110
      %p112 = scmp.eq.s32.totalorder %s23, 0
      %p113 = por %p111, %p112
      %s114 = ssub.s32 %s17, %s24
      %p115 = scmp.eq.s32.totalorder %s114, 0
      %s117 = sadd.s32 %s116, 1
      %s118 = scalar_select %p115, %s116, %s117
      %p121 = pneg %p115
      %p122 = scmp.eq.s32.totalorder %s17, 1
      %p123 = por %p121, %p122
      %p124 = scmp.ne.s32.totalorder %s116, %s119
      %p125 = scmp.eq.s32.totalorder %s17, 0
      %p126 = por %p124, %p125
      %p127 = scmp.ne.s32.totalorder %s116, %s119
      %p128 = scmp.eq.s32.totalorder %s22, 1
      %p129 = por %p127, %p128
      %p130 = scmp.ne.s32.totalorder %s119, %s120
      %p131 = scmp.eq.s32.totalorder %s22, 0
      %p132 = por %p130, %p131
      %p133 = scmp.ne.s32.totalorder %s119, %s120
      %p134 = scmp.eq.s32.totalorder %s23, 1
      %p135 = por %p133, %p134
      %p137 = scmp.ne.s32.totalorder %s120, %s136
      %p138 = scmp.eq.s32.totalorder %s23, 0
      %p139 = por %p137, %p138
      %s141 = sadd.s32 %s140, 1
      %p144 = scmp.eq.s32.totalorder %s17, 1
      %p145 = scmp.ne.s32.totalorder %s140, %s142
      %p146 = scmp.eq.s32.totalorder %s17, 0
      %p147 = por %p145, %p146
      %p148 = scmp.ne.s32.totalorder %s140, %s142
      %p149 = scmp.eq.s32.totalorder %s22, 1
      %p150 = por %p148, %p149
      %p151 = scmp.ne.s32.totalorder %s142, %s143
      %p152 = scmp.eq.s32.totalorder %s22, 0
      %p153 = por %p151, %p152
      %p154 = scmp.ne.s32.totalorder %s142, %s143
      %p155 = scmp.eq.s32.totalorder %s23, 1
      %p156 = por %p154, %p155
      %p158 = scmp.ne.s32.totalorder %s143, %s157
      %p159 = scmp.eq.s32.totalorder %s23, 0
      %p160 = por %p158, %p159
      %s162 = sadd.s32 %s161, 1
      %p165 = scmp.eq.s32.totalorder %s17, 1
      %p166 = scmp.ne.s32.totalorder %s161, %s163
      %p167 = scmp.eq.s32.totalorder %s17, 0
      %p168 = por %p166, %p167
      %p169 = scmp.ne.s32.totalorder %s161, %s163
      %p170 = scmp.eq.s32.totalorder %s22, 1
      %p171 = por %p169, %p170
      %p172 = scmp.ne.s32.totalorder %s163, %s164
      %p173 = scmp.eq.s32.totalorder %s22, 0
      %p174 = por %p172, %p173
      %p175 = scmp.ne.s32.totalorder %s163, %s164
      %p176 = scmp.eq.s32.totalorder %s23, 1
      %p177 = por %p175, %p176
      %p179 = scmp.ne.s32.totalorder %s164, %s178
      %p180 = scmp.eq.s32.totalorder %s23, 0
      %p181 = por %p179, %p180
      %s183 = sadd.s32 %s182, 1
      %p186 = scmp.eq.s32.totalorder %s17, 1
      %p187 = scmp.ne.s32.totalorder %s182, %s184
      %p188 = scmp.eq.s32.totalorder %s17, 0
      %p189 = por %p187, %p188
      %p190 = scmp.ne.s32.totalorder %s182, %s184
      %p191 = scmp.eq.s32.totalorder %s22, 1
      %p192 = por %p190, %p191
      %p193 = scmp.ne.s32.totalorder %s184, %s185
      %p194 = scmp.eq.s32.totalorder %s22, 0
      %p195 = por %p193, %p194
      %p196 = scmp.ne.s32.totalorder %s184, %s185
      %p197 = scmp.eq.s32.totalorder %s23, 1
      %p198 = por %p196, %p197
      %p200 = scmp.ne.s32.totalorder %s185, %s199
      %p201 = scmp.eq.s32.totalorder %s23, 0
      %p202 = por %p200, %p201
      %s203 = ssub.s32 %s17, %s24
      %p204 = scmp.eq.s32.totalorder %s203, 0
      %s206 = sadd.s32 %s205, 1
      %s207 = scalar_select %p204, %s205, %s206
      %p210 = pneg %p204
      %p211 = scmp.eq.s32.totalorder %s17, 1
      %p212 = por %p210, %p211
      %p213 = scmp.ne.s32.totalorder %s205, %s208
      %p214 = scmp.eq.s32.totalorder %s17, 0
      %p215 = por %p213, %p214
      %p216 = scmp.ne.s32.totalorder %s205, %s208
      %p217 = scmp.eq.s32.totalorder %s22, 1
      %p218 = por %p216, %p217
      %p219 = scmp.ne.s32.totalorder %s208, %s209
      %p220 = scmp.eq.s32.totalorder %s22, 0
      %p221 = por %p219, %p220
      %p222 = scmp.ne.s32.totalorder %s208, %s209
      %p223 = scmp.eq.s32.totalorder %s23, 1
      %p224 = por %p222, %p223
      %p226 = scmp.ne.s32.totalorder %s209, %s225
      %p227 = scmp.eq.s32.totalorder %s23, 0
      %p228 = por %p226, %p227
      %p229 = scmp.le.s32.totalorder 1, %s17
      %p230 = scmp.lt.s32.totalorder %s17, 3
      %p231 = pnand %p229, %p230
      %p232 = pneg %p231
      // Predicated region
      $region9: #{bottleneck_forward.5} parent=5 // pred_check
        _
      $region10: #{bottleneck_forward.5} parent=5 // pred_check_branch
        %234 = sbr.rel (%p231) target = $region12
      $region11: #{bottleneck_forward.5} parent=5 // pred_region
        %s235 = ssub.s32 %s17, 1
        // Predicated region
        $region13: #{bottleneck_forward.5} parent=11 // pred_check
          %p236 = pneg %p64
        $region14: #{bottleneck_forward.5} parent=11 // pred_check_branch
          %238 = sbr.rel (%p236) target = $region16
        $region15: #{bottleneck_forward.5} parent=11 // pred_region
          _
        $region16: #{bottleneck_forward.5} parent=11 // pred_fallthru
          _
        // Predicated region
        $region17: #{bottleneck_forward.5} parent=11 // pred_check
          %p239 = pneg %p85
        $region18: #{bottleneck_forward.5} parent=11 // pred_check_branch
          %241 = sbr.rel (%p239) target = $region20
        $region19: #{bottleneck_forward.5} parent=11 // pred_region
          _
        $region20: #{bottleneck_forward.5} parent=11 // pred_fallthru
          _
        // Predicated region
        $region21: #{bottleneck_forward.5} parent=11 // pred_check
          %p242 = pneg %p106
        $region22: #{bottleneck_forward.5} parent=11 // pred_check_branch
          %244 = sbr.rel (%p242) target = $region24
        $region23: #{bottleneck_forward.5} parent=11 // pred_region
          _
        $region24: #{bottleneck_forward.5} parent=11 // pred_fallthru
          _
        // Predicated region
        $region25: #{bottleneck_forward.5} parent=11 // pred_check
          %p245 = pneg %p153
        $region26: #{bottleneck_forward.5} parent=11 // pred_check_branch
          %247 = sbr.rel (%p245) target = $region28
        $region27: #{bottleneck_forward.5} parent=11 // pred_region
          _
        $region28: #{bottleneck_forward.5} parent=11 // pred_fallthru
          _
        // Predicated region
        $region29: #{bottleneck_forward.5} parent=11 // pred_check
          %p248 = pneg %p174
        $region30: #{bottleneck_forward.5} parent=11 // pred_check_branch
          %250 = sbr.rel (%p248) target = $region32
        $region31: #{bottleneck_forward.5} parent=11 // pred_region
          _
        $region32: #{bottleneck_forward.5} parent=11 // pred_fallthru
          _
        // Predicated region
        $region33: #{bottleneck_forward.5} parent=11 // pred_check
          %p251 = pneg %p195
        $region34: #{bottleneck_forward.5} parent=11 // pred_check_branch
          %253 = sbr.rel (%p251) target = $region36
        $region35: #{bottleneck_forward.5} parent=11 // pred_region
          _
        $region36: #{bottleneck_forward.5} parent=11 // pred_fallthru
          _
      $region12: #{bottleneck_forward.5} parent=5 // pred_fallthru
        _
      %p254 = scmp.lt.s32.totalorder %s17, 2
      // Predicated region
      $region37: #{bottleneck_forward.5} parent=5 // pred_check
        %p255 = pneg %p254
      $region38: #{bottleneck_forward.5} parent=5 // pred_check_branch
        %257 = sbr.rel (%p255) target = $region40
      $region39: #{bottleneck_forward.5} parent=5 // pred_region
        // Predicated region
        $region41: #{bottleneck_forward.5} parent=39 // pred_check
          %p258 = pneg %p37
        $region42: #{bottleneck_forward.5} parent=39 // pred_check_branch
          %260 = sbr.rel (%p258) target = $region44
        $region43: #{bottleneck_forward.5} parent=39 // pred_region
          %s261 = smul.u32 8, %s17
          %p262 = scmp.lt.s32.totalorder %s261, 15
          %s263 = scalar_select %p262, %s261, 15
          %s264 = smul.addr %s263, 4
          %s265 = scalar_lea.vmem %s0, %s264
          %s266 = smul.u32 8, %s17
        $region44: #{bottleneck_forward.5} parent=39 // pred_fallthru
          _
        // Predicated region
        $region45: #{bottleneck_forward.5} parent=39 // pred_check
          %p267 = pneg %p126
        $region46: #{bottleneck_forward.5} parent=39 // pred_check_branch
          %269 = sbr.rel (%p267) target = $region48
        $region47: #{bottleneck_forward.5} parent=39 // pred_region
          %s270 = smul.u32 8, %s17
          %p271 = scmp.lt.s32.totalorder %s270, 15
          %s272 = scalar_select %p271, %s270, 15
          %s273 = smul.addr %s272, 4
          %s274 = scalar_lea.vmem %s4, %s273
          %s275 = smul.u32 8, %s17
        $region48: #{bottleneck_forward.5} parent=39 // pred_fallthru
          _
      $region40: #{bottleneck_forward.5} parent=5 // pred_fallthru
        _
      %p276 = scmp.le.s32.totalorder 1, %s17
      %p277 = scmp.lt.s32.totalorder %s17, 3
      %p278 = pnand %p276, %p277
      %p279 = pneg %p278
      // Predicated region
      $region49: #{bottleneck_forward.5} parent=5 // pred_check
        _
      $region50: #{bottleneck_forward.5} parent=5 // pred_check_branch
        %281 = sbr.rel (%p278) target = $region52
      $region51: #{bottleneck_forward.5} parent=5 // pred_region
        %s282 = ssub.s32 %s17, 1
        %s283 = smul.u32 8, %s22
        %p284 = scmp.lt.s32.totalorder %s283, 15
        %s285 = scalar_select %p284, %s283, 15
        %s286 = smul.addr %s285, 4
        %s287 = scalar_lea.vmem %s0, %s286
        %p288 = pneg %p43
        %p289 = pneg %p40
        %p290 = pneg %p64
        %p291 = pneg %p61
        %p292 = pneg %p85
        %p293 = pneg %p82
        %p294 = pneg %p106
        %p295 = pneg %p103
        %s296 = smul.u32 8, %s22
        %p297 = scmp.lt.s32.totalorder %s296, 15
        %s298 = scalar_select %p297, %s296, 15
        %s299 = smul.addr %s298, 4
        %s300 = scalar_lea.vmem %s4, %s299
        %p301 = pneg %p132
        %p302 = pneg %p129
        %p303 = pneg %p153
        %p304 = pneg %p150
        %p305 = pneg %p174
        %p306 = pneg %p171
        %p307 = pneg %p195
        %p308 = pneg %p192
        %p309 = pneg %p221
        %p310 = pneg %p218
        %s311 = sand.u32 %s208, 1
        %s312 = scalar_lea.sflag [#allocation3], %s311
        %s313 = sand.u32 %s208, 1
        %s314 = smul.addr %s313, 64
        %s315 = scalar_lea.vmem [#allocation2], %s314
        %s316 = smul.u32 8, %s22
        %p317 = scmp.lt.s32.totalorder %s316, 15
        %s318 = scalar_select %p317, %s316, 15
        %s319 = smul.addr %s318, 4
        %s320 = scalar_lea.vmem %s0, %s319
        %s321 = smul.u32 8, %s22
        %s322 = smul.u32 8, %s22
        %p323 = scmp.lt.s32.totalorder %s322, 15
        %s324 = scalar_select %p323, %s322, 15
        %s325 = smul.addr %s324, 4
        %s326 = scalar_lea.vmem %s4, %s325
        %s327 = smul.u32 8, %s22
        %s328 = smul.u32 8, %s22
        %v330 = vld [vmem:[%s320] sm:$0xf]
        %v331 = vld [vmem:[%s320 + $0x4] sm:$0xf]
        %v332 = vld [vmem:[%s320 + $0x8] sm:$0xf]
        %v333 = vld [vmem:[%s320 + $0xc] sm:$0xf]
        %v334 = vld [vmem:[%s320 + $0x10] sm:$0xf]
        %v335 = vld [vmem:[%s320 + $0x14] sm:$0xf]
        %v336 = vld [vmem:[%s320 + $0x18] sm:$0xf]
        %v337 = vld [vmem:[%s320 + $0x1c] sm:$0xf]
        %v338 = vld [vmem:[%s1] sm:$0xf]
        %v347 = vunpack.c.l.b16 %v330
        %v348 = vunpack.c.l.b16 %v331
        %v349 = vunpack.c.l.b16 %v332
        %v350 = vunpack.c.l.b16 %v333
        %v351 = vunpack.c.l.b16 %v334
        %v352 = vunpack.c.l.b16 %v335
        %v353 = vunpack.c.l.b16 %v336
        %v354 = vunpack.c.l.b16 %v337
        %v355 = vpack.c.b16 %v348, %v347
        %v356 = vpack.c.b16 %v350, %v349
        %v357 = vpack.c.b16 %v352, %v351
        %v358 = vpack.c.b16 %v354, %v353
        %vm359 = vcmask 64512
        %v361 = vsel %vm359, %v355, 0
        %v364 = vsel %vm359, %v356, 0
        %v367 = vsel %vm359, %v357, 0
        %v370 = vsel %vm359, %v358, 0
        %vm372 = vcmask 1043456
        %v374 = vsel %vm372, %v338, 0
        %376 = vmatprep.subr.bf16.mxu0 0
        %377 = vmatpush1.bf16.msra.mxu0 0
        %378 = vmatprep.subr.bf16.mxu0 0
        %379 = vmatpush1.bf16.msra.mxu0 0
        %380 = vmatprep.subr.bf16.mxu0 0
        %381 = vmatpush1.bf16.msra.mxu0 0
        %382 = vmatprep.subr.bf16.mxu0 0
        %383 = vmatpush1.bf16.msra.mxu0 0
        %384 = vmatprep.subr.bf16.mxu0 0
        %385 = vmatpush1.bf16.msra.mxu0 0
        %386 = vmatprep.subr.bf16.mxu0 0
        %387 = vmatpush1.bf16.msra.mxu0 0
        %388 = vmatprep.subr.bf16.mxu0 0
        %389 = vmatpush1.bf16.msra.mxu0 0
        %390 = vmatprep.subr.bf16.mxu0 0
        %391 = vmatpush1.bf16.msra.mxu0 %v374
        %392 = vmatprep.subr.bf16.mxu0 0
        %393 = vmatpush2.bf16.msra.mxu0 0
        %394 = vmatprep.subr.bf16.mxu0 0
        %395 = vmatpush2.bf16.msra.mxu0 0
        %396 = vmatprep.subr.bf16.mxu0 0
        %397 = vmatpush2.bf16.msra.mxu0 0
        %398 = vmatprep.subr.bf16.mxu0 0
        %399 = vmatpush2.bf16.msra.mxu0 0
        %400 = vmatprep.subr.bf16.mxu0 0
        %401 = vmatpush2.bf16.msra.mxu0 0
        %402 = vmatprep.subr.bf16.mxu0 0
        %403 = vmatpush2.bf16.msra.mxu0 0
        %404 = vmatprep.subr.bf16.mxu0 0
        %405 = vmatpush2.bf16.msra.mxu0 0
        %406 = vmatprep.subr.bf16.mxu0 0
        %407 = vmatpush2.bf16.msra.mxu0 0
        %408 = vmatprep.mubr.bf16.mxu0 0
        %409 = vmatmul.mubr.bf16.gmra.mxu0 %v361
        %v410 = vpop.f32.mrf.mxu0
        %v411 = vadd.f32 0.0, %v410
        %v412 = vpop.f32.mrf.mxu0
        %v413 = vpop.f32.mrf.mxu0
        %v414 = vadd.f32 0.0, %v413
        %v415 = vpop.f32.mrf.mxu0
        %416 = vmatprep.mubr.bf16.mxu0 0
        %417 = vmatmul.mubr.bf16.gmra.mxu0 %v364
        %v418 = vpop.f32.mrf.mxu0
        %v419 = vadd.f32 0.0, %v418
        %v420 = vpop.f32.mrf.mxu0
        %v421 = vpop.f32.mrf.mxu0
        %v422 = vadd.f32 0.0, %v421
        %v423 = vpop.f32.mrf.mxu0
        %424 = vmatprep.mubr.bf16.mxu0 0
        %425 = vmatmul.mubr.bf16.gmra.mxu0 %v367
        %v426 = vpop.f32.mrf.mxu0
        %v427 = vadd.f32 0.0, %v426
        %v428 = vpop.f32.mrf.mxu0
        %v429 = vpop.f32.mrf.mxu0
        %v430 = vadd.f32 0.0, %v429
        %v431 = vpop.f32.mrf.mxu0
        %432 = vmatprep.mubr.bf16.mxu0 0
        %433 = vmatmul.mubr.bf16.gmra.mxu0 %v370
        %v434 = vpop.f32.mrf.mxu0
        %v435 = vadd.f32 0.0, %v434
        %v436 = vpop.f32.mrf.mxu0
        %v437 = vpop.f32.mrf.mxu0
        %v438 = vadd.f32 0.0, %v437
        %v439 = vpop.f32.mrf.mxu0
        %440 = vdwg.mxu0
        %v441 = vld [vmem:[%s2] sm:$0x1]
        %v443 = vlaneseq
        %v444 = vshrl.u32 %v443, 7
        %v445 = vsub.s32 0, %v444
        %v446 = vrot.slane %v441, %v445
        %v448 = vmul.f32 %v411, %v446
        %v449 = vmul.f32 %v414, %v446
        %v450 = vmul.f32 %v419, %v446
        %v451 = vmul.f32 %v422, %v446
        %v452 = vmul.f32 %v427, %v446
        %v453 = vmul.f32 %v430, %v446
        %v454 = vmul.f32 %v435, %v446
        %v455 = vmul.f32 %v438, %v446
        %v456 = vld [vmem:[%s3] sm:$0x1]
        %v458 = vlaneseq
        %v459 = vshrl.u32 %v458, 7
        %v460 = vsub.s32 0, %v459
        %v461 = vrot.slane %v456, %v460
        %v463 = vadd.f32 %v448, %v461
        %v464 = vadd.f32 %v449, %v461
        %v465 = vadd.f32 %v450, %v461
        %v466 = vadd.f32 %v451, %v461
        %v467 = vadd.f32 %v452, %v461
        %v468 = vadd.f32 %v453, %v461
        %v469 = vadd.f32 %v454, %v461
        %v470 = vadd.f32 %v455, %v461
        %v471 = vld [vmem:[%s326] sm:$0xf]
        %v472 = vld [vmem:[%s326 + $0x4] sm:$0xf]
        %v473 = vld [vmem:[%s326 + $0x8] sm:$0xf]
        %v474 = vld [vmem:[%s326 + $0xc] sm:$0xf]
        %v475 = vld [vmem:[%s326 + $0x10] sm:$0xf]
        %v476 = vld [vmem:[%s326 + $0x14] sm:$0xf]
        %v477 = vld [vmem:[%s326 + $0x18] sm:$0xf]
        %v478 = vld [vmem:[%s326 + $0x1c] sm:$0xf]
        %v479 = vld [vmem:[%s5] sm:$0xf]
        %v480 = vld [vmem:[%s5 + $0x4] sm:$0xf]
        %v489 = vunpack.c.l.b16 %v471
        %v490 = vunpack.c.l.b16 %v472
        %v491 = vunpack.c.l.b16 %v473
        %v492 = vunpack.c.l.b16 %v474
        %v493 = vunpack.c.l.b16 %v475
        %v494 = vunpack.c.l.b16 %v476
        %v495 = vunpack.c.l.b16 %v477
        %v496 = vunpack.c.l.b16 %v478
        %v497 = vpack.c.b16 %v490, %v489
        %v498 = vpack.c.b16 %v492, %v491
        %v499 = vpack.c.b16 %v494, %v493
        %v500 = vpack.c.b16 %v496, %v495
        %v503 = vunpack.c.l.b16 %v479
        %v504 = vunpack.c.l.b16 %v480
        %v505 = vpack.c.b16 %v504, %v503
        %vm507 = vcmask 130048
        %v509 = vsel %vm507, %v497, 0
        %v512 = vsel %vm507, %v498, 0
        %v515 = vsel %vm507, %v499, 0
        %v518 = vsel %vm507, %v500, 0
        %520 = vmatprep.subr.bf16.mxu0 0
        %521 = vmatpush1.bf16.msra.mxu0 0
        %522 = vmatprep.subr.bf16.mxu0 0
        %523 = vmatpush1.bf16.msra.mxu0 0
        %524 = vmatprep.subr.bf16.mxu0 0
        %525 = vmatpush1.bf16.msra.mxu0 0
        %526 = vmatprep.subr.bf16.mxu0 0
        %527 = vmatpush1.bf16.msra.mxu0 0
        %528 = vmatprep.subr.bf16.mxu0 0
        %529 = vmatpush1.bf16.msra.mxu0 0
        %530 = vmatprep.subr.bf16.mxu0 0
        %531 = vmatpush1.bf16.msra.mxu0 0
        %532 = vmatprep.subr.bf16.mxu0 0
        %533 = vmatpush1.bf16.msra.mxu0 0
        %534 = vmatprep.subr.bf16.mxu0 0
        %535 = vmatpush1.bf16.msra.mxu0 %v505
        %536 = vmatprep.subr.bf16.mxu0 0
        %537 = vmatpush2.bf16.msra.mxu0 0
        %538 = vmatprep.subr.bf16.mxu0 0
        %539 = vmatpush2.bf16.msra.mxu0 0
        %540 = vmatprep.subr.bf16.mxu0 0
        %541 = vmatpush2.bf16.msra.mxu0 0
        %542 = vmatprep.subr.bf16.mxu0 0
        %543 = vmatpush2.bf16.msra.mxu0 0
        %544 = vmatprep.subr.bf16.mxu0 0
        %545 = vmatpush2.bf16.msra.mxu0 0
        %546 = vmatprep.subr.bf16.mxu0 0
        %547 = vmatpush2.bf16.msra.mxu0 0
        %548 = vmatprep.subr.bf16.mxu0 0
        %549 = vmatpush2.bf16.msra.mxu0 0
        %550 = vmatprep.subr.bf16.mxu0 0
        %551 = vmatpush2.bf16.msra.mxu0 0
        %552 = vmatprep.mubr.bf16.mxu0 0
        %553 = vmatmul.mubr.bf16.gmra.mxu0 %v509
        %v554 = vpop.f32.mrf.mxu0
        %v555 = vadd.f32 0.0, %v554
        %v556 = vpop.f32.mrf.mxu0
        %v557 = vpop.f32.mrf.mxu0
        %v558 = vadd.f32 0.0, %v557
        %v559 = vpop.f32.mrf.mxu0
        %560 = vmatprep.mubr.bf16.mxu0 0
        %561 = vmatmul.mubr.bf16.gmra.mxu0 %v512
        %v562 = vpop.f32.mrf.mxu0
        %v563 = vadd.f32 0.0, %v562
        %v564 = vpop.f32.mrf.mxu0
        %v565 = vpop.f32.mrf.mxu0
        %v566 = vadd.f32 0.0, %v565
        %v567 = vpop.f32.mrf.mxu0
        %568 = vmatprep.mubr.bf16.mxu0 0
        %569 = vmatmul.mubr.bf16.gmra.mxu0 %v515
        %v570 = vpop.f32.mrf.mxu0
        %v571 = vadd.f32 0.0, %v570
        %v572 = vpop.f32.mrf.mxu0
        %v573 = vpop.f32.mrf.mxu0
        %v574 = vadd.f32 0.0, %v573
        %v575 = vpop.f32.mrf.mxu0
        %576 = vmatprep.mubr.bf16.mxu0 0
        %577 = vmatmul.mubr.bf16.gmra.mxu0 %v518
        %v578 = vpop.f32.mrf.mxu0
        %v579 = vadd.f32 0.0, %v578
        %v580 = vpop.f32.mrf.mxu0
        %v581 = vpop.f32.mrf.mxu0
        %v582 = vadd.f32 0.0, %v581
        %v583 = vpop.f32.mrf.mxu0
        %584 = vdwg.mxu0
        %v585 = vld [vmem:[%s6] sm:$0x1]
        %v587 = vlaneseq
        %v588 = vshrl.u32 %v587, 7
        %v589 = vsub.s32 0, %v588
        %v590 = vrot.slane %v585, %v589
        %v592 = vmul.f32 %v555, %v590
        %v593 = vmul.f32 %v558, %v590
        %v594 = vmul.f32 %v563, %v590
        %v595 = vmul.f32 %v566, %v590
        %v596 = vmul.f32 %v571, %v590
        %v597 = vmul.f32 %v574, %v590
        %v598 = vmul.f32 %v579, %v590
        %v599 = vmul.f32 %v582, %v590
        %v600 = vadd.f32 %v463, %v592
        %v601 = vadd.f32 %v464, %v593
        %v602 = vadd.f32 %v465, %v594
        %v603 = vadd.f32 %v466, %v595
        %v604 = vadd.f32 %v467, %v596
        %v605 = vadd.f32 %v468, %v597
        %v606 = vadd.f32 %v469, %v598
        %v607 = vadd.f32 %v470, %v599
        %v608 = vld [vmem:[%s7] sm:$0x1]
        %v610 = vlaneseq
        %v611 = vshrl.u32 %v610, 7
        %v612 = vsub.s32 0, %v611
        %v613 = vrot.slane %v608, %v612
        %v615 = vadd.f32 %v600, %v613
        %v616 = vadd.f32 %v601, %v613
        %v617 = vadd.f32 %v602, %v613
        %v618 = vadd.f32 %v603, %v613
        %v619 = vadd.f32 %v604, %v613
        %v620 = vadd.f32 %v605, %v613
        %v621 = vadd.f32 %v606, %v613
        %v622 = vadd.f32 %v607, %v613
        %v623 = vmax.f32 %v615, 0.0
        %v624 = vmax.f32 %v616, 0.0
        %v625 = vmax.f32 %v617, 0.0
        %v626 = vmax.f32 %v618, 0.0
        %v627 = vmax.f32 %v619, 0.0
        %v628 = vmax.f32 %v620, 0.0
        %v629 = vmax.f32 %v621, 0.0
        %v630 = vmax.f32 %v622, 0.0
        %vm631 = vcmask 261120
        %632 = vst.msk [vmem:[%s315] sm:$0xff] %vm631, %v623
        %633 = vst.msk [vmem:[%s315 + $0x8] sm:$0xff] %vm631, %v624
        %634 = vst.msk [vmem:[%s315 + $0x10] sm:$0xff] %vm631, %v625
        %635 = vst.msk [vmem:[%s315 + $0x18] sm:$0xff] %vm631, %v626
        %636 = vst.msk [vmem:[%s315 + $0x20] sm:$0xff] %vm631, %v627
        %637 = vst.msk [vmem:[%s315 + $0x28] sm:$0xff] %vm631, %v628
        %638 = vst.msk [vmem:[%s315 + $0x30] sm:$0xff] %vm631, %v629
        %639 = vst.msk [vmem:[%s315 + $0x38] sm:$0xff] %vm631, %v630
        %s640 = sand.u32 %s208, 1
        %s641 = scalar_lea.sflag [#allocation3], %s640
        %s642 = sand.u32 %s208, 1
        %s643 = smul.addr %s642, 64
        %s644 = scalar_lea.vmem [#allocation2], %s643
        // Predicated region
        $region53: #{bottleneck_forward.5} parent=51 // pred_check
          %p645 = pneg %p218
        $region54: #{bottleneck_forward.5} parent=51 // pred_check_branch
          %647 = sbr.rel (%p645) target = $region56
        $region55: #{bottleneck_forward.5} parent=51 // pred_region
          %s648 = smul.u32 8, %s22
          %s650 = ssub.s32 1024, 1024
          %651 = vsyncadd %s641, %s650
          %s652 = smul.addr %s648, 128
          %s653 = scalar_lea.hbm %s8, %s652
          %s654 = sshll.u32 %s644, 4
          %s655 = int_to_ptr.vmem [resolvable:$true] %s654
          %660 = dma.vmem_to_hbm [thread:$0]  %s655, 1024, %s653, %s641, 128, 128, 8
        $region56: #{bottleneck_forward.5} parent=51 // pred_fallthru
          _
      $region52: #{bottleneck_forward.5} parent=5 // pred_fallthru
        _
      %p661 = scmp.le.s32.totalorder 2, %s17
      // Predicated region
      $region57: #{bottleneck_forward.5} parent=5 // pred_check
        %p662 = pneg %p661
      $region58: #{bottleneck_forward.5} parent=5 // pred_check_branch
        %664 = sbr.rel (%p662) target = $region60
      $region59: #{bottleneck_forward.5} parent=5 // pred_region
        %s665 = ssub.s32 %s17, 2
        // Predicated region
        $region61: #{bottleneck_forward.5} parent=59 // pred_check
          %p666 = pneg %p224
        $region62: #{bottleneck_forward.5} parent=59 // pred_check_branch
          %668 = sbr.rel (%p666) target = $region64
        $region63: #{bottleneck_forward.5} parent=59 // pred_region
          %s669 = sand.u32 %s209, 1
          %s670 = scalar_lea.sflag [#allocation3], %s669
          %s671 = sand.u32 %s209, 1
          %s672 = smul.addr %s671, 64
          %s673 = scalar_lea.vmem [#allocation2], %s672
          %674 = dma.done %s670, 1024
        $region64: #{bottleneck_forward.5} parent=59 // pred_fallthru
          _
      $region60: #{bottleneck_forward.5} parent=5 // pred_fallthru
        _
    $region6: #{bottleneck_forward.5} parent=1 // loop_footer
      %s21 = sadd.s32 1, %s17
    $region7: #{bottleneck_forward.5} parent=1 // loop_footer_branch
      %16 = sbr.rel target = $region3
    $region8: #{bottleneck_forward.5} parent=1 // loop_exit
      _
    %675 = vsyncpa [#allocation3], 1
    %s676 = scalar_lea.sflag [#allocation3], 1
    %677 = vsyncpa %s676, 1

// kernel: bottleneck_forward.3
$region0: #{bottleneck_forward.3}
  #allocation0 [shape = 'u32[]', space=smem, size = 0x4, offset = 0x4, fixed_abs, tag = 'smem constant byte address 0x4 - core index']
  #allocation1 [shape = 'u32[144,128]{1,0:T(1,128)}', space=vmem, size = 0x12000, scoped, tag = 'internal scratch']
  #allocation2 [shape = 'f32[256,8]{1,0:T(8,128)}', space=vmem, size = 0x20000, scoped, tag = 'scratch operand']
  %s0 = inlined_call_operand.vmem [shape: bf16[512,16], index: 0, kind: input, shape index: {}]
  %s1 = inlined_call_operand.vmem [shape: bf16[16,8], index: 1, kind: input, shape index: {}]
  %s2 = inlined_call_operand.vmem [shape: f32[1,8], index: 2, kind: input, shape index: {}]
  %s3 = inlined_call_operand.vmem [shape: f32[1,8], index: 3, kind: input, shape index: {}]
  %s4 = inlined_call_operand.vmem [shape: bf16[512,8], index: 4, kind: output, shape index: {}]
  %s5 = sld [smem:[#allocation0]]
  $region57: #{bottleneck_forward.3} parent=0
    _
  %s7 = ssub.s32 1, %s5
  %s8 = scalar_select 0, %s7, %s5
  loop: start=0, step=1, limit=4
  $region2: #{bottleneck_forward.3} parent=0 // loop_pre_header
    _
  $region3: #{bottleneck_forward.3} parent=0 // loop_header
    %s10 = sphi 0, %s14
    %p11 = scmp.ge.s32.totalorder %s10, 4
    %s17 = sphi 0, %s29
    %s18 = sphi 0, %s25
    %s19 = sphi 0, %s17
    %s20 = sphi 0, %s18
    %s21 = sphi 0, %s19
    %s22 = sphi 0, %s20
    %s34 = sphi 0, %s36
    %s37 = sphi 0, %s34
    %s38 = sphi 0, %s37
    %s54 = sphi 0, %s38
    %s60 = sphi 0, %s62
    %s63 = sphi 0, %s60
    %s64 = sphi 0, %s63
    %s80 = sphi 0, %s64
    %s84 = sphi 0, %s84
    %s86 = sphi 0, %s84
    %s87 = sphi 0, %s86
    %s101 = sphi 0, %s87
    %s105 = sphi 0, %s105
    %s107 = sphi 0, %s105
    %s108 = sphi 0, %s107
    %s122 = sphi 0, %s108
    %s128 = sphi 0, %s130
    %s131 = sphi 0, %s128
    %s132 = sphi 0, %s131
    %s148 = sphi 0, %s132
  $region4: #{bottleneck_forward.3} parent=0 // loop_header_branch
    %13 = sbr.rel (%p11) target = $region8
  $region5: #{bottleneck_forward.3} parent=0 // loop_body
    %s15 = ssub.s32 %s10, 1
    %s16 = ssub.s32 %s10, 2
    %s23 = sadd.s32 1, %s18
    %p24 = scmp.ge.s32.totalorder %s23, 1
    %s25 = scalar_select %p24, 0, %s23
    %s26 = sadd.s32 1, %s17
    %s27 = scalar_select %p24, %s26, %s17
    %p28 = scmp.ge.s32.totalorder %s27, 2
    %s29 = scalar_select %p28, 0, %s27
    %s30 = ssub.s32 %s17, %s29
    %s31 = ssub.s32 %s18, %s25
    %s32 = sor.u32 %s30, %s31
    %p33 = scmp.eq.s32.totalorder %s32, 0
    %s35 = sadd.s32 %s34, 1
    %s36 = scalar_select %p33, %s34, %s35
    %p39 = pneg %p33
    %p40 = scmp.eq.s32.totalorder %s10, 1
    %p41 = por %p39, %p40
    %p42 = scmp.ne.s32.totalorder %s34, %s37
    %p43 = scmp.eq.s32.totalorder %s10, 0
    %p44 = por %p42, %p43
    %p45 = scmp.ne.s32.totalorder %s34, %s37
    %p46 = scmp.eq.s32.totalorder %s15, 1
    %p47 = por %p45, %p46
    %p48 = scmp.ne.s32.totalorder %s37, %s38
    %p49 = scmp.eq.s32.totalorder %s15, 0
    %p50 = por %p48, %p49
    %p51 = scmp.ne.s32.totalorder %s37, %s38
    %p52 = scmp.eq.s32.totalorder %s16, 1
    %p53 = por %p51, %p52
    %p55 = scmp.ne.s32.totalorder %s38, %s54
    %p56 = scmp.eq.s32.totalorder %s16, 0
    %p57 = por %p55, %p56
    %s58 = ssub.s32 %s18, %s25
    %p59 = scmp.eq.s32.totalorder %s58, 0
    %s61 = sadd.s32 %s60, 1
    %s62 = scalar_select %p59, %s60, %s61
    %p65 = pneg %p59
    %p66 = scmp.eq.s32.totalorder %s10, 1
    %p67 = por %p65, %p66
    %p68 = scmp.ne.s32.totalorder %s60, %s63
    %p69 = scmp.eq.s32.totalorder %s10, 0
    %p70 = por %p68, %p69
    %p71 = scmp.ne.s32.totalorder %s60, %s63
    %p72 = scmp.eq.s32.totalorder %s15, 1
    %p73 = por %p71, %p72
    %p74 = scmp.ne.s32.totalorder %s63, %s64
    %p75 = scmp.eq.s32.totalorder %s15, 0
    %p76 = por %p74, %p75
    %p77 = scmp.ne.s32.totalorder %s63, %s64
    %p78 = scmp.eq.s32.totalorder %s16, 1
    %p79 = por %p77, %p78
    %p81 = scmp.ne.s32.totalorder %s64, %s80
    %p82 = scmp.eq.s32.totalorder %s16, 0
    %p83 = por %p81, %p82
    %s85 = sadd.s32 %s84, 1
    %p88 = scmp.eq.s32.totalorder %s10, 1
    %p89 = scmp.ne.s32.totalorder %s84, %s86
    %p90 = scmp.eq.s32.totalorder %s10, 0
    %p91 = por %p89, %p90
    %p92 = scmp.ne.s32.totalorder %s84, %s86
    %p93 = scmp.eq.s32.totalorder %s15, 1
    %p94 = por %p92, %p93
    %p95 = scmp.ne.s32.totalorder %s86, %s87
    %p96 = scmp.eq.s32.totalorder %s15, 0
    %p97 = por %p95, %p96
    %p98 = scmp.ne.s32.totalorder %s86, %s87
    %p99 = scmp.eq.s32.totalorder %s16, 1
    %p100 = por %p98, %p99
    %p102 = scmp.ne.s32.totalorder %s87, %s101
    %p103 = scmp.eq.s32.totalorder %s16, 0
    %p104 = por %p102, %p103
    %s106 = sadd.s32 %s105, 1
    %p109 = scmp.eq.s32.totalorder %s10, 1
    %p110 = scmp.ne.s32.totalorder %s105, %s107
    %p111 = scmp.eq.s32.totalorder %s10, 0
    %p112 = por %p110, %p111
    %p113 = scmp.ne.s32.totalorder %s105, %s107
    %p114 = scmp.eq.s32.totalorder %s15, 1
    %p115 = por %p113, %p114
    %p116 = scmp.ne.s32.totalorder %s107, %s108
    %p117 = scmp.eq.s32.totalorder %s15, 0
    %p118 = por %p116, %p117
    %p119 = scmp.ne.s32.totalorder %s107, %s108
    %p120 = scmp.eq.s32.totalorder %s16, 1
    %p121 = por %p119, %p120
    %p123 = scmp.ne.s32.totalorder %s108, %s122
    %p124 = scmp.eq.s32.totalorder %s16, 0
    %p125 = por %p123, %p124
    %s126 = ssub.s32 %s17, %s29
    %p127 = scmp.eq.s32.totalorder %s126, 0
    %s129 = sadd.s32 %s128, 1
    %s130 = scalar_select %p127, %s128, %s129
    %p133 = pneg %p127
    %p134 = scmp.eq.s32.totalorder %s10, 1
    %p135 = por %p133, %p134
    %p136 = scmp.ne.s32.totalorder %s128, %s131
    %p137 = scmp.eq.s32.totalorder %s10, 0
    %p138 = por %p136, %p137
    %p139 = scmp.ne.s32.totalorder %s128, %s131
    %p140 = scmp.eq.s32.totalorder %s15, 1
    %p141 = por %p139, %p140
    %p142 = scmp.ne.s32.totalorder %s131, %s132
    %p143 = scmp.eq.s32.totalorder %s15, 0
    %p144 = por %p142, %p143
    %p145 = scmp.ne.s32.totalorder %s131, %s132
    %p146 = scmp.eq.s32.totalorder %s16, 1
    %p147 = por %p145, %p146
    %p149 = scmp.ne.s32.totalorder %s132, %s148
    %p150 = scmp.eq.s32.totalorder %s16, 0
    %p151 = por %p149, %p150
    %p152 = scmp.le.s32.totalorder 1, %s10
    %p153 = scmp.lt.s32.totalorder %s10, 3
    %p154 = pnand %p152, %p153
    %p155 = pneg %p154
    // Predicated region
    $region9: #{bottleneck_forward.3} parent=5 // pred_check
      _
    $region10: #{bottleneck_forward.3} parent=5 // pred_check_branch
      %157 = sbr.rel (%p154) target = $region12
    $region11: #{bottleneck_forward.3} parent=5 // pred_region
      %s158 = ssub.s32 %s10, 1
      // Predicated region
      $region13: #{bottleneck_forward.3} parent=11 // pred_check
        %p159 = pneg %p76
      $region14: #{bottleneck_forward.3} parent=11 // pred_check_branch
        %161 = sbr.rel (%p159) target = $region16
      $region15: #{bottleneck_forward.3} parent=11 // pred_region
        %s162 = smul.u32 2, %s20
        %p163 = scmp.lt.s32.totalorder %s162, 1
        %s164 = scalar_select %p163, %s162, 1
        %s165 = smul.addr %s164, 4
        %s166 = scalar_lea.vmem %s1, %s165
        %s167 = smul.u32 2, %s20
      $region16: #{bottleneck_forward.3} parent=11 // pred_fallthru
        _
      // Predicated region
      $region17: #{bottleneck_forward.3} parent=11 // pred_check
        %p168 = pneg %p97
      $region18: #{bottleneck_forward.3} parent=11 // pred_check_branch
        %170 = sbr.rel (%p168) target = $region20
      $region19: #{bottleneck_forward.3} parent=11 // pred_region
        _
      $region20: #{bottleneck_forward.3} parent=11 // pred_fallthru
        _
      // Predicated region
      $region21: #{bottleneck_forward.3} parent=11 // pred_check
        %p171 = pneg %p118
      $region22: #{bottleneck_forward.3} parent=11 // pred_check_branch
        %173 = sbr.rel (%p171) target = $region24
      $region23: #{bottleneck_forward.3} parent=11 // pred_region
        _
      $region24: #{bottleneck_forward.3} parent=11 // pred_fallthru
        _
    $region12: #{bottleneck_forward.3} parent=5 // pred_fallthru
      _
    %p174 = scmp.lt.s32.totalorder %s10, 2
    // Predicated region
    $region25: #{bottleneck_forward.3} parent=5 // pred_check
      %p175 = pneg %p174
    $region26: #{bottleneck_forward.3} parent=5 // pred_check_branch
      %177 = sbr.rel (%p175) target = $region28
    $region27: #{bottleneck_forward.3} parent=5 // pred_region
      // Predicated region
      $region29: #{bottleneck_forward.3} parent=27 // pred_check
        %p178 = pneg %p44
      $region30: #{bottleneck_forward.3} parent=27 // pred_check_branch
        %180 = sbr.rel (%p178) target = $region32
      $region31: #{bottleneck_forward.3} parent=27 // pred_region
        %s181 = smul.u32 32, %s17
        %p182 = scmp.lt.s32.totalorder %s181, 63
        %s183 = scalar_select %p182, %s181, 63
        %p184 = scmp.lt.s32.totalorder %s18, 0
        %s185 = scalar_select %p184, %s18, 0
        %s186 = sadd.s32 %s185, %s183
        %s187 = smul.addr %s186, 4
        %s188 = scalar_lea.vmem %s0, %s187
        %s189 = smul.u32 32, %s17
      $region32: #{bottleneck_forward.3} parent=27 // pred_fallthru
        _
    $region28: #{bottleneck_forward.3} parent=5 // pred_fallthru
      _
    %p190 = scmp.le.s32.totalorder 1, %s10
    %p191 = scmp.lt.s32.totalorder %s10, 3
    %p192 = pnand %p190, %p191
    %p193 = pneg %p192
    // Predicated region
    $region33: #{bottleneck_forward.3} parent=5 // pred_check
      _
    $region34: #{bottleneck_forward.3} parent=5 // pred_check_branch
      %195 = sbr.rel (%p192) target = $region36
    $region35: #{bottleneck_forward.3} parent=5 // pred_region
      %s196 = ssub.s32 %s10, 1
      %s197 = smul.u32 32, %s19
      %p198 = scmp.lt.s32.totalorder %s197, 63
      %s199 = scalar_select %p198, %s197, 63
      %p200 = scmp.lt.s32.totalorder %s20, 0
      %s201 = scalar_select %p200, %s20, 0
      %s202 = sadd.s32 %s201, %s199
      %s203 = smul.addr %s202, 4
      %s204 = scalar_lea.vmem %s0, %s203
      %p205 = pneg %p50
      %p206 = pneg %p47
      %s207 = smul.u32 2, %s20
      %p208 = scmp.lt.s32.totalorder %s207, 1
      %s209 = scalar_select %p208, %s207, 1
      %s210 = smul.addr %s209, 4
      %s211 = scalar_lea.vmem %s1, %s210
      %p212 = pneg %p76
      %p213 = pneg %p73
      %p214 = pneg %p97
      %p215 = pneg %p94
      %p216 = pneg %p118
      %p217 = pneg %p115
      %p218 = pneg %p144
      %p219 = pneg %p141
      %s220 = smul.u32 32, %s19
      %p221 = scmp.lt.s32.totalorder %s220, 63
      %s222 = scalar_select %p221, %s220, 63
      %s223 = smul.addr %s222, 4
      %s224 = scalar_lea.vmem %s4, %s223
      %s225 = smul.u32 32, %s19
      %p226 = scmp.lt.s32.totalorder %s225, 63
      %s227 = scalar_select %p226, %s225, 63
      %p228 = scmp.lt.s32.totalorder %s20, 0
      %s229 = scalar_select %p228, %s20, 0
      %s230 = sadd.s32 %s229, %s227
      %s231 = smul.addr %s230, 4
      %s232 = scalar_lea.vmem %s0, %s231
      %s233 = smul.u32 32, %s19
      %s234 = smul.u32 2, %s20
      %p235 = scmp.lt.s32.totalorder %s234, 1
      %s236 = scalar_select %p235, %s234, 1
      %s237 = smul.addr %s236, 4
      %s238 = scalar_lea.vmem %s1, %s237
      %s239 = smul.u32 2, %s20
      %s240 = smul.u32 32, %s19
      %p241 = scmp.lt.s32.totalorder %s240, 63
      %s242 = scalar_select %p241, %s240, 63
      %s243 = smul.addr %s242, 4
      %s244 = scalar_lea.vmem %s4, %s243
      %s245 = smul.u32 32, %s19
      %p247 = scmp.eq.s32.totalorder %s20, 0
      // Predicated region
      $region37: #{bottleneck_forward.3} parent=35 // pred_check
        %p248 = pneg %p247
      $region38: #{bottleneck_forward.3} parent=35 // pred_check_branch
        %250 = sbr.rel (%p248) target = $region40
      $region39: #{bottleneck_forward.3} parent=35 // pred_region
        %vm251 = vcmask 64512
        %252 = vst.msk [vmem:[#allocation2] sm:$0xff] %vm251, 0.0
        %253 = vst.msk [vmem:[#allocation2 + $0x8] sm:$0xff] %vm251, 0.0
        %254 = vst.msk [vmem:[#allocation2 + $0x10] sm:$0xff] %vm251, 0.0
        %255 = vst.msk [vmem:[#allocation2 + $0x18] sm:$0xff] %vm251, 0.0
        %256 = vst.msk [vmem:[#allocation2 + $0x20] sm:$0xff] %vm251, 0.0
        %257 = vst.msk [vmem:[#allocation2 + $0x28] sm:$0xff] %vm251, 0.0
        %258 = vst.msk [vmem:[#allocation2 + $0x30] sm:$0xff] %vm251, 0.0
        %259 = vst.msk [vmem:[#allocation2 + $0x38] sm:$0xff] %vm251, 0.0
        %260 = vst.msk [vmem:[#allocation2 + $0x40] sm:$0xff] %vm251, 0.0
        %261 = vst.msk [vmem:[#allocation2 + $0x48] sm:$0xff] %vm251, 0.0
        %262 = vst.msk [vmem:[#allocation2 + $0x50] sm:$0xff] %vm251, 0.0
        %263 = vst.msk [vmem:[#allocation2 + $0x58] sm:$0xff] %vm251, 0.0
        %264 = vst.msk [vmem:[#allocation2 + $0x60] sm:$0xff] %vm251, 0.0
        %265 = vst.msk [vmem:[#allocation2 + $0x68] sm:$0xff] %vm251, 0.0
        %266 = vst.msk [vmem:[#allocation2 + $0x70] sm:$0xff] %vm251, 0.0
        %267 = vst.msk [vmem:[#allocation2 + $0x78] sm:$0xff] %vm251, 0.0
        %268 = vst.msk [vmem:[#allocation2 + $0x80] sm:$0xff] %vm251, 0.0
        %269 = vst.msk [vmem:[#allocation2 + $0x88] sm:$0xff] %vm251, 0.0
        %270 = vst.msk [vmem:[#allocation2 + $0x90] sm:$0xff] %vm251, 0.0
        %271 = vst.msk [vmem:[#allocation2 + $0x98] sm:$0xff] %vm251, 0.0
        %272 = vst.msk [vmem:[#allocation2 + $0xa0] sm:$0xff] %vm251, 0.0
        %273 = vst.msk [vmem:[#allocation2 + $0xa8] sm:$0xff] %vm251, 0.0
        %274 = vst.msk [vmem:[#allocation2 + $0xb0] sm:$0xff] %vm251, 0.0
        %275 = vst.msk [vmem:[#allocation2 + $0xb8] sm:$0xff] %vm251, 0.0
        %276 = vst.msk [vmem:[#allocation2 + $0xc0] sm:$0xff] %vm251, 0.0
        %277 = vst.msk [vmem:[#allocation2 + $0xc8] sm:$0xff] %vm251, 0.0
        %278 = vst.msk [vmem:[#allocation2 + $0xd0] sm:$0xff] %vm251, 0.0
        %279 = vst.msk [vmem:[#allocation2 + $0xd8] sm:$0xff] %vm251, 0.0
        %280 = vst.msk [vmem:[#allocation2 + $0xe0] sm:$0xff] %vm251, 0.0
        %281 = vst.msk [vmem:[#allocation2 + $0xe8] sm:$0xff] %vm251, 0.0
        %282 = vst.msk [vmem:[#allocation2 + $0xf0] sm:$0xff] %vm251, 0.0
        %283 = vst.msk [vmem:[#allocation2 + $0xf8] sm:$0xff] %vm251, 0.0
      $region40: #{bottleneck_forward.3} parent=35 // pred_fallthru
        _
      %v284 = vld [vmem:[#allocation2] sm:$0xff]
      %v285 = vld [vmem:[#allocation2 + $0x8] sm:$0xff]
      %v286 = vld [vmem:[#allocation2 + $0x10] sm:$0xff]
      %v287 = vld [vmem:[#allocation2 + $0x18] sm:$0xff]
      %v288 = vld [vmem:[#allocation2 + $0x20] sm:$0xff]
      %v289 = vld [vmem:[#allocation2 + $0x28] sm:$0xff]
      %v290 = vld [vmem:[#allocation2 + $0x30] sm:$0xff]
      %v291 = vld [vmem:[#allocation2 + $0x38] sm:$0xff]
      %v292 = vld [vmem:[#allocation2 + $0x40] sm:$0xff]
      %v293 = vld [vmem:[#allocation2 + $0x48] sm:$0xff]
      %v294 = vld [vmem:[#allocation2 + $0x50] sm:$0xff]
      %v295 = vld [vmem:[#allocation2 + $0x58] sm:$0xff]
      %v296 = vld [vmem:[#allocation2 + $0x60] sm:$0xff]
      %v297 = vld [vmem:[#allocation2 + $0x68] sm:$0xff]
      %v298 = vld [vmem:[#allocation2 + $0x70] sm:$0xff]
      %v299 = vld [vmem:[#allocation2 + $0x78] sm:$0xff]
      %v300 = vld [vmem:[#allocation2 + $0x80] sm:$0xff]
      %v301 = vld [vmem:[#allocation2 + $0x88] sm:$0xff]
      %v302 = vld [vmem:[#allocation2 + $0x90] sm:$0xff]
      %v303 = vld [vmem:[#allocation2 + $0x98] sm:$0xff]
      %v304 = vld [vmem:[#allocation2 + $0xa0] sm:$0xff]
      %v305 = vld [vmem:[#allocation2 + $0xa8] sm:$0xff]
      %v306 = vld [vmem:[#allocation2 + $0xb0] sm:$0xff]
      %v307 = vld [vmem:[#allocation2 + $0xb8] sm:$0xff]
      %v308 = vld [vmem:[#allocation2 + $0xc0] sm:$0xff]
      %v309 = vld [vmem:[#allocation2 + $0xc8] sm:$0xff]
      %v310 = vld [vmem:[#allocation2 + $0xd0] sm:$0xff]
      %v311 = vld [vmem:[#allocation2 + $0xd8] sm:$0xff]
      %v312 = vld [vmem:[#allocation2 + $0xe0] sm:$0xff]
      %v313 = vld [vmem:[#allocation2 + $0xe8] sm:$0xff]
      %v314 = vld [vmem:[#allocation2 + $0xf0] sm:$0xff]
      %v315 = vld [vmem:[#allocation2 + $0xf8] sm:$0xff]
      %v316 = vld [vmem:[%s232] sm:$0xf]
      %v317 = vld [vmem:[%s232 + $0x4] sm:$0xf]
      %v318 = vld [vmem:[%s232 + $0x8] sm:$0xf]
      %v319 = vld [vmem:[%s232 + $0xc] sm:$0xf]
      %v320 = vld [vmem:[%s232 + $0x10] sm:$0xf]
      %v321 = vld [vmem:[%s232 + $0x14] sm:$0xf]
      %v322 = vld [vmem:[%s232 + $0x18] sm:$0xf]
      %v323 = vld [vmem:[%s232 + $0x1c] sm:$0xf]
      %v324 = vld [vmem:[%s232 + $0x20] sm:$0xf]
      %v325 = vld [vmem:[%s232 + $0x24] sm:$0xf]
      %v326 = vld [vmem:[%s232 + $0x28] sm:$0xf]
      %v327 = vld [vmem:[%s232 + $0x2c] sm:$0xf]
      %v328 = vld [vmem:[%s232 + $0x30] sm:$0xf]
      %v329 = vld [vmem:[%s232 + $0x34] sm:$0xf]
      %v330 = vld [vmem:[%s232 + $0x38] sm:$0xf]
      %v331 = vld [vmem:[%s232 + $0x3c] sm:$0xf]
      %v332 = vld [vmem:[%s232 + $0x40] sm:$0xf]
      %v333 = vld [vmem:[%s232 + $0x44] sm:$0xf]
      %v334 = vld [vmem:[%s232 + $0x48] sm:$0xf]
      %v335 = vld [vmem:[%s232 + $0x4c] sm:$0xf]
      %v336 = vld [vmem:[%s232 + $0x50] sm:$0xf]
      %v337 = vld [vmem:[%s232 + $0x54] sm:$0xf]
      %v338 = vld [vmem:[%s232 + $0x58] sm:$0xf]
      %v339 = vld [vmem:[%s232 + $0x5c] sm:$0xf]
      %v340 = vld [vmem:[%s232 + $0x60] sm:$0xf]
      %v341 = vld [vmem:[%s232 + $0x64] sm:$0xf]
      %v342 = vld [vmem:[%s232 + $0x68] sm:$0xf]
      %v343 = vld [vmem:[%s232 + $0x6c] sm:$0xf]
      %v344 = vld [vmem:[%s232 + $0x70] sm:$0xf]
      %v345 = vld [vmem:[%s232 + $0x74] sm:$0xf]
      %v346 = vld [vmem:[%s232 + $0x78] sm:$0xf]
      %v347 = vld [vmem:[%s232 + $0x7c] sm:$0xf]
      %v348 = vld [vmem:[%s238] sm:$0xf]
      %v349 = vld [vmem:[%s238 + $0x4] sm:$0xf]
      %v382 = vunpack.c.l.b16 %v316
      %v383 = vunpack.c.l.b16 %v317
      %v384 = vunpack.c.l.b16 %v318
      %v385 = vunpack.c.l.b16 %v319
      %v386 = vunpack.c.l.b16 %v320
      %v387 = vunpack.c.l.b16 %v321
      %v388 = vunpack.c.l.b16 %v322
      %v389 = vunpack.c.l.b16 %v323
      %v390 = vunpack.c.l.b16 %v324
      %v391 = vunpack.c.l.b16 %v325
      %v392 = vunpack.c.l.b16 %v326
      %v393 = vunpack.c.l.b16 %v327
      %v394 = vunpack.c.l.b16 %v328
      %v395 = vunpack.c.l.b16 %v329
      %v396 = vunpack.c.l.b16 %v330
      %v397 = vunpack.c.l.b16 %v331
      %v398 = vunpack.c.l.b16 %v332
      %v399 = vunpack.c.l.b16 %v333
      %v400 = vunpack.c.l.b16 %v334
      %v401 = vunpack.c.l.b16 %v335
      %v402 = vunpack.c.l.b16 %v336
      %v403 = vunpack.c.l.b16 %v337
      %v404 = vunpack.c.l.b16 %v338
      %v405 = vunpack.c.l.b16 %v339
      %v406 = vunpack.c.l.b16 %v340
      %v407 = vunpack.c.l.b16 %v341
      %v408 = vunpack.c.l.b16 %v342
      %v409 = vunpack.c.l.b16 %v343
      %v410 = vunpack.c.l.b16 %v344
      %v411 = vunpack.c.l.b16 %v345
      %v412 = vunpack.c.l.b16 %v346
      %v413 = vunpack.c.l.b16 %v347
      %v414 = vpack.c.b16 %v383, %v382
      %v415 = vpack.c.b16 %v385, %v384
      %v416 = vpack.c.b16 %v387, %v386
      %v417 = vpack.c.b16 %v389, %v388
      %v418 = vpack.c.b16 %v391, %v390
      %v419 = vpack.c.b16 %v393, %v392
      %v420 = vpack.c.b16 %v395, %v394
      %v421 = vpack.c.b16 %v397, %v396
      %v422 = vpack.c.b16 %v399, %v398
      %v423 = vpack.c.b16 %v401, %v400
      %v424 = vpack.c.b16 %v403, %v402
      %v425 = vpack.c.b16 %v405, %v404
      %v426 = vpack.c.b16 %v407, %v406
      %v427 = vpack.c.b16 %v409, %v408
      %v428 = vpack.c.b16 %v411, %v410
      %v429 = vpack.c.b16 %v413, %v412
      %v432 = vunpack.c.l.b16 %v348
      %v433 = vunpack.c.l.b16 %v349
      %v434 = vpack.c.b16 %v433, %v432
      %vm436 = vcmask 130048
      %v438 = vsel %vm436, %v414, 0
      %v441 = vsel %vm436, %v415, 0
      %v444 = vsel %vm436, %v416, 0
      %v447 = vsel %vm436, %v417, 0
      %v450 = vsel %vm436, %v418, 0
      %v453 = vsel %vm436, %v419, 0
      %v456 = vsel %vm436, %v420, 0
      %v459 = vsel %vm436, %v421, 0
      %v462 = vsel %vm436, %v422, 0
      %v465 = vsel %vm436, %v423, 0
      %v468 = vsel %vm436, %v424, 0
      %v471 = vsel %vm436, %v425, 0
      %v474 = vsel %vm436, %v426, 0
      %v477 = vsel %vm436, %v427, 0
      %v480 = vsel %vm436, %v428, 0
      %v483 = vsel %vm436, %v429, 0
      %485 = vmatprep.subr.bf16.mxu0 0
      %486 = vmatpush1.bf16.msra.mxu0 0
      %487 = vmatprep.subr.bf16.mxu0 0
      %488 = vmatpush1.bf16.msra.mxu0 0
      %489 = vmatprep.subr.bf16.mxu0 0
      %490 = vmatpush1.bf16.msra.mxu0 0
      %491 = vmatprep.subr.bf16.mxu0 0
      %492 = vmatpush1.bf16.msra.mxu0 0
      %493 = vmatprep.subr.bf16.mxu0 0
      %494 = vmatpush1.bf16.msra.mxu0 0
      %495 = vmatprep.subr.bf16.mxu0 0
      %496 = vmatpush1.bf16.msra.mxu0 0
      %497 = vmatprep.subr.bf16.mxu0 0
      %498 = vmatpush1.bf16.msra.mxu0 0
      %499 = vmatprep.subr.bf16.mxu0 0
      %500 = vmatpush1.bf16.msra.mxu0 %v434
      %501 = vmatprep.subr.bf16.mxu0 0
      %502 = vmatpush2.bf16.msra.mxu0 0
      %503 = vmatprep.subr.bf16.mxu0 0
      %504 = vmatpush2.bf16.msra.mxu0 0
      %505 = vmatprep.subr.bf16.mxu0 0
      %506 = vmatpush2.bf16.msra.mxu0 0
      %507 = vmatprep.subr.bf16.mxu0 0
      %508 = vmatpush2.bf16.msra.mxu0 0
      %509 = vmatprep.subr.bf16.mxu0 0
      %510 = vmatpush2.bf16.msra.mxu0 0
      %511 = vmatprep.subr.bf16.mxu0 0
      %512 = vmatpush2.bf16.msra.mxu0 0
      %513 = vmatprep.subr.bf16.mxu0 0
      %514 = vmatpush2.bf16.msra.mxu0 0
      %515 = vmatprep.subr.bf16.mxu0 0
      %516 = vmatpush2.bf16.msra.mxu0 0
      %517 = vmatprep.mubr.bf16.mxu0 0
      %518 = vmatmul.mubr.bf16.gmra.mxu0 %v438
      %v519 = vpop.f32.mrf.mxu0
      %v520 = vadd.f32 0.0, %v519
      %v521 = vpop.f32.mrf.mxu0
      %v522 = vpop.f32.mrf.mxu0
      %v523 = vadd.f32 0.0, %v522
      %v524 = vpop.f32.mrf.mxu0
      %525 = vmatprep.mubr.bf16.mxu0 0
      %526 = vmatmul.mubr.bf16.gmra.mxu0 %v441
      %v527 = vpop.f32.mrf.mxu0
      %v528 = vadd.f32 0.0, %v527
      %v529 = vpop.f32.mrf.mxu0
      %v530 = vpop.f32.mrf.mxu0
      %v531 = vadd.f32 0.0, %v530
      %v532 = vpop.f32.mrf.mxu0
      %533 = vmatprep.mubr.bf16.mxu0 0
      %534 = vmatmul.mubr.bf16.gmra.mxu0 %v444
      %v535 = vpop.f32.mrf.mxu0
      %v536 = vadd.f32 0.0, %v535
      %v537 = vpop.f32.mrf.mxu0
      %v538 = vpop.f32.mrf.mxu0
      %v539 = vadd.f32 0.0, %v538
      %v540 = vpop.f32.mrf.mxu0
      %541 = vmatprep.mubr.bf16.mxu0 0
      %542 = vmatmul.mubr.bf16.gmra.mxu0 %v447
      %v543 = vpop.f32.mrf.mxu0
      %v544 = vadd.f32 0.0, %v543
      %v545 = vpop.f32.mrf.mxu0
      %v546 = vpop.f32.mrf.mxu0
      %v547 = vadd.f32 0.0, %v546
      %v548 = vpop.f32.mrf.mxu0
      %549 = vmatprep.mubr.bf16.mxu0 0
      %550 = vmatmul.mubr.bf16.gmra.mxu0 %v450
      %v551 = vpop.f32.mrf.mxu0
      %v552 = vadd.f32 0.0, %v551
      %v553 = vpop.f32.mrf.mxu0
      %v554 = vpop.f32.mrf.mxu0
      %v555 = vadd.f32 0.0, %v554
      %v556 = vpop.f32.mrf.mxu0
      %557 = vmatprep.mubr.bf16.mxu0 0
      %558 = vmatmul.mubr.bf16.gmra.mxu0 %v453
      %v559 = vpop.f32.mrf.mxu0
      %v560 = vadd.f32 0.0, %v559
      %v561 = vpop.f32.mrf.mxu0
      %v562 = vpop.f32.mrf.mxu0
      %v563 = vadd.f32 0.0, %v562
      %v564 = vpop.f32.mrf.mxu0
      %565 = vmatprep.mubr.bf16.mxu0 0
      %566 = vmatmul.mubr.bf16.gmra.mxu0 %v456
      %v567 = vpop.f32.mrf.mxu0
      %v568 = vadd.f32 0.0, %v567
      %v569 = vpop.f32.mrf.mxu0
      %v570 = vpop.f32.mrf.mxu0
      %v571 = vadd.f32 0.0, %v570
      %v572 = vpop.f32.mrf.mxu0
      %573 = vmatprep.mubr.bf16.mxu0 0
      %574 = vmatmul.mubr.bf16.gmra.mxu0 %v459
      %v575 = vpop.f32.mrf.mxu0
      %v576 = vadd.f32 0.0, %v575
      %v577 = vpop.f32.mrf.mxu0
      %v578 = vpop.f32.mrf.mxu0
      %v579 = vadd.f32 0.0, %v578
      %v580 = vpop.f32.mrf.mxu0
      %581 = vmatprep.mubr.bf16.mxu0 0
      %582 = vmatmul.mubr.bf16.gmra.mxu0 %v462
      %v583 = vpop.f32.mrf.mxu0
      %v584 = vadd.f32 0.0, %v583
      %v585 = vpop.f32.mrf.mxu0
      %v586 = vpop.f32.mrf.mxu0
      %v587 = vadd.f32 0.0, %v586
      %v588 = vpop.f32.mrf.mxu0
      %589 = vmatprep.mubr.bf16.mxu0 0
      %590 = vmatmul.mubr.bf16.gmra.mxu0 %v465
      %v591 = vpop.f32.mrf.mxu0
      %v592 = vadd.f32 0.0, %v591
      %v593 = vpop.f32.mrf.mxu0
      %v594 = vpop.f32.mrf.mxu0
      %v595 = vadd.f32 0.0, %v594
      %v596 = vpop.f32.mrf.mxu0
      %597 = vmatprep.mubr.bf16.mxu0 0
      %598 = vmatmul.mubr.bf16.gmra.mxu0 %v468
      %v599 = vpop.f32.mrf.mxu0
      %v600 = vadd.f32 0.0, %v599
      %v601 = vpop.f32.mrf.mxu0
      %v602 = vpop.f32.mrf.mxu0
      %v603 = vadd.f32 0.0, %v602
      %v604 = vpop.f32.mrf.mxu0
      %605 = vmatprep.mubr.bf16.mxu0 0
      %606 = vmatmul.mubr.bf16.gmra.mxu0 %v471
      %v607 = vpop.f32.mrf.mxu0
      %v608 = vadd.f32 0.0, %v607
      %v609 = vpop.f32.mrf.mxu0
      %v610 = vpop.f32.mrf.mxu0
      %v611 = vadd.f32 0.0, %v610
      %v612 = vpop.f32.mrf.mxu0
      %613 = vmatprep.mubr.bf16.mxu0 0
      %614 = vmatmul.mubr.bf16.gmra.mxu0 %v474
      %v615 = vpop.f32.mrf.mxu0
      %v616 = vadd.f32 0.0, %v615
      %v617 = vpop.f32.mrf.mxu0
      %v618 = vpop.f32.mrf.mxu0
      %v619 = vadd.f32 0.0, %v618
      %v620 = vpop.f32.mrf.mxu0
      %621 = vmatprep.mubr.bf16.mxu0 0
      %622 = vmatmul.mubr.bf16.gmra.mxu0 %v477
      %v623 = vpop.f32.mrf.mxu0
      %v624 = vadd.f32 0.0, %v623
      %v625 = vpop.f32.mrf.mxu0
      %v626 = vpop.f32.mrf.mxu0
      %v627 = vadd.f32 0.0, %v626
      %v628 = vpop.f32.mrf.mxu0
      %629 = vmatprep.mubr.bf16.mxu0 0
      %630 = vmatmul.mubr.bf16.gmra.mxu0 %v480
      %v631 = vpop.f32.mrf.mxu0
      %v632 = vadd.f32 0.0, %v631
      %v633 = vpop.f32.mrf.mxu0
      %v634 = vpop.f32.mrf.mxu0
      %v635 = vadd.f32 0.0, %v634
      %v636 = vpop.f32.mrf.mxu0
      %637 = vmatprep.mubr.bf16.mxu0 0
      %638 = vmatmul.mubr.bf16.gmra.mxu0 %v483
      %v639 = vpop.f32.mrf.mxu0
      %v640 = vadd.f32 0.0, %v639
      %v641 = vpop.f32.mrf.mxu0
      %v642 = vpop.f32.mrf.mxu0
      %v643 = vadd.f32 0.0, %v642
      %v644 = vpop.f32.mrf.mxu0
      %645 = vdwg.mxu0
      %v646 = vadd.f32 %v284, %v520
      %v647 = vadd.f32 %v285, %v523
      %v648 = vadd.f32 %v286, %v528
      %v649 = vadd.f32 %v287, %v531
      %v650 = vadd.f32 %v288, %v536
      %v651 = vadd.f32 %v289, %v539
      %v652 = vadd.f32 %v290, %v544
      %v653 = vadd.f32 %v291, %v547
      %v654 = vadd.f32 %v292, %v552
      %v655 = vadd.f32 %v293, %v555
      %v656 = vadd.f32 %v294, %v560
      %v657 = vadd.f32 %v295, %v563
      %v658 = vadd.f32 %v296, %v568
      %v659 = vadd.f32 %v297, %v571
      %v660 = vadd.f32 %v298, %v576
      %v661 = vadd.f32 %v299, %v579
      %v662 = vadd.f32 %v300, %v584
      %v663 = vadd.f32 %v301, %v587
      %v664 = vadd.f32 %v302, %v592
      %v665 = vadd.f32 %v303, %v595
      %v666 = vadd.f32 %v304, %v600
      %v667 = vadd.f32 %v305, %v603
      %v668 = vadd.f32 %v306, %v608
      %v669 = vadd.f32 %v307, %v611
      %v670 = vadd.f32 %v308, %v616
      %v671 = vadd.f32 %v309, %v619
      %v672 = vadd.f32 %v310, %v624
      %v673 = vadd.f32 %v311, %v627
      %v674 = vadd.f32 %v312, %v632
      %v675 = vadd.f32 %v313, %v635
      %v676 = vadd.f32 %v314, %v640
      %v677 = vadd.f32 %v315, %v643
      %vm678 = vcmask 64512
      %679 = vst.msk [vmem:[#allocation2] sm:$0xff] %vm678, %v646
      %680 = vst.msk [vmem:[#allocation2 + $0x8] sm:$0xff] %vm678, %v647
      %681 = vst.msk [vmem:[#allocation2 + $0x10] sm:$0xff] %vm678, %v648
      %682 = vst.msk [vmem:[#allocation2 + $0x18] sm:$0xff] %vm678, %v649
      %683 = vst.msk [vmem:[#allocation2 + $0x20] sm:$0xff] %vm678, %v650
      %684 = vst.msk [vmem:[#allocation2 + $0x28] sm:$0xff] %vm678, %v651
      %685 = vst.msk [vmem:[#allocation2 + $0x30] sm:$0xff] %vm678, %v652
      %686 = vst.msk [vmem:[#allocation2 + $0x38] sm:$0xff] %vm678, %v653
      %687 = vst.msk [vmem:[#allocation2 + $0x40] sm:$0xff] %vm678, %v654
      %688 = vst.msk [vmem:[#allocation2 + $0x48] sm:$0xff] %vm678, %v655
      %689 = vst.msk [vmem:[#allocation2 + $0x50] sm:$0xff] %vm678, %v656
      %690 = vst.msk [vmem:[#allocation2 + $0x58] sm:$0xff] %vm678, %v657
      %691 = vst.msk [vmem:[#allocation2 + $0x60] sm:$0xff] %vm678, %v658
      %692 = vst.msk [vmem:[#allocation2 + $0x68] sm:$0xff] %vm678, %v659
      %693 = vst.msk [vmem:[#allocation2 + $0x70] sm:$0xff] %vm678, %v660
      %694 = vst.msk [vmem:[#allocation2 + $0x78] sm:$0xff] %vm678, %v661
      %695 = vst.msk [vmem:[#allocation2 + $0x80] sm:$0xff] %vm678, %v662
      %696 = vst.msk [vmem:[#allocation2 + $0x88] sm:$0xff] %vm678, %v663
      %697 = vst.msk [vmem:[#allocation2 + $0x90] sm:$0xff] %vm678, %v664
      %698 = vst.msk [vmem:[#allocation2 + $0x98] sm:$0xff] %vm678, %v665
      %699 = vst.msk [vmem:[#allocation2 + $0xa0] sm:$0xff] %vm678, %v666
      %700 = vst.msk [vmem:[#allocation2 + $0xa8] sm:$0xff] %vm678, %v667
      %701 = vst.msk [vmem:[#allocation2 + $0xb0] sm:$0xff] %vm678, %v668
      %702 = vst.msk [vmem:[#allocation2 + $0xb8] sm:$0xff] %vm678, %v669
      %703 = vst.msk [vmem:[#allocation2 + $0xc0] sm:$0xff] %vm678, %v670
      %704 = vst.msk [vmem:[#allocation2 + $0xc8] sm:$0xff] %vm678, %v671
      %705 = vst.msk [vmem:[#allocation2 + $0xd0] sm:$0xff] %vm678, %v672
      %706 = vst.msk [vmem:[#allocation2 + $0xd8] sm:$0xff] %vm678, %v673
      %707 = vst.msk [vmem:[#allocation2 + $0xe0] sm:$0xff] %vm678, %v674
      %708 = vst.msk [vmem:[#allocation2 + $0xe8] sm:$0xff] %vm678, %v675
      %709 = vst.msk [vmem:[#allocation2 + $0xf0] sm:$0xff] %vm678, %v676
      %710 = vst.msk [vmem:[#allocation2 + $0xf8] sm:$0xff] %vm678, %v677
      // Predicated region
      $region41: #{bottleneck_forward.3} parent=35 // pred_check
        %p711 = pneg %p247
      $region42: #{bottleneck_forward.3} parent=35 // pred_check_branch
        %713 = sbr.rel (%p711) target = $region44
      $region43: #{bottleneck_forward.3} parent=35 // pred_region
        %v714 = vld [vmem:[#allocation2] sm:$0xff]
        %v715 = vld [vmem:[#allocation2 + $0x8] sm:$0xff]
        %v716 = vld [vmem:[#allocation2 + $0x10] sm:$0xff]
        %v717 = vld [vmem:[#allocation2 + $0x18] sm:$0xff]
        %v718 = vld [vmem:[#allocation2 + $0x20] sm:$0xff]
        %v719 = vld [vmem:[#allocation2 + $0x28] sm:$0xff]
        %v720 = vld [vmem:[#allocation2 + $0x30] sm:$0xff]
        %v721 = vld [vmem:[#allocation2 + $0x38] sm:$0xff]
        %v722 = vld [vmem:[#allocation2 + $0x40] sm:$0xff]
        %v723 = vld [vmem:[#allocation2 + $0x48] sm:$0xff]
        %v724 = vld [vmem:[#allocation2 + $0x50] sm:$0xff]
        %v725 = vld [vmem:[#allocation2 + $0x58] sm:$0xff]
        %v726 = vld [vmem:[#allocation2 + $0x60] sm:$0xff]
        %v727 = vld [vmem:[#allocation2 + $0x68] sm:$0xff]
        %v728 = vld [vmem:[#allocation2 + $0x70] sm:$0xff]
        %v729 = vld [vmem:[#allocation2 + $0x78] sm:$0xff]
        %v730 = vld [vmem:[#allocation2 + $0x80] sm:$0xff]
        %v731 = vld [vmem:[#allocation2 + $0x88] sm:$0xff]
        %v732 = vld [vmem:[#allocation2 + $0x90] sm:$0xff]
        %v733 = vld [vmem:[#allocation2 + $0x98] sm:$0xff]
        %v734 = vld [vmem:[#allocation2 + $0xa0] sm:$0xff]
        %v735 = vld [vmem:[#allocation2 + $0xa8] sm:$0xff]
        %v736 = vld [vmem:[#allocation2 + $0xb0] sm:$0xff]
        %v737 = vld [vmem:[#allocation2 + $0xb8] sm:$0xff]
        %v738 = vld [vmem:[#allocation2 + $0xc0] sm:$0xff]
        %v739 = vld [vmem:[#allocation2 + $0xc8] sm:$0xff]
        %v740 = vld [vmem:[#allocation2 + $0xd0] sm:$0xff]
        %v741 = vld [vmem:[#allocation2 + $0xd8] sm:$0xff]
        %v742 = vld [vmem:[#allocation2 + $0xe0] sm:$0xff]
        %v743 = vld [vmem:[#allocation2 + $0xe8] sm:$0xff]
        %v744 = vld [vmem:[#allocation2 + $0xf0] sm:$0xff]
        %v745 = vld [vmem:[#allocation2 + $0xf8] sm:$0xff]
        %v746 = vld [vmem:[%s2] sm:$0x1]
        %v748 = vlaneseq
        %v749 = vshrl.u32 %v748, 7
        %v750 = vsub.s32 0, %v749
        %v751 = vrot.slane %v746, %v750
        %v753 = vmul.f32 %v714, %v751
        %v754 = vmul.f32 %v715, %v751
        %v755 = vmul.f32 %v716, %v751
        %v756 = vmul.f32 %v717, %v751
        %v757 = vmul.f32 %v718, %v751
        %v758 = vmul.f32 %v719, %v751
        %v759 = vmul.f32 %v720, %v751
        %v760 = vmul.f32 %v721, %v751
        %v761 = vmul.f32 %v722, %v751
        %v762 = vmul.f32 %v723, %v751
        %v763 = vmul.f32 %v724, %v751
        %v764 = vmul.f32 %v725, %v751
        %v765 = vmul.f32 %v726, %v751
        %v766 = vmul.f32 %v727, %v751
        %v767 = vmul.f32 %v728, %v751
        %v768 = vmul.f32 %v729, %v751
        %v769 = vmul.f32 %v730, %v751
        %v770 = vmul.f32 %v731, %v751
        %v771 = vmul.f32 %v732, %v751
        %v772 = vmul.f32 %v733, %v751
        %v773 = vmul.f32 %v734, %v751
        %v774 = vmul.f32 %v735, %v751
        %v775 = vmul.f32 %v736, %v751
        %v776 = vmul.f32 %v737, %v751
        %v777 = vmul.f32 %v738, %v751
        %v778 = vmul.f32 %v739, %v751
        %v779 = vmul.f32 %v740, %v751
        %v780 = vmul.f32 %v741, %v751
        %v781 = vmul.f32 %v742, %v751
        %v782 = vmul.f32 %v743, %v751
        %v783 = vmul.f32 %v744, %v751
        %v784 = vmul.f32 %v745, %v751
        %v785 = vld [vmem:[%s3] sm:$0x1]
        %v787 = vlaneseq
        %v788 = vshrl.u32 %v787, 7
        %v789 = vsub.s32 0, %v788
        %v790 = vrot.slane %v785, %v789
        %v792 = vadd.f32 %v753, %v790
        %v793 = vadd.f32 %v754, %v790
        %v794 = vadd.f32 %v755, %v790
        %v795 = vadd.f32 %v756, %v790
        %v796 = vadd.f32 %v757, %v790
        %v797 = vadd.f32 %v758, %v790
        %v798 = vadd.f32 %v759, %v790
        %v799 = vadd.f32 %v760, %v790
        %v800 = vadd.f32 %v761, %v790
        %v801 = vadd.f32 %v762, %v790
        %v802 = vadd.f32 %v763, %v790
        %v803 = vadd.f32 %v764, %v790
        %v804 = vadd.f32 %v765, %v790
        %v805 = vadd.f32 %v766, %v790
        %v806 = vadd.f32 %v767, %v790
        %v807 = vadd.f32 %v768, %v790
        %v808 = vadd.f32 %v769, %v790
        %v809 = vadd.f32 %v770, %v790
        %v810 = vadd.f32 %v771, %v790
        %v811 = vadd.f32 %v772, %v790
        %v812 = vadd.f32 %v773, %v790
        %v813 = vadd.f32 %v774, %v790
        %v814 = vadd.f32 %v775, %v790
        %v815 = vadd.f32 %v776, %v790
        %v816 = vadd.f32 %v777, %v790
        %v817 = vadd.f32 %v778, %v790
        %v818 = vadd.f32 %v779, %v790
        %v819 = vadd.f32 %v780, %v790
        %v820 = vadd.f32 %v781, %v790
        %v821 = vadd.f32 %v782, %v790
        %v822 = vadd.f32 %v783, %v790
        %v823 = vadd.f32 %v784, %v790
        %v824 = vmax.f32 %v792, 0.0
        %v825 = vmax.f32 %v793, 0.0
        %v826 = vmax.f32 %v794, 0.0
        %v827 = vmax.f32 %v795, 0.0
        %v828 = vmax.f32 %v796, 0.0
        %v829 = vmax.f32 %v797, 0.0
        %v830 = vmax.f32 %v798, 0.0
        %v831 = vmax.f32 %v799, 0.0
        %v832 = vmax.f32 %v800, 0.0
        %v833 = vmax.f32 %v801, 0.0
        %v834 = vmax.f32 %v802, 0.0
        %v835 = vmax.f32 %v803, 0.0
        %v836 = vmax.f32 %v804, 0.0
        %v837 = vmax.f32 %v805, 0.0
        %v838 = vmax.f32 %v806, 0.0
        %v839 = vmax.f32 %v807, 0.0
        %v840 = vmax.f32 %v808, 0.0
        %v841 = vmax.f32 %v809, 0.0
        %v842 = vmax.f32 %v810, 0.0
        %v843 = vmax.f32 %v811, 0.0
        %v844 = vmax.f32 %v812, 0.0
        %v845 = vmax.f32 %v813, 0.0
        %v846 = vmax.f32 %v814, 0.0
        %v847 = vmax.f32 %v815, 0.0
        %v848 = vmax.f32 %v816, 0.0
        %v849 = vmax.f32 %v817, 0.0
        %v850 = vmax.f32 %v818, 0.0
        %v851 = vmax.f32 %v819, 0.0
        %v852 = vmax.f32 %v820, 0.0
        %v853 = vmax.f32 %v821, 0.0
        %v854 = vmax.f32 %v822, 0.0
        %v855 = vmax.f32 %v823, 0.0
        %v856 = vpack.c.bf16 %v825, %v824
        %v857 = vpack.c.bf16 %v827, %v826
        %v858 = vpack.c.bf16 %v829, %v828
        %v859 = vpack.c.bf16 %v831, %v830
        %v860 = vpack.c.bf16 %v833, %v832
        %v861 = vpack.c.bf16 %v835, %v834
        %v862 = vpack.c.bf16 %v837, %v836
        %v863 = vpack.c.bf16 %v839, %v838
        %v864 = vpack.c.bf16 %v841, %v840
        %v865 = vpack.c.bf16 %v843, %v842
        %v866 = vpack.c.bf16 %v845, %v844
        %v867 = vpack.c.bf16 %v847, %v846
        %v868 = vpack.c.bf16 %v849, %v848
        %v869 = vpack.c.bf16 %v851, %v850
        %v870 = vpack.c.bf16 %v853, %v852
        %v871 = vpack.c.bf16 %v855, %v854
        %v888 = vunpack.c.l.b16 %v856
        %v889 = vunpack.c.h.b16 %v856
        %v890 = vunpack.c.l.b16 %v857
        %v891 = vunpack.c.h.b16 %v857
        %v892 = vunpack.c.l.b16 %v858
        %v893 = vunpack.c.h.b16 %v858
        %v894 = vunpack.c.l.b16 %v859
        %v895 = vunpack.c.h.b16 %v859
        %v896 = vunpack.c.l.b16 %v860
        %v897 = vunpack.c.h.b16 %v860
        %v898 = vunpack.c.l.b16 %v861
        %v899 = vunpack.c.h.b16 %v861
        %v900 = vunpack.c.l.b16 %v862
        %v901 = vunpack.c.h.b16 %v862
        %v902 = vunpack.c.l.b16 %v863
        %v903 = vunpack.c.h.b16 %v863
        %v904 = vunpack.c.l.b16 %v864
        %v905 = vunpack.c.h.b16 %v864
        %v906 = vunpack.c.l.b16 %v865
        %v907 = vunpack.c.h.b16 %v865
        %v908 = vunpack.c.l.b16 %v866
        %v909 = vunpack.c.h.b16 %v866
        %v910 = vunpack.c.l.b16 %v867
        %v911 = vunpack.c.h.b16 %v867
        %v912 = vunpack.c.l.b16 %v868
        %v913 = vunpack.c.h.b16 %v868
        %v914 = vunpack.c.l.b16 %v869
        %v915 = vunpack.c.h.b16 %v869
        %v916 = vunpack.c.l.b16 %v870
        %v917 = vunpack.c.h.b16 %v870
        %v918 = vunpack.c.l.b16 %v871
        %v919 = vunpack.c.h.b16 %v871
        %v920 = vpack.c.b16 %v888, %v888
        %v921 = vpack.c.b16 %v889, %v889
        %v922 = vpack.c.b16 %v890, %v890
        %v923 = vpack.c.b16 %v891, %v891
        %v924 = vpack.c.b16 %v892, %v892
        %v925 = vpack.c.b16 %v893, %v893
        %v926 = vpack.c.b16 %v894, %v894
        %v927 = vpack.c.b16 %v895, %v895
        %v928 = vpack.c.b16 %v896, %v896
        %v929 = vpack.c.b16 %v897, %v897
        %v930 = vpack.c.b16 %v898, %v898
        %v931 = vpack.c.b16 %v899, %v899
        %v932 = vpack.c.b16 %v900, %v900
        %v933 = vpack.c.b16 %v901, %v901
        %v934 = vpack.c.b16 %v902, %v902
        %v935 = vpack.c.b16 %v903, %v903
        %v936 = vpack.c.b16 %v904, %v904
        %v937 = vpack.c.b16 %v905, %v905
        %v938 = vpack.c.b16 %v906, %v906
        %v939 = vpack.c.b16 %v907, %v907
        %v940 = vpack.c.b16 %v908, %v908
        %v941 = vpack.c.b16 %v909, %v909
        %v942 = vpack.c.b16 %v910, %v910
        %v943 = vpack.c.b16 %v911, %v911
        %v944 = vpack.c.b16 %v912, %v912
        %v945 = vpack.c.b16 %v913, %v913
        %v946 = vpack.c.b16 %v914, %v914
        %v947 = vpack.c.b16 %v915, %v915
        %v948 = vpack.c.b16 %v916, %v916
        %v949 = vpack.c.b16 %v917, %v917
        %v950 = vpack.c.b16 %v918, %v918
        %v951 = vpack.c.b16 %v919, %v919
        %vm984 = vcmask 60416
        %985 = vst.msk [vmem:[%s244] sm:$0xf] %vm984, %v920
        %986 = vst.msk [vmem:[%s244 + $0x4] sm:$0xf] %vm984, %v921
        %987 = vst.msk [vmem:[%s244 + $0x8] sm:$0xf] %vm984, %v922
        %988 = vst.msk [vmem:[%s244 + $0xc] sm:$0xf] %vm984, %v923
        %989 = vst.msk [vmem:[%s244 + $0x10] sm:$0xf] %vm984, %v924
        %990 = vst.msk [vmem:[%s244 + $0x14] sm:$0xf] %vm984, %v925
        %991 = vst.msk [vmem:[%s244 + $0x18] sm:$0xf] %vm984, %v926
        %992 = vst.msk [vmem:[%s244 + $0x1c] sm:$0xf] %vm984, %v927
        %993 = vst.msk [vmem:[%s244 + $0x20] sm:$0xf] %vm984, %v928
        %994 = vst.msk [vmem:[%s244 + $0x24] sm:$0xf] %vm984, %v929
        %995 = vst.msk [vmem:[%s244 + $0x28] sm:$0xf] %vm984, %v930
        %996 = vst.msk [vmem:[%s244 + $0x2c] sm:$0xf] %vm984, %v931
        %997 = vst.msk [vmem:[%s244 + $0x30] sm:$0xf] %vm984, %v932
        %998 = vst.msk [vmem:[%s244 + $0x34] sm:$0xf] %vm984, %v933
        %999 = vst.msk [vmem:[%s244 + $0x38] sm:$0xf] %vm984, %v934
        %1000 = vst.msk [vmem:[%s244 + $0x3c] sm:$0xf] %vm984, %v935
        %1001 = vst.msk [vmem:[%s244 + $0x40] sm:$0xf] %vm984, %v936
        %1002 = vst.msk [vmem:[%s244 + $0x44] sm:$0xf] %vm984, %v937
        %1003 = vst.msk [vmem:[%s244 + $0x48] sm:$0xf] %vm984, %v938
        %1004 = vst.msk [vmem:[%s244 + $0x4c] sm:$0xf] %vm984, %v939
        %1005 = vst.msk [vmem:[%s244 + $0x50] sm:$0xf] %vm984, %v940
        %1006 = vst.msk [vmem:[%s244 + $0x54] sm:$0xf] %vm984, %v941
        %1007 = vst.msk [vmem:[%s244 + $0x58] sm:$0xf] %vm984, %v942
        %1008 = vst.msk [vmem:[%s244 + $0x5c] sm:$0xf] %vm984, %v943
        %1009 = vst.msk [vmem:[%s244 + $0x60] sm:$0xf] %vm984, %v944
        %1010 = vst.msk [vmem:[%s244 + $0x64] sm:$0xf] %vm984, %v945
        %1011 = vst.msk [vmem:[%s244 + $0x68] sm:$0xf] %vm984, %v946
        %1012 = vst.msk [vmem:[%s244 + $0x6c] sm:$0xf] %vm984, %v947
        %1013 = vst.msk [vmem:[%s244 + $0x70] sm:$0xf] %vm984, %v948
        %1014 = vst.msk [vmem:[%s244 + $0x74] sm:$0xf] %vm984, %v949
        %1015 = vst.msk [vmem:[%s244 + $0x78] sm:$0xf] %vm984, %v950
        %1016 = vst.msk [vmem:[%s244 + $0x7c] sm:$0xf] %vm984, %v951
      $region44: #{bottleneck_forward.3} parent=35 // pred_fallthru
        _
      %s1017 = smul.u32 32, %s19
      %p1018 = scmp.lt.s32.totalorder %s1017, 63
      %s1019 = scalar_select %p1018, %s1017, 63
      %s1020 = smul.addr %s1019, 4
      %s1021 = scalar_lea.vmem %s4, %s1020
      // Predicated region
      $region45: #{bottleneck_forward.3} parent=35 // pred_check
        %p1022 = pneg %p141
      $region46: #{bottleneck_forward.3} parent=35 // pred_check_branch
        %1024 = sbr.rel (%p1022) target = $region48
      $region47: #{bottleneck_forward.3} parent=35 // pred_region
        %s1025 = smul.u32 32, %s19
      $region48: #{bottleneck_forward.3} parent=35 // pred_fallthru
        _
    $region36: #{bottleneck_forward.3} parent=5 // pred_fallthru
      _
    %p1026 = scmp.le.s32.totalorder 2, %s10
    // Predicated region
    $region49: #{bottleneck_forward.3} parent=5 // pred_check
      %p1027 = pneg %p1026
    $region50: #{bottleneck_forward.3} parent=5 // pred_check_branch
      %1029 = sbr.rel (%p1027) target = $region52
    $region51: #{bottleneck_forward.3} parent=5 // pred_region
      %s1030 = ssub.s32 %s10, 2
      // Predicated region
      $region53: #{bottleneck_forward.3} parent=51 // pred_check
        %p1031 = pneg %p147
      $region54: #{bottleneck_forward.3} parent=51 // pred_check_branch
        %1033 = sbr.rel (%p1031) target = $region56
      $region55: #{bottleneck_forward.3} parent=51 // pred_region
        %s1034 = smul.u32 32, %s21
        %p1035 = scmp.lt.s32.totalorder %s1034, 63
        %s1036 = scalar_select %p1035, %s1034, 63
        %s1037 = smul.addr %s1036, 4
        %s1038 = scalar_lea.vmem %s4, %s1037
      $region56: #{bottleneck_forward.3} parent=51 // pred_fallthru
        _
    $region52: #{bottleneck_forward.3} parent=5 // pred_fallthru
      _
  $region6: #{bottleneck_forward.3} parent=0 // loop_footer
    %s14 = sadd.s32 1, %s10
  $region7: #{bottleneck_forward.3} parent=0 // loop_footer_branch
    %9 = sbr.rel target = $region3
  $region8: #{bottleneck_forward.3} parent=0 // loop_exit
    _

// kernel: bottleneck_forward.4
$region0: #{bottleneck_forward.4}
  #allocation0 [shape = 'u32[]', space=smem, size = 0x4, offset = 0x4, fixed_abs, tag = 'smem constant byte address 0x4 - core index']
  #allocation1 [shape = 'u32[144,128]{1,0:T(1,128)}', space=vmem, size = 0x12000, scoped, tag = 'internal scratch']
  %s0 = inlined_call_operand.vmem [shape: bf16[2,9,9,8], index: 0, kind: input, shape index: {}]
  %s1 = inlined_call_operand.vmem [shape: bf16[2,9,9,8], index: 1, kind: input, shape index: {}]
  %s2 = inlined_call_operand.vmem [shape: bf16[2,9,9,8], index: 2, kind: input, shape index: {}]
  %s3 = inlined_call_operand.vmem [shape: bf16[2,9,9,8], index: 3, kind: input, shape index: {}]
  %s4 = inlined_call_operand.vmem [shape: bf16[9,8,8], index: 4, kind: input, shape index: {}]
  %s5 = inlined_call_operand.vmem [shape: f32[1,8], index: 5, kind: input, shape index: {}]
  %s6 = inlined_call_operand.vmem [shape: f32[1,8], index: 6, kind: input, shape index: {}]
  %s7 = inlined_call_operand.vmem [shape: bf16[2,8,8,8], index: 7, kind: output, shape index: {}]
  %s8 = sld [smem:[#allocation0]]
  $region61: #{bottleneck_forward.4} parent=0
    _
  %s10 = ssub.s32 1, %s8
  %s11 = scalar_select 0, %s10, %s8
  loop: start=0, step=1, limit=4
  $region2: #{bottleneck_forward.4} parent=0 // loop_pre_header
    _
  $region3: #{bottleneck_forward.4} parent=0 // loop_header
    %s13 = sphi 0, %s17
    %p14 = scmp.ge.s32.totalorder %s13, 4
    %s23 = sphi 0, %s25
    %s26 = sphi 0, %s23
    %s27 = sphi 0, %s26
    %s43 = sphi 0, %s27
    %s49 = sphi 0, %s51
    %s52 = sphi 0, %s49
    %s53 = sphi 0, %s52
    %s69 = sphi 0, %s53
    %s75 = sphi 0, %s77
    %s78 = sphi 0, %s75
    %s79 = sphi 0, %s78
    %s95 = sphi 0, %s79
    %s101 = sphi 0, %s103
    %s104 = sphi 0, %s101
    %s105 = sphi 0, %s104
    %s121 = sphi 0, %s105
    %s125 = sphi 0, %s125
    %s127 = sphi 0, %s125
    %s128 = sphi 0, %s127
    %s142 = sphi 0, %s128
    %s146 = sphi 0, %s146
    %s148 = sphi 0, %s146
    %s149 = sphi 0, %s148
    %s163 = sphi 0, %s149
    %s167 = sphi 0, %s167
    %s169 = sphi 0, %s167
    %s170 = sphi 0, %s169
    %s184 = sphi 0, %s170
    %s190 = sphi 0, %s192
    %s193 = sphi 0, %s190
    %s194 = sphi 0, %s193
    %s210 = sphi 0, %s194
  $region4: #{bottleneck_forward.4} parent=0 // loop_header_branch
    %16 = sbr.rel (%p14) target = $region8
  $region5: #{bottleneck_forward.4} parent=0 // loop_body
    %s18 = ssub.s32 %s13, 1
    %s19 = ssub.s32 %s13, 2
    %s20 = sadd.s32 %s13, 1
    %s21 = ssub.s32 %s13, %s20
    %p22 = scmp.eq.s32.totalorder %s21, 0
    %s24 = sadd.s32 %s23, 1
    %s25 = scalar_select %p22, %s23, %s24
    %p28 = pneg %p22
    %p29 = scmp.eq.s32.totalorder %s13, 1
    %p30 = por %p28, %p29
    %p31 = scmp.ne.s32.totalorder %s23, %s26
    %p32 = scmp.eq.s32.totalorder %s13, 0
    %p33 = por %p31, %p32
    %p34 = scmp.ne.s32.totalorder %s23, %s26
    %p35 = scmp.eq.s32.totalorder %s18, 1
    %p36 = por %p34, %p35
    %p37 = scmp.ne.s32.totalorder %s26, %s27
    %p38 = scmp.eq.s32.totalorder %s18, 0
    %p39 = por %p37, %p38
    %p40 = scmp.ne.s32.totalorder %s26, %s27
    %p41 = scmp.eq.s32.totalorder %s19, 1
    %p42 = por %p40, %p41
    %p44 = scmp.ne.s32.totalorder %s27, %s43
    %p45 = scmp.eq.s32.totalorder %s19, 0
    %p46 = por %p44, %p45
    %s47 = ssub.s32 %s13, %s20
    %p48 = scmp.eq.s32.totalorder %s47, 0
    %s50 = sadd.s32 %s49, 1
    %s51 = scalar_select %p48, %s49, %s50
    %p54 = pneg %p48
    %p55 = scmp.eq.s32.totalorder %s13, 1
    %p56 = por %p54, %p55
    %p57 = scmp.ne.s32.totalorder %s49, %s52
    %p58 = scmp.eq.s32.totalorder %s13, 0
    %p59 = por %p57, %p58
    %p60 = scmp.ne.s32.totalorder %s49, %s52
    %p61 = scmp.eq.s32.totalorder %s18, 1
    %p62 = por %p60, %p61
    %p63 = scmp.ne.s32.totalorder %s52, %s53
    %p64 = scmp.eq.s32.totalorder %s18, 0
    %p65 = por %p63, %p64
    %p66 = scmp.ne.s32.totalorder %s52, %s53
    %p67 = scmp.eq.s32.totalorder %s19, 1
    %p68 = por %p66, %p67
    %p70 = scmp.ne.s32.totalorder %s53, %s69
    %p71 = scmp.eq.s32.totalorder %s19, 0
    %p72 = por %p70, %p71
    %s73 = ssub.s32 %s13, %s20
    %p74 = scmp.eq.s32.totalorder %s73, 0
    %s76 = sadd.s32 %s75, 1
    %s77 = scalar_select %p74, %s75, %s76
    %p80 = pneg %p74
    %p81 = scmp.eq.s32.totalorder %s13, 1
    %p82 = por %p80, %p81
    %p83 = scmp.ne.s32.totalorder %s75, %s78
    %p84 = scmp.eq.s32.totalorder %s13, 0
    %p85 = por %p83, %p84
    %p86 = scmp.ne.s32.totalorder %s75, %s78
    %p87 = scmp.eq.s32.totalorder %s18, 1
    %p88 = por %p86, %p87
    %p89 = scmp.ne.s32.totalorder %s78, %s79
    %p90 = scmp.eq.s32.totalorder %s18, 0
    %p91 = por %p89, %p90
    %p92 = scmp.ne.s32.totalorder %s78, %s79
    %p93 = scmp.eq.s32.totalorder %s19, 1
    %p94 = por %p92, %p93
    %p96 = scmp.ne.s32.totalorder %s79, %s95
    %p97 = scmp.eq.s32.totalorder %s19, 0
    %p98 = por %p96, %p97
    %s99 = ssub.s32 %s13, %s20
    %p100 = scmp.eq.s32.totalorder %s99, 0
    %s102 = sadd.s32 %s101, 1
    %s103 = scalar_select %p100, %s101, %s102
    %p106 = pneg %p100
    %p107 = scmp.eq.s32.totalorder %s13, 1
    %p108 = por %p106, %p107
    %p109 = scmp.ne.s32.totalorder %s101, %s104
    %p110 = scmp.eq.s32.totalorder %s13, 0
    %p111 = por %p109, %p110
    %p112 = scmp.ne.s32.totalorder %s101, %s104
    %p113 = scmp.eq.s32.totalorder %s18, 1
    %p114 = por %p112, %p113
    %p115 = scmp.ne.s32.totalorder %s104, %s105
    %p116 = scmp.eq.s32.totalorder %s18, 0
    %p117 = por %p115, %p116
    %p118 = scmp.ne.s32.totalorder %s104, %s105
    %p119 = scmp.eq.s32.totalorder %s19, 1
    %p120 = por %p118, %p119
    %p122 = scmp.ne.s32.totalorder %s105, %s121
    %p123 = scmp.eq.s32.totalorder %s19, 0
    %p124 = por %p122, %p123
    %s126 = sadd.s32 %s125, 1
    %p129 = scmp.eq.s32.totalorder %s13, 1
    %p130 = scmp.ne.s32.totalorder %s125, %s127
    %p131 = scmp.eq.s32.totalorder %s13, 0
    %p132 = por %p130, %p131
    %p133 = scmp.ne.s32.totalorder %s125, %s127
    %p134 = scmp.eq.s32.totalorder %s18, 1
    %p135 = por %p133, %p134
    %p136 = scmp.ne.s32.totalorder %s127, %s128
    %p137 = scmp.eq.s32.totalorder %s18, 0
    %p138 = por %p136, %p137
    %p139 = scmp.ne.s32.totalorder %s127, %s128
    %p140 = scmp.eq.s32.totalorder %s19, 1
    %p141 = por %p139, %p140
    %p143 = scmp.ne.s32.totalorder %s128, %s142
    %p144 = scmp.eq.s32.totalorder %s19, 0
    %p145 = por %p143, %p144
    %s147 = sadd.s32 %s146, 1
    %p150 = scmp.eq.s32.totalorder %s13, 1
    %p151 = scmp.ne.s32.totalorder %s146, %s148
    %p152 = scmp.eq.s32.totalorder %s13, 0
    %p153 = por %p151, %p152
    %p154 = scmp.ne.s32.totalorder %s146, %s148
    %p155 = scmp.eq.s32.totalorder %s18, 1
    %p156 = por %p154, %p155
    %p157 = scmp.ne.s32.totalorder %s148, %s149
    %p158 = scmp.eq.s32.totalorder %s18, 0
    %p159 = por %p157, %p158
    %p160 = scmp.ne.s32.totalorder %s148, %s149
    %p161 = scmp.eq.s32.totalorder %s19, 1
    %p162 = por %p160, %p161
    %p164 = scmp.ne.s32.totalorder %s149, %s163
    %p165 = scmp.eq.s32.totalorder %s19, 0
    %p166 = por %p164, %p165
    %s168 = sadd.s32 %s167, 1
    %p171 = scmp.eq.s32.totalorder %s13, 1
    %p172 = scmp.ne.s32.totalorder %s167, %s169
    %p173 = scmp.eq.s32.totalorder %s13, 0
    %p174 = por %p172, %p173
    %p175 = scmp.ne.s32.totalorder %s167, %s169
    %p176 = scmp.eq.s32.totalorder %s18, 1
    %p177 = por %p175, %p176
    %p178 = scmp.ne.s32.totalorder %s169, %s170
    %p179 = scmp.eq.s32.totalorder %s18, 0
    %p180 = por %p178, %p179
    %p181 = scmp.ne.s32.totalorder %s169, %s170
    %p182 = scmp.eq.s32.totalorder %s19, 1
    %p183 = por %p181, %p182
    %p185 = scmp.ne.s32.totalorder %s170, %s184
    %p186 = scmp.eq.s32.totalorder %s19, 0
    %p187 = por %p185, %p186
    %s188 = ssub.s32 %s13, %s20
    %p189 = scmp.eq.s32.totalorder %s188, 0
    %s191 = sadd.s32 %s190, 1
    %s192 = scalar_select %p189, %s190, %s191
    %p195 = pneg %p189
    %p196 = scmp.eq.s32.totalorder %s13, 1
    %p197 = por %p195, %p196
    %p198 = scmp.ne.s32.totalorder %s190, %s193
    %p199 = scmp.eq.s32.totalorder %s13, 0
    %p200 = por %p198, %p199
    %p201 = scmp.ne.s32.totalorder %s190, %s193
    %p202 = scmp.eq.s32.totalorder %s18, 1
    %p203 = por %p201, %p202
    %p204 = scmp.ne.s32.totalorder %s193, %s194
    %p205 = scmp.eq.s32.totalorder %s18, 0
    %p206 = por %p204, %p205
    %p207 = scmp.ne.s32.totalorder %s193, %s194
    %p208 = scmp.eq.s32.totalorder %s19, 1
    %p209 = por %p207, %p208
    %p211 = scmp.ne.s32.totalorder %s194, %s210
    %p212 = scmp.eq.s32.totalorder %s19, 0
    %p213 = por %p211, %p212
    %p214 = scmp.le.s32.totalorder 1, %s13
    %p215 = scmp.lt.s32.totalorder %s13, 3
    %p216 = pnand %p214, %p215
    %p217 = pneg %p216
    // Predicated region
    $region9: #{bottleneck_forward.4} parent=5 // pred_check
      _
    $region10: #{bottleneck_forward.4} parent=5 // pred_check_branch
      %219 = sbr.rel (%p216) target = $region12
    $region11: #{bottleneck_forward.4} parent=5 // pred_region
      %s220 = ssub.s32 %s13, 1
      // Predicated region
      $region13: #{bottleneck_forward.4} parent=11 // pred_check
        %p221 = pneg %p138
      $region14: #{bottleneck_forward.4} parent=11 // pred_check_branch
        %223 = sbr.rel (%p221) target = $region16
      $region15: #{bottleneck_forward.4} parent=11 // pred_region
        _
      $region16: #{bottleneck_forward.4} parent=11 // pred_fallthru
        _
      // Predicated region
      $region17: #{bottleneck_forward.4} parent=11 // pred_check
        %p224 = pneg %p159
      $region18: #{bottleneck_forward.4} parent=11 // pred_check_branch
        %226 = sbr.rel (%p224) target = $region20
      $region19: #{bottleneck_forward.4} parent=11 // pred_region
        _
      $region20: #{bottleneck_forward.4} parent=11 // pred_fallthru
        _
      // Predicated region
      $region21: #{bottleneck_forward.4} parent=11 // pred_check
        %p227 = pneg %p180
      $region22: #{bottleneck_forward.4} parent=11 // pred_check_branch
        %229 = sbr.rel (%p227) target = $region24
      $region23: #{bottleneck_forward.4} parent=11 // pred_region
        _
      $region24: #{bottleneck_forward.4} parent=11 // pred_fallthru
        _
    $region12: #{bottleneck_forward.4} parent=5 // pred_fallthru
      _
    %p230 = scmp.lt.s32.totalorder %s13, 2
    // Predicated region
    $region25: #{bottleneck_forward.4} parent=5 // pred_check
      %p231 = pneg %p230
    $region26: #{bottleneck_forward.4} parent=5 // pred_check_branch
      %233 = sbr.rel (%p231) target = $region28
    $region27: #{bottleneck_forward.4} parent=5 // pred_region
      // Predicated region
      $region29: #{bottleneck_forward.4} parent=27 // pred_check
        %p234 = pneg %p33
      $region30: #{bottleneck_forward.4} parent=27 // pred_check_branch
        %236 = sbr.rel (%p234) target = $region32
      $region31: #{bottleneck_forward.4} parent=27 // pred_region
        %p237 = scmp.lt.s32.totalorder %s13, 1
        %s238 = scalar_select %p237, %s13, 1
        %s239 = smul.addr %s238, 18
        %s240 = smul.addr %s239, 4
        %s241 = scalar_lea.vmem %s0, %s240
      $region32: #{bottleneck_forward.4} parent=27 // pred_fallthru
        _
      // Predicated region
      $region33: #{bottleneck_forward.4} parent=27 // pred_check
        %p242 = pneg %p59
      $region34: #{bottleneck_forward.4} parent=27 // pred_check_branch
        %244 = sbr.rel (%p242) target = $region36
      $region35: #{bottleneck_forward.4} parent=27 // pred_region
        %p245 = scmp.lt.s32.totalorder %s13, 1
        %s246 = scalar_select %p245, %s13, 1
        %s247 = smul.addr %s246, 18
        %s248 = smul.addr %s247, 4
        %s249 = scalar_lea.vmem %s1, %s248
      $region36: #{bottleneck_forward.4} parent=27 // pred_fallthru
        _
      // Predicated region
      $region37: #{bottleneck_forward.4} parent=27 // pred_check
        %p250 = pneg %p85
      $region38: #{bottleneck_forward.4} parent=27 // pred_check_branch
        %252 = sbr.rel (%p250) target = $region40
      $region39: #{bottleneck_forward.4} parent=27 // pred_region
        %p253 = scmp.lt.s32.totalorder %s13, 1
        %s254 = scalar_select %p253, %s13, 1
        %s255 = smul.addr %s254, 18
        %s256 = smul.addr %s255, 4
        %s257 = scalar_lea.vmem %s2, %s256
      $region40: #{bottleneck_forward.4} parent=27 // pred_fallthru
        _
      // Predicated region
      $region41: #{bottleneck_forward.4} parent=27 // pred_check
        %p258 = pneg %p111
      $region42: #{bottleneck_forward.4} parent=27 // pred_check_branch
        %260 = sbr.rel (%p258) target = $region44
      $region43: #{bottleneck_forward.4} parent=27 // pred_region
        %p261 = scmp.lt.s32.totalorder %s13, 1
        %s262 = scalar_select %p261, %s13, 1
        %s263 = smul.addr %s262, 18
        %s264 = smul.addr %s263, 4
        %s265 = scalar_lea.vmem %s3, %s264
      $region44: #{bottleneck_forward.4} parent=27 // pred_fallthru
        _
    $region28: #{bottleneck_forward.4} parent=5 // pred_fallthru
      _
    %p266 = scmp.le.s32.totalorder 1, %s13
    %p267 = scmp.lt.s32.totalorder %s13, 3
    %p268 = pnand %p266, %p267
    %p269 = pneg %p268
    // Predicated region
    $region45: #{bottleneck_forward.4} parent=5 // pred_check
      _
    $region46: #{bottleneck_forward.4} parent=5 // pred_check_branch
      %271 = sbr.rel (%p268) target = $region48
    $region47: #{bottleneck_forward.4} parent=5 // pred_region
      %s272 = ssub.s32 %s13, 1
      %p273 = scmp.lt.s32.totalorder %s18, 1
      %s274 = scalar_select %p273, %s18, 1
      %s275 = smul.addr %s274, 18
      %s276 = smul.addr %s275, 4
      %s277 = scalar_lea.vmem %s0, %s276
      %p278 = pneg %p39
      %p279 = pneg %p36
      %p280 = scmp.lt.s32.totalorder %s18, 1
      %s281 = scalar_select %p280, %s18, 1
      %s282 = smul.addr %s281, 18
      %s283 = smul.addr %s282, 4
      %s284 = scalar_lea.vmem %s1, %s283
      %p285 = pneg %p65
      %p286 = pneg %p62
      %p287 = scmp.lt.s32.totalorder %s18, 1
      %s288 = scalar_select %p287, %s18, 1
      %s289 = smul.addr %s288, 18
      %s290 = smul.addr %s289, 4
      %s291 = scalar_lea.vmem %s2, %s290
      %p292 = pneg %p91
      %p293 = pneg %p88
      %p294 = scmp.lt.s32.totalorder %s18, 1
      %s295 = scalar_select %p294, %s18, 1
      %s296 = smul.addr %s295, 18
      %s297 = smul.addr %s296, 4
      %s298 = scalar_lea.vmem %s3, %s297
      %p299 = pneg %p117
      %p300 = pneg %p114
      %p301 = pneg %p138
      %p302 = pneg %p135
      %p303 = pneg %p159
      %p304 = pneg %p156
      %p305 = pneg %p180
      %p306 = pneg %p177
      %p307 = pneg %p206
      %p308 = pneg %p203
      %p309 = scmp.lt.s32.totalorder %s18, 1
      %s310 = scalar_select %p309, %s18, 1
      %s311 = smul.addr %s310, 8
      %s312 = smul.addr %s311, 4
      %s313 = scalar_lea.vmem %s7, %s312
      %p314 = scmp.lt.s32.totalorder %s18, 1
      %s315 = scalar_select %p314, %s18, 1
      %s316 = smul.addr %s315, 18
      %s317 = smul.addr %s316, 4
      %s318 = scalar_lea.vmem %s0, %s317
      %p319 = scmp.lt.s32.totalorder %s18, 1
      %s320 = scalar_select %p319, %s18, 1
      %s321 = smul.addr %s320, 18
      %s322 = smul.addr %s321, 4
      %s323 = scalar_lea.vmem %s1, %s322
      %p324 = scmp.lt.s32.totalorder %s18, 1
      %s325 = scalar_select %p324, %s18, 1
      %s326 = smul.addr %s325, 18
      %s327 = smul.addr %s326, 4
      %s328 = scalar_lea.vmem %s2, %s327
      %p329 = scmp.lt.s32.totalorder %s18, 1
      %s330 = scalar_select %p329, %s18, 1
      %s331 = smul.addr %s330, 18
      %s332 = smul.addr %s331, 4
      %s333 = scalar_lea.vmem %s3, %s332
      %p334 = scmp.lt.s32.totalorder %s18, 1
      %s335 = scalar_select %p334, %s18, 1
      %s336 = smul.addr %s335, 8
      %s337 = smul.addr %s336, 4
      %s338 = scalar_lea.vmem %s7, %s337
      %v340 = vld [vmem:[%s318] sm:$0xf]
      %v341 = vld [vmem:[%s318 + $0x4] sm:$0x1]
      %v342 = vld [vmem:[%s318 + $0x8] sm:$0xf]
      %v343 = vld [vmem:[%s318 + $0xc] sm:$0x1]
      %v344 = vld [vmem:[%s318 + $0x10] sm:$0xf]
      %v345 = vld [vmem:[%s318 + $0x14] sm:$0x1]
      %v346 = vld [vmem:[%s318 + $0x18] sm:$0xf]
      %v347 = vld [vmem:[%s318 + $0x1c] sm:$0x1]
      %v348 = vld [vmem:[%s318 + $0x20] sm:$0xf]
      %v349 = vld [vmem:[%s318 + $0x24] sm:$0x1]
      %v350 = vld [vmem:[%s318 + $0x28] sm:$0xf]
      %v351 = vld [vmem:[%s318 + $0x2c] sm:$0x1]
      %v352 = vld [vmem:[%s318 + $0x30] sm:$0xf]
      %v353 = vld [vmem:[%s318 + $0x34] sm:$0x1]
      %v354 = vld [vmem:[%s318 + $0x38] sm:$0xf]
      %v355 = vld [vmem:[%s318 + $0x3c] sm:$0x1]
      %v356 = vld [vmem:[%s318 + $0x40] sm:$0xf]
      %v357 = vld [vmem:[%s318 + $0x44] sm:$0x1]
      %v358 = vld [vmem:[%s323] sm:$0xf]
      %v359 = vld [vmem:[%s323 + $0x8] sm:$0xf]
      %v360 = vld [vmem:[%s323 + $0x10] sm:$0xf]
      %v361 = vld [vmem:[%s323 + $0x18] sm:$0xf]
      %v362 = vld [vmem:[%s323 + $0x20] sm:$0xf]
      %v363 = vld [vmem:[%s323 + $0x28] sm:$0xf]
      %v364 = vld [vmem:[%s323 + $0x30] sm:$0xf]
      %v365 = vld [vmem:[%s323 + $0x38] sm:$0xf]
      %v366 = vld [vmem:[%s323 + $0x40] sm:$0xf]
      %v367 = vld [vmem:[%s328] sm:$0xf]
      %v368 = vld [vmem:[%s328 + $0x4] sm:$0x1]
      %v369 = vld [vmem:[%s328 + $0x8] sm:$0xf]
      %v370 = vld [vmem:[%s328 + $0xc] sm:$0x1]
      %v371 = vld [vmem:[%s328 + $0x10] sm:$0xf]
      %v372 = vld [vmem:[%s328 + $0x14] sm:$0x1]
      %v373 = vld [vmem:[%s328 + $0x18] sm:$0xf]
      %v374 = vld [vmem:[%s328 + $0x1c] sm:$0x1]
      %v375 = vld [vmem:[%s328 + $0x20] sm:$0xf]
      %v376 = vld [vmem:[%s328 + $0x24] sm:$0x1]
      %v377 = vld [vmem:[%s328 + $0x28] sm:$0xf]
      %v378 = vld [vmem:[%s328 + $0x2c] sm:$0x1]
      %v379 = vld [vmem:[%s328 + $0x30] sm:$0xf]
      %v380 = vld [vmem:[%s328 + $0x34] sm:$0x1]
      %v381 = vld [vmem:[%s328 + $0x38] sm:$0xf]
      %v382 = vld [vmem:[%s328 + $0x3c] sm:$0x1]
      %v383 = vld [vmem:[%s333] sm:$0xf]
      %v384 = vld [vmem:[%s333 + $0x8] sm:$0xf]
      %v385 = vld [vmem:[%s333 + $0x10] sm:$0xf]
      %v386 = vld [vmem:[%s333 + $0x18] sm:$0xf]
      %v387 = vld [vmem:[%s333 + $0x20] sm:$0xf]
      %v388 = vld [vmem:[%s333 + $0x28] sm:$0xf]
      %v389 = vld [vmem:[%s333 + $0x30] sm:$0xf]
      %v390 = vld [vmem:[%s333 + $0x38] sm:$0xf]
      %v391 = vld [vmem:[%s4] sm:$0xf]
      %s392 = scalar_lea.vmem %s4, 4
      %v393 = vld [vmem:[%s392] sm:$0xf]
      %v402 = vunpack.c.l.b16 %v358
      %v403 = vunpack.c.l.b16 %v359
      %v404 = vunpack.c.l.b16 %v360
      %v405 = vunpack.c.l.b16 %v361
      %v406 = vunpack.c.l.b16 %v362
      %v407 = vunpack.c.l.b16 %v363
      %v408 = vunpack.c.l.b16 %v364
      %v409 = vunpack.c.l.b16 %v365
      %v410 = vpack.c.b16 %v403, %v402
      %v411 = vpack.c.b16 %v405, %v404
      %v412 = vpack.c.b16 %v407, %v406
      %v413 = vpack.c.b16 %v409, %v408
      %vm414 = vcmask 64512
      %v416 = vsel %vm414, %v410, 0
      %v419 = vsel %vm414, %v411, 0
      %v422 = vsel %vm414, %v412, 0
      %v425 = vsel %vm414, %v413, 0
      %vm427 = vcmask 1043456
      %v429 = vsel %vm427, %v393, 0
      %431 = vmatprep.subr.bf16.mxu0 0
      %432 = vmatpush1.bf16.msra.mxu0 0
      %433 = vmatprep.subr.bf16.mxu0 0
      %434 = vmatpush1.bf16.msra.mxu0 0
      %435 = vmatprep.subr.bf16.mxu0 0
      %436 = vmatpush1.bf16.msra.mxu0 0
      %437 = vmatprep.subr.bf16.mxu0 0
      %438 = vmatpush1.bf16.msra.mxu0 0
      %439 = vmatprep.subr.bf16.mxu0 0
      %440 = vmatpush1.bf16.msra.mxu0 0
      %441 = vmatprep.subr.bf16.mxu0 0
      %442 = vmatpush1.bf16.msra.mxu0 0
      %443 = vmatprep.subr.bf16.mxu0 0
      %444 = vmatpush1.bf16.msra.mxu0 0
      %445 = vmatprep.subr.bf16.mxu0 0
      %446 = vmatpush1.bf16.msra.mxu0 %v429
      %447 = vmatprep.subr.bf16.mxu0 0
      %448 = vmatpush2.bf16.msra.mxu0 0
      %449 = vmatprep.subr.bf16.mxu0 0
      %450 = vmatpush2.bf16.msra.mxu0 0
      %451 = vmatprep.subr.bf16.mxu0 0
      %452 = vmatpush2.bf16.msra.mxu0 0
      %453 = vmatprep.subr.bf16.mxu0 0
      %454 = vmatpush2.bf16.msra.mxu0 0
      %455 = vmatprep.subr.bf16.mxu0 0
      %456 = vmatpush2.bf16.msra.mxu0 0
      %457 = vmatprep.subr.bf16.mxu0 0
      %458 = vmatpush2.bf16.msra.mxu0 0
      %459 = vmatprep.subr.bf16.mxu0 0
      %460 = vmatpush2.bf16.msra.mxu0 0
      %461 = vmatprep.subr.bf16.mxu0 0
      %462 = vmatpush2.bf16.msra.mxu0 0
      %463 = vmatprep.mubr.bf16.mxu0 0
      %464 = vmatmul.mubr.bf16.gmra.mxu0 %v416
      %v465 = vpop.f32.mrf.mxu0
      %v466 = vadd.f32 0.0, %v465
      %v467 = vpop.f32.mrf.mxu0
      %v468 = vpop.f32.mrf.mxu0
      %v469 = vadd.f32 0.0, %v468
      %v470 = vpop.f32.mrf.mxu0
      %471 = vmatprep.mubr.bf16.mxu0 0
      %472 = vmatmul.mubr.bf16.gmra.mxu0 %v419
      %v473 = vpop.f32.mrf.mxu0
      %v474 = vadd.f32 0.0, %v473
      %v475 = vpop.f32.mrf.mxu0
      %v476 = vpop.f32.mrf.mxu0
      %v477 = vadd.f32 0.0, %v476
      %v478 = vpop.f32.mrf.mxu0
      %479 = vmatprep.mubr.bf16.mxu0 0
      %480 = vmatmul.mubr.bf16.gmra.mxu0 %v422
      %v481 = vpop.f32.mrf.mxu0
      %v482 = vadd.f32 0.0, %v481
      %v483 = vpop.f32.mrf.mxu0
      %v484 = vpop.f32.mrf.mxu0
      %v485 = vadd.f32 0.0, %v484
      %v486 = vpop.f32.mrf.mxu0
      %487 = vmatprep.mubr.bf16.mxu0 0
      %488 = vmatmul.mubr.bf16.gmra.mxu0 %v425
      %v489 = vpop.f32.mrf.mxu0
      %v490 = vadd.f32 0.0, %v489
      %v491 = vpop.f32.mrf.mxu0
      %v492 = vpop.f32.mrf.mxu0
      %v493 = vadd.f32 0.0, %v492
      %v494 = vpop.f32.mrf.mxu0
      %495 = vdwg.mxu0
      %v504 = vunpack.c.l.b16 %v340
      %v505 = vunpack.c.l.b16 %v342
      %v506 = vunpack.c.l.b16 %v344
      %v507 = vunpack.c.l.b16 %v346
      %v508 = vunpack.c.l.b16 %v348
      %v509 = vunpack.c.l.b16 %v350
      %v510 = vunpack.c.l.b16 %v352
      %v511 = vunpack.c.l.b16 %v354
      %v512 = vpack.c.b16 %v505, %v504
      %v513 = vpack.c.b16 %v507, %v506
      %v514 = vpack.c.b16 %v509, %v508
      %v515 = vpack.c.b16 %v511, %v510
      %v517 = vsel %vm414, %v512, 0
      %v520 = vsel %vm414, %v513, 0
      %v523 = vsel %vm414, %v514, 0
      %v526 = vsel %vm414, %v515, 0
      %v529 = vsel %vm427, %v391, 0
      %531 = vmatprep.subr.bf16.mxu0 0
      %532 = vmatpush1.bf16.msra.mxu0 0
      %533 = vmatprep.subr.bf16.mxu0 0
      %534 = vmatpush1.bf16.msra.mxu0 0
      %535 = vmatprep.subr.bf16.mxu0 0
      %536 = vmatpush1.bf16.msra.mxu0 0
      %537 = vmatprep.subr.bf16.mxu0 0
      %538 = vmatpush1.bf16.msra.mxu0 0
      %539 = vmatprep.subr.bf16.mxu0 0
      %540 = vmatpush1.bf16.msra.mxu0 0
      %541 = vmatprep.subr.bf16.mxu0 0
      %542 = vmatpush1.bf16.msra.mxu0 0
      %543 = vmatprep.subr.bf16.mxu0 0
      %544 = vmatpush1.bf16.msra.mxu0 0
      %545 = vmatprep.subr.bf16.mxu0 0
      %546 = vmatpush1.bf16.msra.mxu0 %v529
      %547 = vmatprep.subr.bf16.mxu0 0
      %548 = vmatpush2.bf16.msra.mxu0 0
      %549 = vmatprep.subr.bf16.mxu0 0
      %550 = vmatpush2.bf16.msra.mxu0 0
      %551 = vmatprep.subr.bf16.mxu0 0
      %552 = vmatpush2.bf16.msra.mxu0 0
      %553 = vmatprep.subr.bf16.mxu0 0
      %554 = vmatpush2.bf16.msra.mxu0 0
      %555 = vmatprep.subr.bf16.mxu0 0
      %556 = vmatpush2.bf16.msra.mxu0 0
      %557 = vmatprep.subr.bf16.mxu0 0
      %558 = vmatpush2.bf16.msra.mxu0 0
      %559 = vmatprep.subr.bf16.mxu0 0
      %560 = vmatpush2.bf16.msra.mxu0 0
      %561 = vmatprep.subr.bf16.mxu0 0
      %562 = vmatpush2.bf16.msra.mxu0 0
      %563 = vmatprep.mubr.bf16.mxu0 0
      %564 = vmatmul.mubr.bf16.gmra.mxu0 %v517
      %v565 = vpop.f32.mrf.mxu0
      %v566 = vadd.f32 %v466, %v565
      %v567 = vpop.f32.mrf.mxu0
      %v568 = vpop.f32.mrf.mxu0
      %v569 = vadd.f32 %v469, %v568
      %v570 = vpop.f32.mrf.mxu0
      %571 = vmatprep.mubr.bf16.mxu0 0
      %572 = vmatmul.mubr.bf16.gmra.mxu0 %v520
      %v573 = vpop.f32.mrf.mxu0
      %v574 = vadd.f32 %v474, %v573
      %v575 = vpop.f32.mrf.mxu0
      %v576 = vpop.f32.mrf.mxu0
      %v577 = vadd.f32 %v477, %v576
      %v578 = vpop.f32.mrf.mxu0
      %579 = vmatprep.mubr.bf16.mxu0 0
      %580 = vmatmul.mubr.bf16.gmra.mxu0 %v523
      %v581 = vpop.f32.mrf.mxu0
      %v582 = vadd.f32 %v482, %v581
      %v583 = vpop.f32.mrf.mxu0
      %v584 = vpop.f32.mrf.mxu0
      %v585 = vadd.f32 %v485, %v584
      %v586 = vpop.f32.mrf.mxu0
      %587 = vmatprep.mubr.bf16.mxu0 0
      %588 = vmatmul.mubr.bf16.gmra.mxu0 %v526
      %v589 = vpop.f32.mrf.mxu0
      %v590 = vadd.f32 %v490, %v589
      %v591 = vpop.f32.mrf.mxu0
      %v592 = vpop.f32.mrf.mxu0
      %v593 = vadd.f32 %v493, %v592
      %v594 = vpop.f32.mrf.mxu0
      %595 = vdwg.mxu0
      %vm596 = vsmask.f32 3328
      %vm597 = vsmask.f32 7440
      %vm598 = vmor %vm596, %vm597
      %v600 = vshrl.u32 %v340, 16
      %v602 = vrot.slane %v600, 4
      %v603 = vshll.u32 %v340, 16
      %v605 = vrot.slane %v603, 5
      %v606 = vor.u32 %v602, %v605
      %v607 = vrot.slane %v606, 4
      %v609 = vshll.u32 %v341, 16
      %v611 = vrot.slane %v609, 5
      %v612 = vsel %vm598, %v607, %v611
      %v614 = vshrl.u32 %v342, 16
      %v616 = vrot.slane %v614, 4
      %v617 = vshll.u32 %v342, 16
      %v619 = vrot.slane %v617, 5
      %v620 = vor.u32 %v616, %v619
      %v621 = vrot.slane %v620, 4
      %v623 = vshll.u32 %v343, 16
      %v625 = vrot.slane %v623, 5
      %v626 = vsel %vm598, %v621, %v625
      %v628 = vshrl.u32 %v344, 16
      %v630 = vrot.slane %v628, 4
      %v631 = vshll.u32 %v344, 16
      %v633 = vrot.slane %v631, 5
      %v634 = vor.u32 %v630, %v633
      %v635 = vrot.slane %v634, 4
      %v637 = vshll.u32 %v345, 16
      %v639 = vrot.slane %v637, 5
      %v640 = vsel %vm598, %v635, %v639
      %v642 = vshrl.u32 %v346, 16
      %v644 = vrot.slane %v642, 4
      %v645 = vshll.u32 %v346, 16
      %v647 = vrot.slane %v645, 5
      %v648 = vor.u32 %v644, %v647
      %v649 = vrot.slane %v648, 4
      %v651 = vshll.u32 %v347, 16
      %v653 = vrot.slane %v651, 5
      %v654 = vsel %vm598, %v649, %v653
      %v656 = vshrl.u32 %v348, 16
      %v658 = vrot.slane %v656, 4
      %v659 = vshll.u32 %v348, 16
      %v661 = vrot.slane %v659, 5
      %v662 = vor.u32 %v658, %v661
      %v663 = vrot.slane %v662, 4
      %v665 = vshll.u32 %v349, 16
      %v667 = vrot.slane %v665, 5
      %v668 = vsel %vm598, %v663, %v667
      %v670 = vshrl.u32 %v350, 16
      %v672 = vrot.slane %v670, 4
      %v673 = vshll.u32 %v350, 16
      %v675 = vrot.slane %v673, 5
      %v676 = vor.u32 %v672, %v675
      %v677 = vrot.slane %v676, 4
      %v679 = vshll.u32 %v351, 16
      %v681 = vrot.slane %v679, 5
      %v682 = vsel %vm598, %v677, %v681
      %v684 = vshrl.u32 %v352, 16
      %v686 = vrot.slane %v684, 4
      %v687 = vshll.u32 %v352, 16
      %v689 = vrot.slane %v687, 5
      %v690 = vor.u32 %v686, %v689
      %v691 = vrot.slane %v690, 4
      %v693 = vshll.u32 %v353, 16
      %v695 = vrot.slane %v693, 5
      %v696 = vsel %vm598, %v691, %v695
      %v698 = vshrl.u32 %v354, 16
      %v700 = vrot.slane %v698, 4
      %v701 = vshll.u32 %v354, 16
      %v703 = vrot.slane %v701, 5
      %v704 = vor.u32 %v700, %v703
      %v705 = vrot.slane %v704, 4
      %v707 = vshll.u32 %v355, 16
      %v709 = vrot.slane %v707, 5
      %v710 = vsel %vm598, %v705, %v709
      %s711 = scalar_lea.vmem %s4, 8
      %v712 = vld [vmem:[%s711] sm:$0xf]
      %v713 = vunpack.c.l.b16 %v612
      %v714 = vunpack.c.l.b16 %v626
      %v715 = vunpack.c.l.b16 %v640
      %v716 = vunpack.c.l.b16 %v654
      %v717 = vunpack.c.l.b16 %v668
      %v718 = vunpack.c.l.b16 %v682
      %v719 = vunpack.c.l.b16 %v696
      %v720 = vunpack.c.l.b16 %v710
      %v721 = vpack.c.b16 %v714, %v713
      %v722 = vpack.c.b16 %v716, %v715
      %v723 = vpack.c.b16 %v718, %v717
      %v724 = vpack.c.b16 %v720, %v719
      %v726 = vsel %vm414, %v721, 0
      %v729 = vsel %vm414, %v722, 0
      %v732 = vsel %vm414, %v723, 0
      %v735 = vsel %vm414, %v724, 0
      %v738 = vsel %vm427, %v712, 0
      %740 = vmatprep.subr.bf16.mxu0 0
      %741 = vmatpush1.bf16.msra.mxu0 0
      %742 = vmatprep.subr.bf16.mxu0 0
      %743 = vmatpush1.bf16.msra.mxu0 0
      %744 = vmatprep.subr.bf16.mxu0 0
      %745 = vmatpush1.bf16.msra.mxu0 0
      %746 = vmatprep.subr.bf16.mxu0 0
      %747 = vmatpush1.bf16.msra.mxu0 0
      %748 = vmatprep.subr.bf16.mxu0 0
      %749 = vmatpush1.bf16.msra.mxu0 0
      %750 = vmatprep.subr.bf16.mxu0 0
      %751 = vmatpush1.bf16.msra.mxu0 0
      %752 = vmatprep.subr.bf16.mxu0 0
      %753 = vmatpush1.bf16.msra.mxu0 0
      %754 = vmatprep.subr.bf16.mxu0 0
      %755 = vmatpush1.bf16.msra.mxu0 %v738
      %756 = vmatprep.subr.bf16.mxu0 0
      %757 = vmatpush2.bf16.msra.mxu0 0
      %758 = vmatprep.subr.bf16.mxu0 0
      %759 = vmatpush2.bf16.msra.mxu0 0
      %760 = vmatprep.subr.bf16.mxu0 0
      %761 = vmatpush2.bf16.msra.mxu0 0
      %762 = vmatprep.subr.bf16.mxu0 0
      %763 = vmatpush2.bf16.msra.mxu0 0
      %764 = vmatprep.subr.bf16.mxu0 0
      %765 = vmatpush2.bf16.msra.mxu0 0
      %766 = vmatprep.subr.bf16.mxu0 0
      %767 = vmatpush2.bf16.msra.mxu0 0
      %768 = vmatprep.subr.bf16.mxu0 0
      %769 = vmatpush2.bf16.msra.mxu0 0
      %770 = vmatprep.subr.bf16.mxu0 0
      %771 = vmatpush2.bf16.msra.mxu0 0
      %772 = vmatprep.mubr.bf16.mxu0 0
      %773 = vmatmul.mubr.bf16.gmra.mxu0 %v726
      %v774 = vpop.f32.mrf.mxu0
      %v775 = vadd.f32 0.0, %v774
      %v776 = vpop.f32.mrf.mxu0
      %v777 = vpop.f32.mrf.mxu0
      %v778 = vadd.f32 0.0, %v777
      %v779 = vpop.f32.mrf.mxu0
      %780 = vmatprep.mubr.bf16.mxu0 0
      %781 = vmatmul.mubr.bf16.gmra.mxu0 %v729
      %v782 = vpop.f32.mrf.mxu0
      %v783 = vadd.f32 0.0, %v782
      %v784 = vpop.f32.mrf.mxu0
      %v785 = vpop.f32.mrf.mxu0
      %v786 = vadd.f32 0.0, %v785
      %v787 = vpop.f32.mrf.mxu0
      %788 = vmatprep.mubr.bf16.mxu0 0
      %789 = vmatmul.mubr.bf16.gmra.mxu0 %v732
      %v790 = vpop.f32.mrf.mxu0
      %v791 = vadd.f32 0.0, %v790
      %v792 = vpop.f32.mrf.mxu0
      %v793 = vpop.f32.mrf.mxu0
      %v794 = vadd.f32 0.0, %v793
      %v795 = vpop.f32.mrf.mxu0
      %796 = vmatprep.mubr.bf16.mxu0 0
      %797 = vmatmul.mubr.bf16.gmra.mxu0 %v735
      %v798 = vpop.f32.mrf.mxu0
      %v799 = vadd.f32 0.0, %v798
      %v800 = vpop.f32.mrf.mxu0
      %v801 = vpop.f32.mrf.mxu0
      %v802 = vadd.f32 0.0, %v801
      %v803 = vpop.f32.mrf.mxu0
      %804 = vdwg.mxu0
      %v805 = vadd.f32 %v566, %v775
      %v806 = vadd.f32 %v569, %v778
      %v807 = vadd.f32 %v574, %v783
      %v808 = vadd.f32 %v577, %v786
      %v809 = vadd.f32 %v582, %v791
      %v810 = vadd.f32 %v585, %v794
      %v811 = vadd.f32 %v590, %v799
      %v812 = vadd.f32 %v593, %v802
      %s813 = scalar_lea.vmem %s4, 12
      %v814 = vld [vmem:[%s813] sm:$0xf]
      %v823 = vunpack.c.l.b16 %v367
      %v824 = vunpack.c.l.b16 %v369
      %v825 = vunpack.c.l.b16 %v371
      %v826 = vunpack.c.l.b16 %v373
      %v827 = vunpack.c.l.b16 %v375
      %v828 = vunpack.c.l.b16 %v377
      %v829 = vunpack.c.l.b16 %v379
      %v830 = vunpack.c.l.b16 %v381
      %v831 = vpack.c.b16 %v824, %v823
      %v832 = vpack.c.b16 %v826, %v825
      %v833 = vpack.c.b16 %v828, %v827
      %v834 = vpack.c.b16 %v830, %v829
      %v836 = vsel %vm414, %v831, 0
      %v839 = vsel %vm414, %v832, 0
      %v842 = vsel %vm414, %v833, 0
      %v845 = vsel %vm414, %v834, 0
      %v848 = vsel %vm427, %v814, 0
      %850 = vmatprep.subr.bf16.mxu0 0
      %851 = vmatpush1.bf16.msra.mxu0 0
      %852 = vmatprep.subr.bf16.mxu0 0
      %853 = vmatpush1.bf16.msra.mxu0 0
      %854 = vmatprep.subr.bf16.mxu0 0
      %855 = vmatpush1.bf16.msra.mxu0 0
      %856 = vmatprep.subr.bf16.mxu0 0
      %857 = vmatpush1.bf16.msra.mxu0 0
      %858 = vmatprep.subr.bf16.mxu0 0
      %859 = vmatpush1.bf16.msra.mxu0 0
      %860 = vmatprep.subr.bf16.mxu0 0
      %861 = vmatpush1.bf16.msra.mxu0 0
      %862 = vmatprep.subr.bf16.mxu0 0
      %863 = vmatpush1.bf16.msra.mxu0 0
      %864 = vmatprep.subr.bf16.mxu0 0
      %865 = vmatpush1.bf16.msra.mxu0 %v848
      %866 = vmatprep.subr.bf16.mxu0 0
      %867 = vmatpush2.bf16.msra.mxu0 0
      %868 = vmatprep.subr.bf16.mxu0 0
      %869 = vmatpush2.bf16.msra.mxu0 0
      %870 = vmatprep.subr.bf16.mxu0 0
      %871 = vmatpush2.bf16.msra.mxu0 0
      %872 = vmatprep.subr.bf16.mxu0 0
      %873 = vmatpush2.bf16.msra.mxu0 0
      %874 = vmatprep.subr.bf16.mxu0 0
      %875 = vmatpush2.bf16.msra.mxu0 0
      %876 = vmatprep.subr.bf16.mxu0 0
      %877 = vmatpush2.bf16.msra.mxu0 0
      %878 = vmatprep.subr.bf16.mxu0 0
      %879 = vmatpush2.bf16.msra.mxu0 0
      %880 = vmatprep.subr.bf16.mxu0 0
      %881 = vmatpush2.bf16.msra.mxu0 0
      %882 = vmatprep.mubr.bf16.mxu0 0
      %883 = vmatmul.mubr.bf16.gmra.mxu0 %v836
      %v884 = vpop.f32.mrf.mxu0
      %v885 = vadd.f32 0.0, %v884
      %v886 = vpop.f32.mrf.mxu0
      %v887 = vpop.f32.mrf.mxu0
      %v888 = vadd.f32 0.0, %v887
      %v889 = vpop.f32.mrf.mxu0
      %890 = vmatprep.mubr.bf16.mxu0 0
      %891 = vmatmul.mubr.bf16.gmra.mxu0 %v839
      %v892 = vpop.f32.mrf.mxu0
      %v893 = vadd.f32 0.0, %v892
      %v894 = vpop.f32.mrf.mxu0
      %v895 = vpop.f32.mrf.mxu0
      %v896 = vadd.f32 0.0, %v895
      %v897 = vpop.f32.mrf.mxu0
      %898 = vmatprep.mubr.bf16.mxu0 0
      %899 = vmatmul.mubr.bf16.gmra.mxu0 %v842
      %v900 = vpop.f32.mrf.mxu0
      %v901 = vadd.f32 0.0, %v900
      %v902 = vpop.f32.mrf.mxu0
      %v903 = vpop.f32.mrf.mxu0
      %v904 = vadd.f32 0.0, %v903
      %v905 = vpop.f32.mrf.mxu0
      %906 = vmatprep.mubr.bf16.mxu0 0
      %907 = vmatmul.mubr.bf16.gmra.mxu0 %v845
      %v908 = vpop.f32.mrf.mxu0
      %v909 = vadd.f32 0.0, %v908
      %v910 = vpop.f32.mrf.mxu0
      %v911 = vpop.f32.mrf.mxu0
      %v912 = vadd.f32 0.0, %v911
      %v913 = vpop.f32.mrf.mxu0
      %914 = vdwg.mxu0
      %v915 = vadd.f32 %v805, %v885
      %v916 = vadd.f32 %v806, %v888
      %v917 = vadd.f32 %v807, %v893
      %v918 = vadd.f32 %v808, %v896
      %v919 = vadd.f32 %v809, %v901
      %v920 = vadd.f32 %v810, %v904
      %v921 = vadd.f32 %v811, %v909
      %v922 = vadd.f32 %v812, %v912
      %s923 = scalar_lea.vmem %s4, 16
      %v924 = vld [vmem:[%s923] sm:$0xf]
      %v933 = vunpack.c.l.b16 %v383
      %v934 = vunpack.c.l.b16 %v384
      %v935 = vunpack.c.l.b16 %v385
      %v936 = vunpack.c.l.b16 %v386
      %v937 = vunpack.c.l.b16 %v387
      %v938 = vunpack.c.l.b16 %v388
      %v939 = vunpack.c.l.b16 %v389
      %v940 = vunpack.c.l.b16 %v390
      %v941 = vpack.c.b16 %v934, %v933
      %v942 = vpack.c.b16 %v936, %v935
      %v943 = vpack.c.b16 %v938, %v937
      %v944 = vpack.c.b16 %v940, %v939
      %v946 = vsel %vm414, %v941, 0
      %v949 = vsel %vm414, %v942, 0
      %v952 = vsel %vm414, %v943, 0
      %v955 = vsel %vm414, %v944, 0
      %v958 = vsel %vm427, %v924, 0
      %960 = vmatprep.subr.bf16.mxu0 0
      %961 = vmatpush1.bf16.msra.mxu0 0
      %962 = vmatprep.subr.bf16.mxu0 0
      %963 = vmatpush1.bf16.msra.mxu0 0
      %964 = vmatprep.subr.bf16.mxu0 0
      %965 = vmatpush1.bf16.msra.mxu0 0
      %966 = vmatprep.subr.bf16.mxu0 0
      %967 = vmatpush1.bf16.msra.mxu0 0
      %968 = vmatprep.subr.bf16.mxu0 0
      %969 = vmatpush1.bf16.msra.mxu0 0
      %970 = vmatprep.subr.bf16.mxu0 0
      %971 = vmatpush1.bf16.msra.mxu0 0
      %972 = vmatprep.subr.bf16.mxu0 0
      %973 = vmatpush1.bf16.msra.mxu0 0
      %974 = vmatprep.subr.bf16.mxu0 0
      %975 = vmatpush1.bf16.msra.mxu0 %v958
      %976 = vmatprep.subr.bf16.mxu0 0
      %977 = vmatpush2.bf16.msra.mxu0 0
      %978 = vmatprep.subr.bf16.mxu0 0
      %979 = vmatpush2.bf16.msra.mxu0 0
      %980 = vmatprep.subr.bf16.mxu0 0
      %981 = vmatpush2.bf16.msra.mxu0 0
      %982 = vmatprep.subr.bf16.mxu0 0
      %983 = vmatpush2.bf16.msra.mxu0 0
      %984 = vmatprep.subr.bf16.mxu0 0
      %985 = vmatpush2.bf16.msra.mxu0 0
      %986 = vmatprep.subr.bf16.mxu0 0
      %987 = vmatpush2.bf16.msra.mxu0 0
      %988 = vmatprep.subr.bf16.mxu0 0
      %989 = vmatpush2.bf16.msra.mxu0 0
      %990 = vmatprep.subr.bf16.mxu0 0
      %991 = vmatpush2.bf16.msra.mxu0 0
      %992 = vmatprep.mubr.bf16.mxu0 0
      %993 = vmatmul.mubr.bf16.gmra.mxu0 %v946
      %v994 = vpop.f32.mrf.mxu0
      %v995 = vadd.f32 0.0, %v994
      %v996 = vpop.f32.mrf.mxu0
      %v997 = vpop.f32.mrf.mxu0
      %v998 = vadd.f32 0.0, %v997
      %v999 = vpop.f32.mrf.mxu0
      %1000 = vmatprep.mubr.bf16.mxu0 0
      %1001 = vmatmul.mubr.bf16.gmra.mxu0 %v949
      %v1002 = vpop.f32.mrf.mxu0
      %v1003 = vadd.f32 0.0, %v1002
      %v1004 = vpop.f32.mrf.mxu0
      %v1005 = vpop.f32.mrf.mxu0
      %v1006 = vadd.f32 0.0, %v1005
      %v1007 = vpop.f32.mrf.mxu0
      %1008 = vmatprep.mubr.bf16.mxu0 0
      %1009 = vmatmul.mubr.bf16.gmra.mxu0 %v952
      %v1010 = vpop.f32.mrf.mxu0
      %v1011 = vadd.f32 0.0, %v1010
      %v1012 = vpop.f32.mrf.mxu0
      %v1013 = vpop.f32.mrf.mxu0
      %v1014 = vadd.f32 0.0, %v1013
      %v1015 = vpop.f32.mrf.mxu0
      %1016 = vmatprep.mubr.bf16.mxu0 0
      %1017 = vmatmul.mubr.bf16.gmra.mxu0 %v955
      %v1018 = vpop.f32.mrf.mxu0
      %v1019 = vadd.f32 0.0, %v1018
      %v1020 = vpop.f32.mrf.mxu0
      %v1021 = vpop.f32.mrf.mxu0
      %v1022 = vadd.f32 0.0, %v1021
      %v1023 = vpop.f32.mrf.mxu0
      %1024 = vdwg.mxu0
      %v1025 = vadd.f32 %v915, %v995
      %v1026 = vadd.f32 %v916, %v998
      %v1027 = vadd.f32 %v917, %v1003
      %v1028 = vadd.f32 %v918, %v1006
      %v1029 = vadd.f32 %v919, %v1011
      %v1030 = vadd.f32 %v920, %v1014
      %v1031 = vadd.f32 %v921, %v1019
      %v1032 = vadd.f32 %v922, %v1022
      %v1034 = vshrl.u32 %v367, 16
      %v1036 = vrot.slane %v1034, 4
      %v1037 = vshll.u32 %v367, 16
      %v1039 = vrot.slane %v1037, 5
      %v1040 = vor.u32 %v1036, %v1039
      %v1041 = vrot.slane %v1040, 4
      %v1043 = vshll.u32 %v368, 16
      %v1045 = vrot.slane %v1043, 5
      %v1046 = vsel %vm598, %v1041, %v1045
      %v1048 = vshrl.u32 %v369, 16
      %v1050 = vrot.slane %v1048, 4
      %v1051 = vshll.u32 %v369, 16
      %v1053 = vrot.slane %v1051, 5
      %v1054 = vor.u32 %v1050, %v1053
      %v1055 = vrot.slane %v1054, 4
      %v1057 = vshll.u32 %v370, 16
      %v1059 = vrot.slane %v1057, 5
      %v1060 = vsel %vm598, %v1055, %v1059
      %v1062 = vshrl.u32 %v371, 16
      %v1064 = vrot.slane %v1062, 4
      %v1065 = vshll.u32 %v371, 16
      %v1067 = vrot.slane %v1065, 5
      %v1068 = vor.u32 %v1064, %v1067
      %v1069 = vrot.slane %v1068, 4
      %v1071 = vshll.u32 %v372, 16
      %v1073 = vrot.slane %v1071, 5
      %v1074 = vsel %vm598, %v1069, %v1073
      %v1076 = vshrl.u32 %v373, 16
      %v1078 = vrot.slane %v1076, 4
      %v1079 = vshll.u32 %v373, 16
      %v1081 = vrot.slane %v1079, 5
      %v1082 = vor.u32 %v1078, %v1081
      %v1083 = vrot.slane %v1082, 4
      %v1085 = vshll.u32 %v374, 16
      %v1087 = vrot.slane %v1085, 5
      %v1088 = vsel %vm598, %v1083, %v1087
      %v1090 = vshrl.u32 %v375, 16
      %v1092 = vrot.slane %v1090, 4
      %v1093 = vshll.u32 %v375, 16
      %v1095 = vrot.slane %v1093, 5
      %v1096 = vor.u32 %v1092, %v1095
      %v1097 = vrot.slane %v1096, 4
      %v1099 = vshll.u32 %v376, 16
      %v1101 = vrot.slane %v1099, 5
      %v1102 = vsel %vm598, %v1097, %v1101
      %v1104 = vshrl.u32 %v377, 16
      %v1106 = vrot.slane %v1104, 4
      %v1107 = vshll.u32 %v377, 16
      %v1109 = vrot.slane %v1107, 5
      %v1110 = vor.u32 %v1106, %v1109
      %v1111 = vrot.slane %v1110, 4
      %v1113 = vshll.u32 %v378, 16
      %v1115 = vrot.slane %v1113, 5
      %v1116 = vsel %vm598, %v1111, %v1115
      %v1118 = vshrl.u32 %v379, 16
      %v1120 = vrot.slane %v1118, 4
      %v1121 = vshll.u32 %v379, 16
      %v1123 = vrot.slane %v1121, 5
      %v1124 = vor.u32 %v1120, %v1123
      %v1125 = vrot.slane %v1124, 4
      %v1127 = vshll.u32 %v380, 16
      %v1129 = vrot.slane %v1127, 5
      %v1130 = vsel %vm598, %v1125, %v1129
      %v1132 = vshrl.u32 %v381, 16
      %v1134 = vrot.slane %v1132, 4
      %v1135 = vshll.u32 %v381, 16
      %v1137 = vrot.slane %v1135, 5
      %v1138 = vor.u32 %v1134, %v1137
      %v1139 = vrot.slane %v1138, 4
      %v1141 = vshll.u32 %v382, 16
      %v1143 = vrot.slane %v1141, 5
      %v1144 = vsel %vm598, %v1139, %v1143
      %s1145 = scalar_lea.vmem %s4, 20
      %v1146 = vld [vmem:[%s1145] sm:$0xf]
      %v1147 = vunpack.c.l.b16 %v1046
      %v1148 = vunpack.c.l.b16 %v1060
      %v1149 = vunpack.c.l.b16 %v1074
      %v1150 = vunpack.c.l.b16 %v1088
      %v1151 = vunpack.c.l.b16 %v1102
      %v1152 = vunpack.c.l.b16 %v1116
      %v1153 = vunpack.c.l.b16 %v1130
      %v1154 = vunpack.c.l.b16 %v1144
      %v1155 = vpack.c.b16 %v1148, %v1147
      %v1156 = vpack.c.b16 %v1150, %v1149
      %v1157 = vpack.c.b16 %v1152, %v1151
      %v1158 = vpack.c.b16 %v1154, %v1153
      %v1160 = vsel %vm414, %v1155, 0
      %v1163 = vsel %vm414, %v1156, 0
      %v1166 = vsel %vm414, %v1157, 0
      %v1169 = vsel %vm414, %v1158, 0
      %v1172 = vsel %vm427, %v1146, 0
      %1174 = vmatprep.subr.bf16.mxu0 0
      %1175 = vmatpush1.bf16.msra.mxu0 0
      %1176 = vmatprep.subr.bf16.mxu0 0
      %1177 = vmatpush1.bf16.msra.mxu0 0
      %1178 = vmatprep.subr.bf16.mxu0 0
      %1179 = vmatpush1.bf16.msra.mxu0 0
      %1180 = vmatprep.subr.bf16.mxu0 0
      %1181 = vmatpush1.bf16.msra.mxu0 0
      %1182 = vmatprep.subr.bf16.mxu0 0
      %1183 = vmatpush1.bf16.msra.mxu0 0
      %1184 = vmatprep.subr.bf16.mxu0 0
      %1185 = vmatpush1.bf16.msra.mxu0 0
      %1186 = vmatprep.subr.bf16.mxu0 0
      %1187 = vmatpush1.bf16.msra.mxu0 0
      %1188 = vmatprep.subr.bf16.mxu0 0
      %1189 = vmatpush1.bf16.msra.mxu0 %v1172
      %1190 = vmatprep.subr.bf16.mxu0 0
      %1191 = vmatpush2.bf16.msra.mxu0 0
      %1192 = vmatprep.subr.bf16.mxu0 0
      %1193 = vmatpush2.bf16.msra.mxu0 0
      %1194 = vmatprep.subr.bf16.mxu0 0
      %1195 = vmatpush2.bf16.msra.mxu0 0
      %1196 = vmatprep.subr.bf16.mxu0 0
      %1197 = vmatpush2.bf16.msra.mxu0 0
      %1198 = vmatprep.subr.bf16.mxu0 0
      %1199 = vmatpush2.bf16.msra.mxu0 0
      %1200 = vmatprep.subr.bf16.mxu0 0
      %1201 = vmatpush2.bf16.msra.mxu0 0
      %1202 = vmatprep.subr.bf16.mxu0 0
      %1203 = vmatpush2.bf16.msra.mxu0 0
      %1204 = vmatprep.subr.bf16.mxu0 0
      %1205 = vmatpush2.bf16.msra.mxu0 0
      %1206 = vmatprep.mubr.bf16.mxu0 0
      %1207 = vmatmul.mubr.bf16.gmra.mxu0 %v1160
      %v1208 = vpop.f32.mrf.mxu0
      %v1209 = vadd.f32 0.0, %v1208
      %v1210 = vpop.f32.mrf.mxu0
      %v1211 = vpop.f32.mrf.mxu0
      %v1212 = vadd.f32 0.0, %v1211
      %v1213 = vpop.f32.mrf.mxu0
      %1214 = vmatprep.mubr.bf16.mxu0 0
      %1215 = vmatmul.mubr.bf16.gmra.mxu0 %v1163
      %v1216 = vpop.f32.mrf.mxu0
      %v1217 = vadd.f32 0.0, %v1216
      %v1218 = vpop.f32.mrf.mxu0
      %v1219 = vpop.f32.mrf.mxu0
      %v1220 = vadd.f32 0.0, %v1219
      %v1221 = vpop.f32.mrf.mxu0
      %1222 = vmatprep.mubr.bf16.mxu0 0
      %1223 = vmatmul.mubr.bf16.gmra.mxu0 %v1166
      %v1224 = vpop.f32.mrf.mxu0
      %v1225 = vadd.f32 0.0, %v1224
      %v1226 = vpop.f32.mrf.mxu0
      %v1227 = vpop.f32.mrf.mxu0
      %v1228 = vadd.f32 0.0, %v1227
      %v1229 = vpop.f32.mrf.mxu0
      %1230 = vmatprep.mubr.bf16.mxu0 0
      %1231 = vmatmul.mubr.bf16.gmra.mxu0 %v1169
      %v1232 = vpop.f32.mrf.mxu0
      %v1233 = vadd.f32 0.0, %v1232
      %v1234 = vpop.f32.mrf.mxu0
      %v1235 = vpop.f32.mrf.mxu0
      %v1236 = vadd.f32 0.0, %v1235
      %v1237 = vpop.f32.mrf.mxu0
      %1238 = vdwg.mxu0
      %v1239 = vadd.f32 %v1025, %v1209
      %v1240 = vadd.f32 %v1026, %v1212
      %v1241 = vadd.f32 %v1027, %v1217
      %v1242 = vadd.f32 %v1028, %v1220
      %v1243 = vadd.f32 %v1029, %v1225
      %v1244 = vadd.f32 %v1030, %v1228
      %v1245 = vadd.f32 %v1031, %v1233
      %v1246 = vadd.f32 %v1032, %v1236
      %s1247 = scalar_lea.vmem %s4, 24
      %v1248 = vld [vmem:[%s1247] sm:$0xf]
      %v1250 = vunpack.c.l.b16 %v356
      %v1251 = vpack.c.b16 %v506, %v505
      %v1252 = vpack.c.b16 %v508, %v507
      %v1253 = vpack.c.b16 %v510, %v509
      %v1254 = vpack.c.b16 %v1250, %v511
      %v1256 = vsel %vm414, %v1251, 0
      %v1259 = vsel %vm414, %v1252, 0
      %v1262 = vsel %vm414, %v1253, 0
      %v1265 = vsel %vm414, %v1254, 0
      %v1268 = vsel %vm427, %v1248, 0
      %1270 = vmatprep.subr.bf16.mxu0 0
      %1271 = vmatpush1.bf16.msra.mxu0 0
      %1272 = vmatprep.subr.bf16.mxu0 0
      %1273 = vmatpush1.bf16.msra.mxu0 0
      %1274 = vmatprep.subr.bf16.mxu0 0
      %1275 = vmatpush1.bf16.msra.mxu0 0
      %1276 = vmatprep.subr.bf16.mxu0 0
      %1277 = vmatpush1.bf16.msra.mxu0 0
      %1278 = vmatprep.subr.bf16.mxu0 0
      %1279 = vmatpush1.bf16.msra.mxu0 0
      %1280 = vmatprep.subr.bf16.mxu0 0
      %1281 = vmatpush1.bf16.msra.mxu0 0
      %1282 = vmatprep.subr.bf16.mxu0 0
      %1283 = vmatpush1.bf16.msra.mxu0 0
      %1284 = vmatprep.subr.bf16.mxu0 0
      %1285 = vmatpush1.bf16.msra.mxu0 %v1268
      %1286 = vmatprep.subr.bf16.mxu0 0
      %1287 = vmatpush2.bf16.msra.mxu0 0
      %1288 = vmatprep.subr.bf16.mxu0 0
      %1289 = vmatpush2.bf16.msra.mxu0 0
      %1290 = vmatprep.subr.bf16.mxu0 0
      %1291 = vmatpush2.bf16.msra.mxu0 0
      %1292 = vmatprep.subr.bf16.mxu0 0
      %1293 = vmatpush2.bf16.msra.mxu0 0
      %1294 = vmatprep.subr.bf16.mxu0 0
      %1295 = vmatpush2.bf16.msra.mxu0 0
      %1296 = vmatprep.subr.bf16.mxu0 0
      %1297 = vmatpush2.bf16.msra.mxu0 0
      %1298 = vmatprep.subr.bf16.mxu0 0
      %1299 = vmatpush2.bf16.msra.mxu0 0
      %1300 = vmatprep.subr.bf16.mxu0 0
      %1301 = vmatpush2.bf16.msra.mxu0 0
      %1302 = vmatprep.mubr.bf16.mxu0 0
      %1303 = vmatmul.mubr.bf16.gmra.mxu0 %v1256
      %v1304 = vpop.f32.mrf.mxu0
      %v1305 = vadd.f32 0.0, %v1304
      %v1306 = vpop.f32.mrf.mxu0
      %v1307 = vpop.f32.mrf.mxu0
      %v1308 = vadd.f32 0.0, %v1307
      %v1309 = vpop.f32.mrf.mxu0
      %1310 = vmatprep.mubr.bf16.mxu0 0
      %1311 = vmatmul.mubr.bf16.gmra.mxu0 %v1259
      %v1312 = vpop.f32.mrf.mxu0
      %v1313 = vadd.f32 0.0, %v1312
      %v1314 = vpop.f32.mrf.mxu0
      %v1315 = vpop.f32.mrf.mxu0
      %v1316 = vadd.f32 0.0, %v1315
      %v1317 = vpop.f32.mrf.mxu0
      %1318 = vmatprep.mubr.bf16.mxu0 0
      %1319 = vmatmul.mubr.bf16.gmra.mxu0 %v1262
      %v1320 = vpop.f32.mrf.mxu0
      %v1321 = vadd.f32 0.0, %v1320
      %v1322 = vpop.f32.mrf.mxu0
      %v1323 = vpop.f32.mrf.mxu0
      %v1324 = vadd.f32 0.0, %v1323
      %v1325 = vpop.f32.mrf.mxu0
      %1326 = vmatprep.mubr.bf16.mxu0 0
      %1327 = vmatmul.mubr.bf16.gmra.mxu0 %v1265
      %v1328 = vpop.f32.mrf.mxu0
      %v1329 = vadd.f32 0.0, %v1328
      %v1330 = vpop.f32.mrf.mxu0
      %v1331 = vpop.f32.mrf.mxu0
      %v1332 = vadd.f32 0.0, %v1331
      %v1333 = vpop.f32.mrf.mxu0
      %1334 = vdwg.mxu0
      %v1335 = vadd.f32 %v1239, %v1305
      %v1336 = vadd.f32 %v1240, %v1308
      %v1337 = vadd.f32 %v1241, %v1313
      %v1338 = vadd.f32 %v1242, %v1316
      %v1339 = vadd.f32 %v1243, %v1321
      %v1340 = vadd.f32 %v1244, %v1324
      %v1341 = vadd.f32 %v1245, %v1329
      %v1342 = vadd.f32 %v1246, %v1332
      %s1343 = scalar_lea.vmem %s4, 28
      %v1344 = vld [vmem:[%s1343] sm:$0xf]
      %v1346 = vunpack.c.l.b16 %v366
      %v1347 = vpack.c.b16 %v404, %v403
      %v1348 = vpack.c.b16 %v406, %v405
      %v1349 = vpack.c.b16 %v408, %v407
      %v1350 = vpack.c.b16 %v1346, %v409
      %v1352 = vsel %vm414, %v1347, 0
      %v1355 = vsel %vm414, %v1348, 0
      %v1358 = vsel %vm414, %v1349, 0
      %v1361 = vsel %vm414, %v1350, 0
      %v1364 = vsel %vm427, %v1344, 0
      %1366 = vmatprep.subr.bf16.mxu0 0
      %1367 = vmatpush1.bf16.msra.mxu0 0
      %1368 = vmatprep.subr.bf16.mxu0 0
      %1369 = vmatpush1.bf16.msra.mxu0 0
      %1370 = vmatprep.subr.bf16.mxu0 0
      %1371 = vmatpush1.bf16.msra.mxu0 0
      %1372 = vmatprep.subr.bf16.mxu0 0
      %1373 = vmatpush1.bf16.msra.mxu0 0
      %1374 = vmatprep.subr.bf16.mxu0 0
      %1375 = vmatpush1.bf16.msra.mxu0 0
      %1376 = vmatprep.subr.bf16.mxu0 0
      %1377 = vmatpush1.bf16.msra.mxu0 0
      %1378 = vmatprep.subr.bf16.mxu0 0
      %1379 = vmatpush1.bf16.msra.mxu0 0
      %1380 = vmatprep.subr.bf16.mxu0 0
      %1381 = vmatpush1.bf16.msra.mxu0 %v1364
      %1382 = vmatprep.subr.bf16.mxu0 0
      %1383 = vmatpush2.bf16.msra.mxu0 0
      %1384 = vmatprep.subr.bf16.mxu0 0
      %1385 = vmatpush2.bf16.msra.mxu0 0
      %1386 = vmatprep.subr.bf16.mxu0 0
      %1387 = vmatpush2.bf16.msra.mxu0 0
      %1388 = vmatprep.subr.bf16.mxu0 0
      %1389 = vmatpush2.bf16.msra.mxu0 0
      %1390 = vmatprep.subr.bf16.mxu0 0
      %1391 = vmatpush2.bf16.msra.mxu0 0
      %1392 = vmatprep.subr.bf16.mxu0 0
      %1393 = vmatpush2.bf16.msra.mxu0 0
      %1394 = vmatprep.subr.bf16.mxu0 0
      %1395 = vmatpush2.bf16.msra.mxu0 0
      %1396 = vmatprep.subr.bf16.mxu0 0
      %1397 = vmatpush2.bf16.msra.mxu0 0
      %1398 = vmatprep.mubr.bf16.mxu0 0
      %1399 = vmatmul.mubr.bf16.gmra.mxu0 %v1352
      %v1400 = vpop.f32.mrf.mxu0
      %v1401 = vadd.f32 0.0, %v1400
      %v1402 = vpop.f32.mrf.mxu0
      %v1403 = vpop.f32.mrf.mxu0
      %v1404 = vadd.f32 0.0, %v1403
      %v1405 = vpop.f32.mrf.mxu0
      %1406 = vmatprep.mubr.bf16.mxu0 0
      %1407 = vmatmul.mubr.bf16.gmra.mxu0 %v1355
      %v1408 = vpop.f32.mrf.mxu0
      %v1409 = vadd.f32 0.0, %v1408
      %v1410 = vpop.f32.mrf.mxu0
      %v1411 = vpop.f32.mrf.mxu0
      %v1412 = vadd.f32 0.0, %v1411
      %v1413 = vpop.f32.mrf.mxu0
      %1414 = vmatprep.mubr.bf16.mxu0 0
      %1415 = vmatmul.mubr.bf16.gmra.mxu0 %v1358
      %v1416 = vpop.f32.mrf.mxu0
      %v1417 = vadd.f32 0.0, %v1416
      %v1418 = vpop.f32.mrf.mxu0
      %v1419 = vpop.f32.mrf.mxu0
      %v1420 = vadd.f32 0.0, %v1419
      %v1421 = vpop.f32.mrf.mxu0
      %1422 = vmatprep.mubr.bf16.mxu0 0
      %1423 = vmatmul.mubr.bf16.gmra.mxu0 %v1361
      %v1424 = vpop.f32.mrf.mxu0
      %v1425 = vadd.f32 0.0, %v1424
      %v1426 = vpop.f32.mrf.mxu0
      %v1427 = vpop.f32.mrf.mxu0
      %v1428 = vadd.f32 0.0, %v1427
      %v1429 = vpop.f32.mrf.mxu0
      %1430 = vdwg.mxu0
      %v1431 = vadd.f32 %v1335, %v1401
      %v1432 = vadd.f32 %v1336, %v1404
      %v1433 = vadd.f32 %v1337, %v1409
      %v1434 = vadd.f32 %v1338, %v1412
      %v1435 = vadd.f32 %v1339, %v1417
      %v1436 = vadd.f32 %v1340, %v1420
      %v1437 = vadd.f32 %v1341, %v1425
      %v1438 = vadd.f32 %v1342, %v1428
      %v1440 = vshrl.u32 %v356, 16
      %v1442 = vrot.slane %v1440, 4
      %v1443 = vshll.u32 %v356, 16
      %v1445 = vrot.slane %v1443, 5
      %v1446 = vor.u32 %v1442, %v1445
      %v1447 = vrot.slane %v1446, 4
      %v1449 = vshll.u32 %v357, 16
      %v1451 = vrot.slane %v1449, 5
      %v1452 = vsel %vm598, %v1447, %v1451
      %s1453 = scalar_lea.vmem %s4, 32
      %v1454 = vld [vmem:[%s1453] sm:$0xf]
      %v1455 = vunpack.c.l.b16 %v1452
      %v1456 = vpack.c.b16 %v715, %v714
      %v1457 = vpack.c.b16 %v717, %v716
      %v1458 = vpack.c.b16 %v719, %v718
      %v1459 = vpack.c.b16 %v1455, %v720
      %v1461 = vsel %vm414, %v1456, 0
      %v1464 = vsel %vm414, %v1457, 0
      %v1467 = vsel %vm414, %v1458, 0
      %v1470 = vsel %vm414, %v1459, 0
      %v1473 = vsel %vm427, %v1454, 0
      %1475 = vmatprep.subr.bf16.mxu0 0
      %1476 = vmatpush1.bf16.msra.mxu0 0
      %1477 = vmatprep.subr.bf16.mxu0 0
      %1478 = vmatpush1.bf16.msra.mxu0 0
      %1479 = vmatprep.subr.bf16.mxu0 0
      %1480 = vmatpush1.bf16.msra.mxu0 0
      %1481 = vmatprep.subr.bf16.mxu0 0
      %1482 = vmatpush1.bf16.msra.mxu0 0
      %1483 = vmatprep.subr.bf16.mxu0 0
      %1484 = vmatpush1.bf16.msra.mxu0 0
      %1485 = vmatprep.subr.bf16.mxu0 0
      %1486 = vmatpush1.bf16.msra.mxu0 0
      %1487 = vmatprep.subr.bf16.mxu0 0
      %1488 = vmatpush1.bf16.msra.mxu0 0
      %1489 = vmatprep.subr.bf16.mxu0 0
      %1490 = vmatpush1.bf16.msra.mxu0 %v1473
      %1491 = vmatprep.subr.bf16.mxu0 0
      %1492 = vmatpush2.bf16.msra.mxu0 0
      %1493 = vmatprep.subr.bf16.mxu0 0
      %1494 = vmatpush2.bf16.msra.mxu0 0
      %1495 = vmatprep.subr.bf16.mxu0 0
      %1496 = vmatpush2.bf16.msra.mxu0 0
      %1497 = vmatprep.subr.bf16.mxu0 0
      %1498 = vmatpush2.bf16.msra.mxu0 0
      %1499 = vmatprep.subr.bf16.mxu0 0
      %1500 = vmatpush2.bf16.msra.mxu0 0
      %1501 = vmatprep.subr.bf16.mxu0 0
      %1502 = vmatpush2.bf16.msra.mxu0 0
      %1503 = vmatprep.subr.bf16.mxu0 0
      %1504 = vmatpush2.bf16.msra.mxu0 0
      %1505 = vmatprep.subr.bf16.mxu0 0
      %1506 = vmatpush2.bf16.msra.mxu0 0
      %1507 = vmatprep.mubr.bf16.mxu0 0
      %1508 = vmatmul.mubr.bf16.gmra.mxu0 %v1461
      %v1509 = vpop.f32.mrf.mxu0
      %v1510 = vadd.f32 0.0, %v1509
      %v1511 = vpop.f32.mrf.mxu0
      %v1512 = vpop.f32.mrf.mxu0
      %v1513 = vadd.f32 0.0, %v1512
      %v1514 = vpop.f32.mrf.mxu0
      %1515 = vmatprep.mubr.bf16.mxu0 0
      %1516 = vmatmul.mubr.bf16.gmra.mxu0 %v1464
      %v1517 = vpop.f32.mrf.mxu0
      %v1518 = vadd.f32 0.0, %v1517
      %v1519 = vpop.f32.mrf.mxu0
      %v1520 = vpop.f32.mrf.mxu0
      %v1521 = vadd.f32 0.0, %v1520
      %v1522 = vpop.f32.mrf.mxu0
      %1523 = vmatprep.mubr.bf16.mxu0 0
      %1524 = vmatmul.mubr.bf16.gmra.mxu0 %v1467
      %v1525 = vpop.f32.mrf.mxu0
      %v1526 = vadd.f32 0.0, %v1525
      %v1527 = vpop.f32.mrf.mxu0
      %v1528 = vpop.f32.mrf.mxu0
      %v1529 = vadd.f32 0.0, %v1528
      %v1530 = vpop.f32.mrf.mxu0
      %1531 = vmatprep.mubr.bf16.mxu0 0
      %1532 = vmatmul.mubr.bf16.gmra.mxu0 %v1470
      %v1533 = vpop.f32.mrf.mxu0
      %v1534 = vadd.f32 0.0, %v1533
      %v1535 = vpop.f32.mrf.mxu0
      %v1536 = vpop.f32.mrf.mxu0
      %v1537 = vadd.f32 0.0, %v1536
      %v1538 = vpop.f32.mrf.mxu0
      %1539 = vdwg.mxu0
      %v1540 = vadd.f32 %v1431, %v1510
      %v1541 = vadd.f32 %v1432, %v1513
      %v1542 = vadd.f32 %v1433, %v1518
      %v1543 = vadd.f32 %v1434, %v1521
      %v1544 = vadd.f32 %v1435, %v1526
      %v1545 = vadd.f32 %v1436, %v1529
      %v1546 = vadd.f32 %v1437, %v1534
      %v1547 = vadd.f32 %v1438, %v1537
      %v1548 = vld [vmem:[%s5] sm:$0x1]
      %v1550 = vlaneseq
      %v1551 = vshrl.u32 %v1550, 7
      %v1552 = vsub.s32 0, %v1551
      %v1553 = vrot.slane %v1548, %v1552
      %v1555 = vmul.f32 %v1540, %v1553
      %v1556 = vmul.f32 %v1541, %v1553
      %v1557 = vmul.f32 %v1542, %v1553
      %v1558 = vmul.f32 %v1543, %v1553
      %v1559 = vmul.f32 %v1544, %v1553
      %v1560 = vmul.f32 %v1545, %v1553
      %v1561 = vmul.f32 %v1546, %v1553
      %v1562 = vmul.f32 %v1547, %v1553
      %v1563 = vld [vmem:[%s6] sm:$0x1]
      %v1565 = vlaneseq
      %v1566 = vshrl.u32 %v1565, 7
      %v1567 = vsub.s32 0, %v1566
      %v1568 = vrot.slane %v1563, %v1567
      %v1570 = vadd.f32 %v1555, %v1568
      %v1571 = vadd.f32 %v1556, %v1568
      %v1572 = vadd.f32 %v1557, %v1568
      %v1573 = vadd.f32 %v1558, %v1568
      %v1574 = vadd.f32 %v1559, %v1568
      %v1575 = vadd.f32 %v1560, %v1568
      %v1576 = vadd.f32 %v1561, %v1568
      %v1577 = vadd.f32 %v1562, %v1568
      %v1578 = vmax.f32 %v1570, 0.0
      %v1579 = vmax.f32 %v1571, 0.0
      %v1580 = vmax.f32 %v1572, 0.0
      %v1581 = vmax.f32 %v1573, 0.0
      %v1582 = vmax.f32 %v1574, 0.0
      %v1583 = vmax.f32 %v1575, 0.0
      %v1584 = vmax.f32 %v1576, 0.0
      %v1585 = vmax.f32 %v1577, 0.0
      %v1586 = vpack.c.bf16 %v1578, %v1578
      %v1587 = vpack.c.bf16 %v1579, %v1579
      %v1588 = vpack.c.bf16 %v1580, %v1580
      %v1589 = vpack.c.bf16 %v1581, %v1581
      %v1590 = vpack.c.bf16 %v1582, %v1582
      %v1591 = vpack.c.bf16 %v1583, %v1583
      %v1592 = vpack.c.bf16 %v1584, %v1584
      %v1593 = vpack.c.bf16 %v1585, %v1585
      %vm1594 = vcmask 60416
      %1595 = vst.msk [vmem:[%s338] sm:$0xf] %vm1594, %v1586
      %1596 = vst.msk [vmem:[%s338 + $0x4] sm:$0xf] %vm1594, %v1587
      %1597 = vst.msk [vmem:[%s338 + $0x8] sm:$0xf] %vm1594, %v1588
      %1598 = vst.msk [vmem:[%s338 + $0xc] sm:$0xf] %vm1594, %v1589
      %1599 = vst.msk [vmem:[%s338 + $0x10] sm:$0xf] %vm1594, %v1590
      %1600 = vst.msk [vmem:[%s338 + $0x14] sm:$0xf] %vm1594, %v1591
      %1601 = vst.msk [vmem:[%s338 + $0x18] sm:$0xf] %vm1594, %v1592
      %1602 = vst.msk [vmem:[%s338 + $0x1c] sm:$0xf] %vm1594, %v1593
      %p1603 = scmp.lt.s32.totalorder %s18, 1
      %s1604 = scalar_select %p1603, %s18, 1
      %s1605 = smul.addr %s1604, 8
      %s1606 = smul.addr %s1605, 4
      %s1607 = scalar_lea.vmem %s7, %s1606
      // Predicated region
      $region49: #{bottleneck_forward.4} parent=47 // pred_check
        %p1608 = pneg %p203
      $region50: #{bottleneck_forward.4} parent=47 // pred_check_branch
        %1610 = sbr.rel (%p1608) target = $region52
      $region51: #{bottleneck_forward.4} parent=47 // pred_region
        _
      $region52: #{bottleneck_forward.4} parent=47 // pred_fallthru
        _
    $region48: #{bottleneck_forward.4} parent=5 // pred_fallthru
      _
    %p1611 = scmp.le.s32.totalorder 2, %s13
    // Predicated region
    $region53: #{bottleneck_forward.4} parent=5 // pred_check
      %p1612 = pneg %p1611
    $region54: #{bottleneck_forward.4} parent=5 // pred_check_branch
      %1614 = sbr.rel (%p1612) target = $region56
    $region55: #{bottleneck_forward.4} parent=5 // pred_region
      %s1615 = ssub.s32 %s13, 2
      // Predicated region
      $region57: #{bottleneck_forward.4} parent=55 // pred_check
        %p1616 = pneg %p209
      $region58: #{bottleneck_forward.4} parent=55 // pred_check_branch
        %1618 = sbr.rel (%p1616) target = $region60
      $region59: #{bottleneck_forward.4} parent=55 // pred_region
        %p1619 = scmp.lt.s32.totalorder %s19, 1
        %s1620 = scalar_select %p1619, %s19, 1
        %s1621 = smul.addr %s1620, 8
        %s1622 = smul.addr %s1621, 4
        %s1623 = scalar_lea.vmem %s7, %s1622
      $region60: #{bottleneck_forward.4} parent=55 // pred_fallthru
        _
    $region56: #{bottleneck_forward.4} parent=5 // pred_fallthru
      _
  $region6: #{bottleneck_forward.4} parent=0 // loop_footer
    %s17 = sadd.s32 1, %s13
  $region7: #{bottleneck_forward.4} parent=0 // loop_footer_branch
    %12 = sbr.rel target = $region3
  $region8: #{bottleneck_forward.4} parent=0 // loop_exit
    _

</llo_original>
